<compile_context>
chip_gen: v7x
topology: tpu7x:2x2x1
jax: 0.10.0
libtpu: 0.0.40
codegen_flags: <defaults>
</compile_context>

<pallas_src>
import jax
import jax.numpy as jnp
from jax.experimental import pallas as pl
from jax.experimental.pallas import tpu as pltpu

EPS = 1e-5          # nn.BatchNorm2d default eps
NEG_SLOPE = 0.01    # nn.LeakyReLU default negative_slope


# --------------------------- Conv + BN + LeakyReLU + MaxPool kernel ---------------------------
def _conv_bn_lrelu_pool_kernel(p_ref, w_ref, shift_ref, out_ref):
    # p_ref     : [K, 2*B*N] bf16  im2col patches, even-output-col block | odd-output-col block
    # w_ref     : [Cout, K]  bf16  conv weight with eval-BN scale folded in
    # shift_ref : [Cout, 1]  f32   folded conv-bias + BN shift
    # out_ref   : [Cout, B*N] f32  pooled activations
    y = jnp.dot(w_ref[...], p_ref[...], preferred_element_type=jnp.float32)
    y = y + shift_ref[...]
    y = jnp.maximum(y, NEG_SLOPE * y)                       # LeakyReLU (one VPU max)
    half = y.shape[1] // 2                                  # static, lane-aligned (mult of 128)
    out_ref[...] = jnp.maximum(y[:, :half], y[:, half:])    # MaxPool2d(kernel=(1, 2))


def conv_bn_lrelu_pool(x, conv_w, conv_b, gamma, beta, mean, var):
    """Conv2d(k=(3,5), pad=(1,2)) + BatchNorm2d(eval) + LeakyReLU + MaxPool2d((1,2)).

    x: [B, Cin, H, W] float32  ->  [B, Cout, H, W//2] float32
    """
    B, Cin, H, W = x.shape
    assert W % 2 == 0, "MaxPool2d((1,2)) stage expects an even width"
    Cout, _, KH, KW = conv_w.shape
    W2 = W // 2
    N = H * W2
    K = Cin * KH * KW

    # --- JAX glue: im2col patch extraction (pure data movement) ---
    xp = jnp.pad(x, ((0, 0), (0, 0), (1, 1), (2, 2)))
    cols = [xp[:, :, kh:kh + H, kw:kw + W] for kh in range(KH) for kw in range(KW)]
    patches = jnp.stack(cols, axis=2).reshape(B, K, H, W)   # K ordered (ci, kh, kw)
    pe = patches[..., 0::2].reshape(B, K, N)                # even output columns
    po = patches[..., 1::2].reshape(B, K, N)                # odd output columns

    def to_lanes(p):                                        # [B, K, N] -> [K, B*N]
        return p.transpose(1, 0, 2).reshape(K, B * N)

    slab = jnp.concatenate([to_lanes(pe), to_lanes(po)], axis=1).astype(jnp.bfloat16)

    # Fold conv bias + eval-mode BatchNorm: scale into the weights, shift added in-kernel.
    scale = gamma / jnp.sqrt(var + EPS)
    shift = (beta + (conv_b - mean) * scale).reshape(Cout, 1).astype(jnp.float32)
    w_scaled = (conv_w.reshape(Cout, K) * scale[:, None]).astype(jnp.bfloat16)

    vmem = pl.BlockSpec(memory_space=pltpu.MemorySpace.VMEM)
    out = pl.pallas_call(
        _conv_bn_lrelu_pool_kernel,
        out_shape=jax.ShapeDtypeStruct((Cout, B * N), jnp.float32),
        in_specs=[vmem, vmem, vmem],
        out_specs=vmem,
    )(slab, w_scaled, shift)
    return out.reshape(Cout, B, H, W2).transpose(1, 0, 2, 3)   # back to NCHW


# ---------------------------------- biLSTM + FC kernel ----------------------------------
def _make_lstm_fc_kernel(T, B, H):
    def kernel(x_ref, wih_f_ref, whh_f_ref, bf_ref,
               wih_r_ref, br_ref, wfc_f_ref, wfc_r_ref, bfc_ref, out_ref):
        # x_ref: [T*B, D] bf16, time-major flattened (row = t*B + b).
        x_all = x_ref[...]

        # ---- Reverse direction (hoisted before the recurrence). The model reads
        # out[:, -1, H:2H], i.e. the reverse cell applied once to x[T-1] from zero state.
        g_r = (jnp.dot(x_all[(T - 1) * B:T * B, :], wih_r_ref[...],
                       preferred_element_type=jnp.float32) + br_ref[...])
        sig_r = jax.nn.sigmoid(g_r)
        th_r = jnp.tanh(g_r)
        c_r = sig_r[:, 0:H] * th_r[:, 2 * H:3 * H]          # f * c0 == 0
        h_r = sig_r[:, 3 * H:4 * H] * jnp.tanh(c_r)
        logits = (jnp.dot(h_r.astype(jnp.bfloat16), wfc_r_ref[...],
                          preferred_element_type=jnp.float32) + bfc_ref[...])

        # ---- Forward direction: input projection hoisted out of the recurrence.
        gx = (jnp.dot(x_all, wih_f_ref[...], preferred_element_type=jnp.float32)
              + bf_ref[...])                                # [T*B, 4H] f32
        whh = whh_f_ref[...]                                # [H, 4H] bf16
        h = jnp.zeros((B, H), jnp.float32)
        c = jnp.zeros((B, H), jnp.float32)
        for t in range(T):                                  # T is small & static: fully unrolled
            g = gx[t * B:(t + 1) * B, :] + jnp.dot(
                h.astype(jnp.bfloat16), whh, preferred_element_type=jnp.float32)
            sig = jax.nn.sigmoid(g)                         # full-width EUP pushes (2/step)
            th = jnp.tanh(g)
            c = sig[:, H:2 * H] * c + sig[:, 0:H] * th[:, 2 * H:3 * H]
            h = sig[:, 3 * H:4 * H] * jnp.tanh(c)

        # TODO(synk): Dropout(0.5) is identity in eval mode; train-mode dropout not implemented.
        out_ref[...] = logits + jnp.dot(h.astype(jnp.bfloat16), wfc_f_ref[...],
                                        preferred_element_type=jnp.float32)
    return kernel


def lstm_fc(seq_2d, T, B, p):
    H = p["w_hh_f"].shape[1]
    C = p["fc_b"].shape[0]
    args = (
        seq_2d.astype(jnp.bfloat16),                                    # [T*B, D]
        p["w_ih_f"].T.astype(jnp.bfloat16),                             # [D, 4H]
        p["w_hh_f"].T.astype(jnp.bfloat16),                             # [H, 4H]
        (p["b_ih_f"] + p["b_hh_f"]).reshape(1, 4 * H).astype(jnp.float32),
        p["w_ih_r"].T.astype(jnp.bfloat16),                             # [D, 4H]
        (p["b_ih_r"] + p["b_hh_r"]).reshape(1, 4 * H).astype(jnp.float32),
        p["fc_w"][:, :H].T.astype(jnp.bfloat16),                        # [H, C]
        p["fc_w"][:, H:].T.astype(jnp.bfloat16),                        # [H, C]
        p["fc_b"].reshape(1, C).astype(jnp.float32),
    )
    vmem = pl.BlockSpec(memory_space=pltpu.MemorySpace.VMEM)
    return pl.pallas_call(
        _make_lstm_fc_kernel(T, B, H),
        out_shape=jax.ShapeDtypeStruct((B, C), jnp.float32),
        in_specs=[vmem] * len(args),
        out_specs=vmem,
    )(*args)


# ---------------------------------- full forward ----------------------------------
def eeg_cnn_lstm_forward(x, p):
    """x: [B, 1, 8, W] -> logits [B, num_classes] (eval-mode semantics)."""
    h = conv_bn_lrelu_pool(x, p["conv1_w"], p["conv1_b"],
                           p["bn1_gamma"], p["bn1_beta"], p["bn1_mean"], p["bn1_var"])
    h = conv_bn_lrelu_pool(h, p["conv2_w"], p["conv2_b"],
                           p["bn2_gamma"], p["bn2_beta"], p["bn2_mean"], p["bn2_var"])
    B, C, Hh, T = h.shape                                  # [B, 32, 8, W//4]
    # permute(0,3,1,2).reshape(B, T, C*Hh), flattened time-major: row = t*B + b.
    seq = jnp.transpose(h, (3, 0, 1, 2)).reshape(T * B, C * Hh)
    # TODO(synk): fusing conv1->conv2->LSTM->FC into a single pallas_call (in-kernel im2col
    # in VMEM scratch) would remove the remaining HBM round-trips and launch overhead.
    return lstm_fc(seq, T, B, p)


# ---------------------------------- pure-JAX reference ----------------------------------
def reference_forward(x, p):
    def conv_block(x, w, b, gamma, beta, mean, var):
        y = jax.lax.conv_general_dilated(
            x, w, window_strides=(1, 1), padding=((1, 1), (2, 2)),
            dimension_numbers=("NCHW", "OIHW", "NCHW"))
        y = y + b.reshape(1, -1, 1, 1)
        y = (y - mean.reshape(1, -1, 1, 1)) / jnp.sqrt(var.reshape(1, -1, 1, 1) + EPS)
        y = y * gamma.reshape(1, -1, 1, 1) + beta.reshape(1, -1, 1, 1)
        y = jnp.where(y > 0, y, NEG_SLOPE * y)
        return jnp.maximum(y[..., 0::2], y[..., 1::2])

    h = conv_block(x, p["conv1_w"], p["conv1_b"], p["bn1_gamma"], p["bn1_beta"],
                   p["bn1_mean"], p["bn1_var"])
    h = conv_block(h, p["conv2_w"], p["conv2_b"], p["bn2_gamma"], p["bn2_beta"],
                   p["bn2_mean"], p["bn2_var"])
    B, C, Hh, T = h.shape
    seq = jnp.transpose(h, (0, 3, 1, 2)).reshape(B, T, C * Hh)
    H = p["w_hh_f"].shape[1]

    def run_dir(wih, whh, bih, bhh, reverse):
        hh = jnp.zeros((B, H), jnp.float32)
        cc = jnp.zeros((B, H), jnp.float32)
        outs = [None] * T
        order = range(T - 1, -1, -1) if reverse else range(T)
        for t in order:
            g = seq[:, t, :] @ wih.T + hh @ whh.T + bih + bhh
            i = jax.nn.sigmoid(g[:, :H])
            f = jax.nn.sigmoid(g[:, H:2 * H])
            gg = jnp.tanh(g[:, 2 * H:3 * H])
            o = jax.nn.sigmoid(g[:, 3 * H:])
            cc = f * cc + i * gg
            hh = o * jnp.tanh(cc)
            outs[t] = hh
        return jnp.stack(outs, axis=1)

    out_f = run_dir(p["w_ih_f"], p["w_hh_f"], p["b_ih_f"], p["b_hh_f"], False)
    out_r = run_dir(p["w_ih_r"], p["w_hh_r"], p["b_ih_r"], p["b_hh_r"], True)
    feat = jnp.concatenate([out_f, out_r], axis=-1)[:, -1, :]
    return feat @ p["fc_w"].T + p["fc_b"]


# ---------------------------------- deterministic params ----------------------------------
def init_params(key, num_classes=5, hidden=32):
    ks = jax.random.split(key, 24)
    n = lambda k, s, sc: sc * jax.random.normal(k, s, dtype=jnp.float32)
    H4 = 4 * hidden
    return {
        "conv1_w": n(ks[0], (16, 1, 3, 5), 0.2),
        "conv1_b": n(ks[1], (16,), 0.1),
        "bn1_gamma": 1.0 + n(ks[2], (16,), 0.1),
        "bn1_beta": n(ks[3], (16,), 0.1),
        "bn1_mean": n(ks[4], (16,), 0.1),
        "bn1_var": jax.random.uniform(ks[5], (16,), jnp.float32, 0.5, 1.5),
        "conv2_w": n(ks[6], (32, 16, 3, 5), 0.1),
        "conv2_b": n(ks[7], (32,), 0.1),
        "bn2_gamma": 1.0 + n(ks[8], (32,), 0.1),
        "bn2_beta": n(ks[9], (32,), 0.1),
        "bn2_mean": n(ks[10], (32,), 0.1),
        "bn2_var": jax.random.uniform(ks[11], (32,), jnp.float32, 0.5, 1.5),
        "w_ih_f": n(ks[12], (H4, 32 * 8), 0.1),
        "w_hh_f": n(ks[13], (H4, hidden), 0.1),
        "b_ih_f": n(ks[14], (H4,), 0.05),
        "b_hh_f": n(ks[15], (H4,), 0.05),
        "w_ih_r": n(ks[16], (H4, 32 * 8), 0.1),
        "w_hh_r": n(ks[17], (H4, hidden), 0.1),
        "b_ih_r": n(ks[18], (H4,), 0.05),
        "b_hh_r": n(ks[19], (H4,), 0.05),
        "fc_w": n(ks[20], (num_classes, 2 * hidden), 0.1),
        "fc_b": n(ks[21], (num_classes,), 0.05),
    }


if __name__ == "__main__":
    key = jax.random.PRNGKey(0)
    kx, kp = jax.random.split(key)
    # Small shapes consistent with the module: [B, 1, 8, W] with W a multiple of 4.
    B, W = 2, 64
    num_classes, hidden = 5, 32
    x = jax.random.normal(kx, (B, 1, 8, W), dtype=jnp.float32)
    params = init_params(kp, num_classes=num_classes, hidden=hidden)

    fwd = jax.jit(eeg_cnn_lstm_forward)
    out = jax.block_until_ready(fwd(x, params))

    assert out.shape == (B, num_classes), out.shape
    assert bool(jnp.all(jnp.isfinite(out)))

    # bf16 matmul operands (f32 accumulate) vs f32 reference -> slightly wider tolerance.
    ref = reference_forward(x, params)
    assert bool(jnp.allclose(out, ref, atol=3e-2, rtol=3e-2)), (out, ref)

    print("KERNEL_OK")
</pallas_src>

<mosaic_0001>
module attributes {stable_mosaic.version = 11 : i64} {
  func.func @_conv_bn_lrelu_pool_kernel(%arg0: memref<15x1024xbf16, #tpu.memory_space<vmem>>, %arg1: memref<16x15xbf16, #tpu.memory_space<vmem>>, %arg2: memref<16x1xf32, #tpu.memory_space<vmem>>, %arg3: memref<16x512xf32, #tpu.memory_space<vmem>>) attributes {dimension_semantics = [], scalar_prefetch = 0 : i64, scratch_operands = 0 : i64, tpu.core_type = #tpu.core_type<tc>} {
    %c0 = arith.constant 0 : index
    %c0_0 = arith.constant 0 : index
    %0 = vector.load %arg1[%c0, %c0_0] : memref<16x15xbf16, #tpu.memory_space<vmem>>, vector<16x15xbf16>
    %c0_1 = arith.constant 0 : index
    %c0_2 = arith.constant 0 : index
    %1 = vector.load %arg0[%c0_1, %c0_2] : memref<15x1024xbf16, #tpu.memory_space<vmem>>, vector<15x1024xbf16>
    %cst = arith.constant dense<0.000000e+00> : vector<16x1024xf32>
    %2 = tpu.matmul %0, %1, %cst {dimension_numbers = #tpu.dot_dimension_numbers<[1], [0], [0], [1], [0, 0, 1, 1], [], []>} : vector<16x15xbf16>, vector<15x1024xbf16>, vector<16x1024xf32> -> vector<16x1024xf32>
    %c0_3 = arith.constant 0 : index
    %c0_4 = arith.constant 0 : index
    %3 = vector.load %arg2[%c0_3, %c0_4] : memref<16x1xf32, #tpu.memory_space<vmem>>, vector<16x1xf32>
    %4 = vector.broadcast %3 : vector<16x1xf32> to vector<16x1024xf32>
    %5 = arith.addf %2, %4 : vector<16x1024xf32>
    %cst_5 = arith.constant 0.00999999977 : f32
    %6 = vector.broadcast %cst_5 : f32 to vector<16x1024xf32>
    %7 = arith.mulf %6, %5 : vector<16x1024xf32>
    %8 = arith.maximumf %5, %7 : vector<16x1024xf32>
    %9 = vector.extract_strided_slice %8 {offsets = [0, 0], sizes = [16, 512], strides = [1, 1]} : vector<16x1024xf32> to vector<16x512xf32>
    %10 = vector.extract_strided_slice %8 {offsets = [0, 512], sizes = [16, 512], strides = [1, 1]} : vector<16x1024xf32> to vector<16x512xf32>
    %11 = arith.maximumf %9, %10 : vector<16x512xf32>
    %c0_6 = arith.constant 0 : index
    %c0_7 = arith.constant 0 : index
    %12 = vector.load %arg3[%c0_6, %c0_7] : memref<16x512xf32, #tpu.memory_space<vmem>>, vector<16x512xf32>
    tpu.vector_store %arg3[%c0_6, %c0_7], %11 {strides = array<i32>} : memref<16x512xf32, #tpu.memory_space<vmem>>, vector<16x512xf32>,
    return
  }
}

module attributes {stable_mosaic.version = 11 : i64} {
  func.func @_conv_bn_lrelu_pool_kernel(%arg0: memref<240x512xbf16, #tpu.memory_space<vmem>>, %arg1: memref<32x240xbf16, #tpu.memory_space<vmem>>, %arg2: memref<32x1xf32, #tpu.memory_space<vmem>>, %arg3: memref<32x256xf32, #tpu.memory_space<vmem>>) attributes {dimension_semantics = [], scalar_prefetch = 0 : i64, scratch_operands = 0 : i64, tpu.core_type = #tpu.core_type<tc>} {
    %c0 = arith.constant 0 : index
    %c0_0 = arith.constant 0 : index
    %0 = vector.load %arg1[%c0, %c0_0] : memref<32x240xbf16, #tpu.memory_space<vmem>>, vector<32x240xbf16>
    %c0_1 = arith.constant 0 : index
    %c0_2 = arith.constant 0 : index
    %1 = vector.load %arg0[%c0_1, %c0_2] : memref<240x512xbf16, #tpu.memory_space<vmem>>, vector<240x512xbf16>
    %cst = arith.constant dense<0.000000e+00> : vector<32x512xf32>
    %2 = tpu.matmul %0, %1, %cst {dimension_numbers = #tpu.dot_dimension_numbers<[1], [0], [0], [1], [0, 0, 1, 1], [], []>} : vector<32x240xbf16>, vector<240x512xbf16>, vector<32x512xf32> -> vector<32x512xf32>
    %c0_3 = arith.constant 0 : index
    %c0_4 = arith.constant 0 : index
    %3 = vector.load %arg2[%c0_3, %c0_4] : memref<32x1xf32, #tpu.memory_space<vmem>>, vector<32x1xf32>
    %4 = vector.broadcast %3 : vector<32x1xf32> to vector<32x512xf32>
    %5 = arith.addf %2, %4 : vector<32x512xf32>
    %cst_5 = arith.constant 0.00999999977 : f32
    %6 = vector.broadcast %cst_5 : f32 to vector<32x512xf32>
    %7 = arith.mulf %6, %5 : vector<32x512xf32>
    %8 = arith.maximumf %5, %7 : vector<32x512xf32>
    %9 = vector.extract_strided_slice %8 {offsets = [0, 0], sizes = [32, 256], strides = [1, 1]} : vector<32x512xf32> to vector<32x256xf32>
    %10 = vector.extract_strided_slice %8 {offsets = [0, 256], sizes = [32, 256], strides = [1, 1]} : vector<32x512xf32> to vector<32x256xf32>
    %11 = arith.maximumf %9, %10 : vector<32x256xf32>
    %c0_6 = arith.constant 0 : index
    %c0_7 = arith.constant 0 : index
    %12 = vector.load %arg3[%c0_6, %c0_7] : memref<32x256xf32, #tpu.memory_space<vmem>>, vector<32x256xf32>
    tpu.vector_store %arg3[%c0_6, %c0_7], %11 {strides = array<i32>} : memref<32x256xf32, #tpu.memory_space<vmem>>, vector<32x256xf32>,
    return
  }
}

module attributes {stable_mosaic.version = 11 : i64} {
  func.func @kernel(%arg0: memref<32x256xbf16, #tpu.memory_space<vmem>>, %arg1: memref<256x128xbf16, #tpu.memory_space<vmem>>, %arg2: memref<32x128xbf16, #tpu.memory_space<vmem>>, %arg3: memref<1x128xf32, #tpu.memory_space<vmem>>, %arg4: memref<256x128xbf16, #tpu.memory_space<vmem>>, %arg5: memref<1x128xf32, #tpu.memory_space<vmem>>, %arg6: memref<32x5xbf16, #tpu.memory_space<vmem>>, %arg7: memref<32x5xbf16, #tpu.memory_space<vmem>>, %arg8: memref<1x5xf32, #tpu.memory_space<vmem>>, %arg9: memref<2x5xf32, #tpu.memory_space<vmem>>) attributes {dimension_semantics = [], scalar_prefetch = 0 : i64, scratch_operands = 0 : i64, tpu.core_type = #tpu.core_type<tc>} {
    %c0 = arith.constant 0 : index
    %c0_0 = arith.constant 0 : index
    %0 = vector.load %arg0[%c0, %c0_0] : memref<32x256xbf16, #tpu.memory_space<vmem>>, vector<32x256xbf16>
    %1 = vector.extract_strided_slice %0 {offsets = [30, 0], sizes = [2, 256], strides = [1, 1]} : vector<32x256xbf16> to vector<2x256xbf16>
    %c0_1 = arith.constant 0 : index
    %c0_2 = arith.constant 0 : index
    %2 = vector.load %arg4[%c0_1, %c0_2] : memref<256x128xbf16, #tpu.memory_space<vmem>>, vector<256x128xbf16>
    %cst = arith.constant dense<0.000000e+00> : vector<2x128xf32>
    %3 = tpu.matmul %1, %2, %cst {dimension_numbers = #tpu.dot_dimension_numbers<[1], [0], [0], [1], [0, 0, 1, 1], [], []>} : vector<2x256xbf16>, vector<256x128xbf16>, vector<2x128xf32> -> vector<2x128xf32>
    %c0_3 = arith.constant 0 : index
    %c0_4 = arith.constant 0 : index
    %4 = vector.load %arg5[%c0_3, %c0_4] : memref<1x128xf32, #tpu.memory_space<vmem>>, vector<1x128xf32>
    %5 = vector.broadcast %4 : vector<1x128xf32> to vector<2x128xf32>
    %6 = arith.addf %3, %5 : vector<2x128xf32>
    %7 = arith.negf %6 : vector<2x128xf32>
    %8 = math.exp %7 : vector<2x128xf32>
    %cst_5 = arith.constant 1.000000e+00 : f32
    %9 = vector.broadcast %cst_5 : f32 to vector<2x128xf32>
    %10 = arith.addf %9, %8 : vector<2x128xf32>
    %11 = arith.divf %9, %10 : vector<2x128xf32>
    %12 = math.tanh %6 : vector<2x128xf32>
    %13 = vector.extract_strided_slice %11 {offsets = [0, 0], sizes = [2, 32], strides = [1, 1]} : vector<2x128xf32> to vector<2x32xf32>
    %14 = vector.extract_strided_slice %12 {offsets = [0, 64], sizes = [2, 32], strides = [1, 1]} : vector<2x128xf32> to vector<2x32xf32>
    %15 = arith.mulf %13, %14 : vector<2x32xf32>
    %16 = vector.extract_strided_slice %11 {offsets = [0, 96], sizes = [2, 32], strides = [1, 1]} : vector<2x128xf32> to vector<2x32xf32>
    %17 = math.tanh %15 : vector<2x32xf32>
    %18 = arith.mulf %16, %17 : vector<2x32xf32>
    %19 = arith.truncf %18 : vector<2x32xf32> to vector<2x32xbf16>
    %c0_6 = arith.constant 0 : index
    %c0_7 = arith.constant 0 : index
    %20 = vector.load %arg7[%c0_6, %c0_7] : memref<32x5xbf16, #tpu.memory_space<vmem>>, vector<32x5xbf16>
    %cst_8 = arith.constant dense<0.000000e+00> : vector<2x5xf32>
    %21 = tpu.matmul %19, %20, %cst_8 {dimension_numbers = #tpu.dot_dimension_numbers<[1], [0], [0], [1], [0, 0, 1, 1], [], []>} : vector<2x32xbf16>, vector<32x5xbf16>, vector<2x5xf32> -> vector<2x5xf32>
    %c0_9 = arith.constant 0 : index
    %c0_10 = arith.constant 0 : index
    %22 = vector.load %arg8[%c0_9, %c0_10] : memref<1x5xf32, #tpu.memory_space<vmem>>, vector<1x5xf32>
    %23 = vector.broadcast %22 : vector<1x5xf32> to vector<2x5xf32>
    %24 = arith.addf %21, %23 : vector<2x5xf32>
    %c0_11 = arith.constant 0 : index
    %c0_12 = arith.constant 0 : index
    %25 = vector.load %arg1[%c0_11, %c0_12] : memref<256x128xbf16, #tpu.memory_space<vmem>>, vector<256x128xbf16>
    %cst_13 = arith.constant dense<0.000000e+00> : vector<32x128xf32>
    %26 = tpu.matmul %0, %25, %cst_13 {dimension_numbers = #tpu.dot_dimension_numbers<[1], [0], [0], [1], [0, 0, 1, 1], [], []>} : vector<32x256xbf16>, vector<256x128xbf16>, vector<32x128xf32> -> vector<32x128xf32>
    %c0_14 = arith.constant 0 : index
    %c0_15 = arith.constant 0 : index
    %27 = vector.load %arg3[%c0_14, %c0_15] : memref<1x128xf32, #tpu.memory_space<vmem>>, vector<1x128xf32>
    %28 = vector.broadcast %27 : vector<1x128xf32> to vector<32x128xf32>
    %29 = arith.addf %26, %28 : vector<32x128xf32>
    %c0_16 = arith.constant 0 : index
    %c0_17 = arith.constant 0 : index
    %30 = vector.load %arg2[%c0_16, %c0_17] : memref<32x128xbf16, #tpu.memory_space<vmem>>, vector<32x128xbf16>
    %cst_18 = arith.constant 0.000000e+00 : f32
    %31 = vector.broadcast %cst_18 : f32 to vector<2x32xf32>
    %cst_19 = arith.constant 0.000000e+00 : f32
    %32 = vector.broadcast %cst_19 : f32 to vector<2x32xf32>
    %33 = vector.extract_strided_slice %29 {offsets = [0, 0], sizes = [2, 128], strides = [1, 1]} : vector<32x128xf32> to vector<2x128xf32>
    %34 = arith.truncf %31 : vector<2x32xf32> to vector<2x32xbf16>
    %cst_20 = arith.constant dense<0.000000e+00> : vector<2x128xf32>
    %35 = tpu.matmul %34, %30, %cst_20 {dimension_numbers = #tpu.dot_dimension_numbers<[1], [0], [0], [1], [0, 0, 1, 1], [], []>} : vector<2x32xbf16>, vector<32x128xbf16>, vector<2x128xf32> -> vector<2x128xf32>
    %36 = arith.addf %33, %35 : vector<2x128xf32>
    %37 = arith.negf %36 : vector<2x128xf32>
    %38 = math.exp %37 : vector<2x128xf32>
    %cst_21 = arith.constant 1.000000e+00 : f32
    %39 = vector.broadcast %cst_21 : f32 to vector<2x128xf32>
    %40 = arith.addf %39, %38 : vector<2x128xf32>
    %41 = arith.divf %39, %40 : vector<2x128xf32>
    %42 = math.tanh %36 : vector<2x128xf32>
    %43 = vector.extract_strided_slice %41 {offsets = [0, 32], sizes = [2, 32], strides = [1, 1]} : vector<2x128xf32> to vector<2x32xf32>
    %44 = arith.mulf %43, %32 : vector<2x32xf32>
    %45 = vector.extract_strided_slice %41 {offsets = [0, 0], sizes = [2, 32], strides = [1, 1]} : vector<2x128xf32> to vector<2x32xf32>
    %46 = vector.extract_strided_slice %42 {offsets = [0, 64], sizes = [2, 32], strides = [1, 1]} : vector<2x128xf32> to vector<2x32xf32>
    %47 = arith.mulf %45, %46 : vector<2x32xf32>
    %48 = arith.addf %44, %47 : vector<2x32xf32>
    %49 = vector.extract_strided_slice %41 {offsets = [0, 96], sizes = [2, 32], strides = [1, 1]} : vector<2x128xf32> to vector<2x32xf32>
    %50 = math.tanh %48 : vector<2x32xf32>
    %51 = arith.mulf %49, %50 : vector<2x32xf32>
    %52 = vector.extract_strided_slice %29 {offsets = [2, 0], sizes = [2, 128], strides = [1, 1]} : vector<32x128xf32> to vector<2x128xf32>
    %53 = arith.truncf %51 : vector<2x32xf32> to vector<2x32xbf16>
    %cst_22 = arith.constant dense<0.000000e+00> : vector<2x128xf32>
    %54 = tpu.matmul %53, %30, %cst_22 {dimension_numbers = #tpu.dot_dimension_numbers<[1], [0], [0], [1], [0, 0, 1, 1], [], []>} : vector<2x32xbf16>, vector<32x128xbf16>, vector<2x128xf32> -> vector<2x128xf32>
    %55 = arith.addf %52, %54 : vector<2x128xf32>
    %56 = arith.negf %55 : vector<2x128xf32>
    %57 = math.exp %56 : vector<2x128xf32>
    %cst_23 = arith.constant 1.000000e+00 : f32
    %58 = vector.broadcast %cst_23 : f32 to vector<2x128xf32>
    %59 = arith.addf %58, %57 : vector<2x128xf32>
    %60 = arith.divf %58, %59 : vector<2x128xf32>
    %61 = math.tanh %55 : vector<2x128xf32>
    %62 = vector.extract_strided_slice %60 {offsets = [0, 32], sizes = [2, 32], strides = [1, 1]} : vector<2x128xf32> to vector<2x32xf32>
    %63 = arith.mulf %62, %48 : vector<2x32xf32>
    %64 = vector.extract_strided_slice %60 {offsets = [0, 0], sizes = [2, 32], strides = [1, 1]} : vector<2x128xf32> to vector<2x32xf32>
    %65 = vector.extract_strided_slice %61 {offsets = [0, 64], sizes = [2, 32], strides = [1, 1]} : vector<2x128xf32> to vector<2x32xf32>
    %66 = arith.mulf %64, %65 : vector<2x32xf32>
    %67 = arith.addf %63, %66 : vector<2x32xf32>
    %68 = vector.extract_strided_slice %60 {offsets = [0, 96], sizes = [2, 32], strides = [1, 1]} : vector<2x128xf32> to vector<2x32xf32>
    %69 = math.tanh %67 : vector<2x32xf32>
    %70 = arith.mulf %68, %69 : vector<2x32xf32>
    %71 = vector.extract_strided_slice %29 {offsets = [4, 0], sizes = [2, 128], strides = [1, 1]} : vector<32x128xf32> to vector<2x128xf32>
    %72 = arith.truncf %70 : vector<2x32xf32> to vector<2x32xbf16>
    %cst_24 = arith.constant dense<0.000000e+00> : vector<2x128xf32>
    %73 = tpu.matmul %72, %30, %cst_24 {dimension_numbers = #tpu.dot_dimension_numbers<[1], [0], [0], [1], [0, 0, 1, 1], [], []>} : vector<2x32xbf16>, vector<32x128xbf16>, vector<2x128xf32> -> vector<2x128xf32>
    %74 = arith.addf %71, %73 : vector<2x128xf32>
    %75 = arith.negf %74 : vector<2x128xf32>
    %76 = math.exp %75 : vector<2x128xf32>
    %cst_25 = arith.constant 1.000000e+00 : f32
    %77 = vector.broadcast %cst_25 : f32 to vector<2x128xf32>
    %78 = arith.addf %77, %76 : vector<2x128xf32>
    %79 = arith.divf %77, %78 : vector<2x128xf32>
    %80 = math.tanh %74 : vector<2x128xf32>
    %81 = vector.extract_strided_slice %79 {offsets = [0, 32], sizes = [2, 32], strides = [1, 1]} : vector<2x128xf32> to vector<2x32xf32>
    %82 = arith.mulf %81, %67 : vector<2x32xf32>
    %83 = vector.extract_strided_slice %79 {offsets = [0, 0], sizes = [2, 32], strides = [1, 1]} : vector<2x128xf32> to vector<2x32xf32>
    %84 = vector.extract_strided_slice %80 {offsets = [0, 64], sizes = [2, 32], strides = [1, 1]} : vector<2x128xf32> to vector<2x32xf32>
    %85 = arith.mulf %83, %84 : vector<2x32xf32>
    %86 = arith.addf %82, %85 : vector<2x32xf32>
    %87 = vector.extract_strided_slice %79 {offsets = [0, 96], sizes = [2, 32], strides = [1, 1]} : vector<2x128xf32> to vector<2x32xf32>
    %88 = math.tanh %86 : vector<2x32xf32>
    %89 = arith.mulf %87, %88 : vector<2x32xf32>
    %90 = vector.extract_strided_slice %29 {offsets = [6, 0], sizes = [2, 128], strides = [1, 1]} : vector<32x128xf32> to vector<2x128xf32>
    %91 = arith.truncf %89 : vector<2x32xf32> to vector<2x32xbf16>
    %cst_26 = arith.constant dense<0.000000e+00> : vector<2x128xf32>
    %92 = tpu.matmul %91, %30, %cst_26 {dimension_numbers = #tpu.dot_dimension_numbers<[1], [0], [0], [1], [0, 0, 1, 1], [], []>} : vector<2x32xbf16>, vector<32x128xbf16>, vector<2x128xf32> -> vector<2x128xf32>
    %93 = arith.addf %90, %92 : vector<2x128xf32>
    %94 = arith.negf %93 : vector<2x128xf32>
    %95 = math.exp %94 : vector<2x128xf32>
    %cst_27 = arith.constant 1.000000e+00 : f32
    %96 = vector.broadcast %cst_27 : f32 to vector<2x128xf32>
    %97 = arith.addf %96, %95 : vector<2x128xf32>
    %98 = arith.divf %96, %97 : vector<2x128xf32>
    %99 = math.tanh %93 : vector<2x128xf32>
    %100 = vector.extract_strided_slice %98 {offsets = [0, 32], sizes = [2, 32], strides = [1, 1]} : vector<2x128xf32> to vector<2x32xf32>
    %101 = arith.mulf %100, %86 : vector<2x32xf32>
    %102 = vector.extract_strided_slice %98 {offsets = [0, 0], sizes = [2, 32], strides = [1, 1]} : vector<2x128xf32> to vector<2x32xf32>
    %103 = vector.extract_strided_slice %99 {offsets = [0, 64], sizes = [2, 32], strides = [1, 1]} : vector<2x128xf32> to vector<2x32xf32>
    %104 = arith.mulf %102, %103 : vector<2x32xf32>
    %105 = arith.addf %101, %104 : vector<2x32xf32>
    %106 = vector.extract_strided_slice %98 {offsets = [0, 96], sizes = [2, 32], strides = [1, 1]} : vector<2x128xf32> to vector<2x32xf32>
    %107 = math.tanh %105 : vector<2x32xf32>
    %108 = arith.mulf %106, %107 : vector<2x32xf32>
    %109 = vector.extract_strided_slice %29 {offsets = [8, 0], sizes = [2, 128], strides = [1, 1]} : vector<32x128xf32> to vector<2x128xf32>
    %110 = arith.truncf %108 : vector<2x32xf32> to vector<2x32xbf16>
    %cst_28 = arith.constant dense<0.000000e+00> : vector<2x128xf32>
    %111 = tpu.matmul %110, %30, %cst_28 {dimension_numbers = #tpu.dot_dimension_numbers<[1], [0], [0], [1], [0, 0, 1, 1], [], []>} : vector<2x32xbf16>, vector<32x128xbf16>, vector<2x128xf32> -> vector<2x128xf32>
    %112 = arith.addf %109, %111 : vector<2x128xf32>
    %113 = arith.negf %112 : vector<2x128xf32>
    %114 = math.exp %113 : vector<2x128xf32>
    %cst_29 = arith.constant 1.000000e+00 : f32
    %115 = vector.broadcast %cst_29 : f32 to vector<2x128xf32>
    %116 = arith.addf %115, %114 : vector<2x128xf32>
    %117 = arith.divf %115, %116 : vector<2x128xf32>
    %118 = math.tanh %112 : vector<2x128xf32>
    %119 = vector.extract_strided_slice %117 {offsets = [0, 32], sizes = [2, 32], strides = [1, 1]} : vector<2x128xf32> to vector<2x32xf32>
    %120 = arith.mulf %119, %105 : vector<2x32xf32>
    %121 = vector.extract_strided_slice %117 {offsets = [0, 0], sizes = [2, 32], strides = [1, 1]} : vector<2x128xf32> to vector<2x32xf32>
    %122 = vector.extract_strided_slice %118 {offsets = [0, 64], sizes = [2, 32], strides = [1, 1]} : vector<2x128xf32> to vector<2x32xf32>
    %123 = arith.mulf %121, %122 : vector<2x32xf32>
    %124 = arith.addf %120, %123 : vector<2x32xf32>
    %125 = vector.extract_strided_slice %117 {offsets = [0, 96], sizes = [2, 32], strides = [1, 1]} : vector<2x128xf32> to vector<2x32xf32>
    %126 = math.tanh %124 : vector<2x32xf32>
    %127 = arith.mulf %125, %126 : vector<2x32xf32>
    %128 = vector.extract_strided_slice %29 {offsets = [10, 0], sizes = [2, 128], strides = [1, 1]} : vector<32x128xf32> to vector<2x128xf32>
    %129 = arith.truncf %127 : vector<2x32xf32> to vector<2x32xbf16>
    %cst_30 = arith.constant dense<0.000000e+00> : vector<2x128xf32>
    %130 = tpu.matmul %129, %30, %cst_30 {dimension_numbers = #tpu.dot_dimension_numbers<[1], [0], [0], [1], [0, 0, 1, 1], [], []>} : vector<2x32xbf16>, vector<32x128xbf16>, vector<2x128xf32> -> vector<2x128xf32>
    %131 = arith.addf %128, %130 : vector<2x128xf32>
    %132 = arith.negf %131 : vector<2x128xf32>
    %133 = math.exp %132 : vector<2x128xf32>
    %cst_31 = arith.constant 1.000000e+00 : f32
    %134 = vector.broadcast %cst_31 : f32 to vector<2x128xf32>
    %135 = arith.addf %134, %133 : vector<2x128xf32>
    %136 = arith.divf %134, %135 : vector<2x128xf32>
    %137 = math.tanh %131 : vector<2x128xf32>
    %138 = vector.extract_strided_slice %136 {offsets = [0, 32], sizes = [2, 32], strides = [1, 1]} : vector<2x128xf32> to vector<2x32xf32>
    %139 = arith.mulf %138, %124 : vector<2x32xf32>
    %140 = vector.extract_strided_slice %136 {offsets = [0, 0], sizes = [2, 32], strides = [1, 1]} : vector<2x128xf32> to vector<2x32xf32>
    %141 = vector.extract_strided_slice %137 {offsets = [0, 64], sizes = [2, 32], strides = [1, 1]} : vector<2x128xf32> to vector<2x32xf32>
    %142 = arith.mulf %140, %141 : vector<2x32xf32>
    %143 = arith.addf %139, %142 : vector<2x32xf32>
    %144 = vector.extract_strided_slice %136 {offsets = [0, 96], sizes = [2, 32], strides = [1, 1]} : vector<2x128xf32> to vector<2x32xf32>
    %145 = math.tanh %143 : vector<2x32xf32>
    %146 = arith.mulf %144, %145 : vector<2x32xf32>
    %147 = vector.extract_strided_slice %29 {offsets = [12, 0], sizes = [2, 128], strides = [1, 1]} : vector<32x128xf32> to vector<2x128xf32>
    %148 = arith.truncf %146 : vector<2x32xf32> to vector<2x32xbf16>
    %cst_32 = arith.constant dense<0.000000e+00> : vector<2x128xf32>
    %149 = tpu.matmul %148, %30, %cst_32 {dimension_numbers = #tpu.dot_dimension_numbers<[1], [0], [0], [1], [0, 0, 1, 1], [], []>} : vector<2x32xbf16>, vector<32x128xbf16>, vector<2x128xf32> -> vector<2x128xf32>
    %150 = arith.addf %147, %149 : vector<2x128xf32>
    %151 = arith.negf %150 : vector<2x128xf32>
    %152 = math.exp %151 : vector<2x128xf32>
    %cst_33 = arith.constant 1.000000e+00 : f32
    %153 = vector.broadcast %cst_33 : f32 to vector<2x128xf32>
    %154 = arith.addf %153, %152 : vector<2x128xf32>
    %155 = arith.divf %153, %154 : vector<2x128xf32>
    %156 = math.tanh %150 : vector<2x128xf32>
    %157 = vector.extract_strided_slice %155 {offsets = [0, 32], sizes = [2, 32], strides = [1, 1]} : vector<2x128xf32> to vector<2x32xf32>
    %158 = arith.mulf %157, %143 : vector<2x32xf32>
    %159 = vector.extract_strided_slice %155 {offsets = [0, 0], sizes = [2, 32], strides = [1, 1]} : vector<2x128xf32> to vector<2x32xf32>
    %160 = vector.extract_strided_slice %156 {offsets = [0, 64], sizes = [2, 32], strides = [1, 1]} : vector<2x128xf32> to vector<2x32xf32>
    %161 = arith.mulf %159, %160 : vector<2x32xf32>
    %162 = arith.addf %158, %161 : vector<2x32xf32>
    %163 = vector.extract_strided_slice %155 {offsets = [0, 96], sizes = [2, 32], strides = [1, 1]} : vector<2x128xf32> to vector<2x32xf32>
    %164 = math.tanh %162 : vector<2x32xf32>
    %165 = arith.mulf %163, %164 : vector<2x32xf32>
    %166 = vector.extract_strided_slice %29 {offsets = [14, 0], sizes = [2, 128], strides = [1, 1]} : vector<32x128xf32> to vector<2x128xf32>
    %167 = arith.truncf %165 : vector<2x32xf32> to vector<2x32xbf16>
    %cst_34 = arith.constant dense<0.000000e+00> : vector<2x128xf32>
    %168 = tpu.matmul %167, %30, %cst_34 {dimension_numbers = #tpu.dot_dimension_numbers<[1], [0], [0], [1], [0, 0, 1, 1], [], []>} : vector<2x32xbf16>, vector<32x128xbf16>, vector<2x128xf32> -> vector<2x128xf32>
    %169 = arith.addf %166, %168 : vector<2x128xf32>
    %170 = arith.negf %169 : vector<2x128xf32>
    %171 = math.exp %170 : vector<2x128xf32>
    %cst_35 = arith.constant 1.000000e+00 : f32
    %172 = vector.broadcast %cst_35 : f32 to vector<2x128xf32>
    %173 = arith.addf %172, %171 : vector<2x128xf32>
    %174 = arith.divf %172, %173 : vector<2x128xf32>
    %175 = math.tanh %169 : vector<2x128xf32>
    %176 = vector.extract_strided_slice %174 {offsets = [0, 32], sizes = [2, 32], strides = [1, 1]} : vector<2x128xf32> to vector<2x32xf32>
    %177 = arith.mulf %176, %162 : vector<2x32xf32>
    %178 = vector.extract_strided_slice %174 {offsets = [0, 0], sizes = [2, 32], strides = [1, 1]} : vector<2x128xf32> to vector<2x32xf32>
    %179 = vector.extract_strided_slice %175 {offsets = [0, 64], sizes = [2, 32], strides = [1, 1]} : vector<2x128xf32> to vector<2x32xf32>
    %180 = arith.mulf %178, %179 : vector<2x32xf32>
    %181 = arith.addf %177, %180 : vector<2x32xf32>
    %182 = vector.extract_strided_slice %174 {offsets = [0, 96], sizes = [2, 32], strides = [1, 1]} : vector<2x128xf32> to vector<2x32xf32>
    %183 = math.tanh %181 : vector<2x32xf32>
    %184 = arith.mulf %182, %183 : vector<2x32xf32>
    %185 = vector.extract_strided_slice %29 {offsets = [16, 0], sizes = [2, 128], strides = [1, 1]} : vector<32x128xf32> to vector<2x128xf32>
    %186 = arith.truncf %184 : vector<2x32xf32> to vector<2x32xbf16>
    %cst_36 = arith.constant dense<0.000000e+00> : vector<2x128xf32>
    %187 = tpu.matmul %186, %30, %cst_36 {dimension_numbers = #tpu.dot_dimension_numbers<[1], [0], [0], [1], [0, 0, 1, 1], [], []>} : vector<2x32xbf16>, vector<32x128xbf16>, vector<2x128xf32> -> vector<2x128xf32>
    %188 = arith.addf %185, %187 : vector<2x128xf32>
    %189 = arith.negf %188 : vector<2x128xf32>
    %190 = math.exp %189 : vector<2x128xf32>
    %cst_37 = arith.constant 1.000000e+00 : f32
    %191 = vector.broadcast %cst_37 : f32 to vector<2x128xf32>
    %192 = arith.addf %191, %190 : vector<2x128xf32>
    %193 = arith.divf %191, %192 : vector<2x128xf32>
    %194 = math.tanh %188 : vector<2x128xf32>
    %195 = vector.extract_strided_slice %193 {offsets = [0, 32], sizes = [2, 32], strides = [1, 1]} : vector<2x128xf32> to vector<2x32xf32>
    %196 = arith.mulf %195, %181 : vector<2x32xf32>
    %197 = vector.extract_strided_slice %193 {offsets = [0, 0], sizes = [2, 32], strides = [1, 1]} : vector<2x128xf32> to vector<2x32xf32>
    %198 = vector.extract_strided_slice %194 {offsets = [0, 64], sizes = [2, 32], strides = [1, 1]} : vector<2x128xf32> to vector<2x32xf32>
    %199 = arith.mulf %197, %198 : vector<2x32xf32>
    %200 = arith.addf %196, %199 : vector<2x32xf32>
    %201 = vector.extract_strided_slice %193 {offsets = [0, 96], sizes = [2, 32], strides = [1, 1]} : vector<2x128xf32> to vector<2x32xf32>
    %202 = math.tanh %200 : vector<2x32xf32>
    %203 = arith.mulf %201, %202 : vector<2x32xf32>
    %204 = vector.extract_strided_slice %29 {offsets = [18, 0], sizes = [2, 128], strides = [1, 1]} : vector<32x128xf32> to vector<2x128xf32>
    %205 = arith.truncf %203 : vector<2x32xf32> to vector<2x32xbf16>
    %cst_38 = arith.constant dense<0.000000e+00> : vector<2x128xf32>
    %206 = tpu.matmul %205, %30, %cst_38 {dimension_numbers = #tpu.dot_dimension_numbers<[1], [0], [0], [1], [0, 0, 1, 1], [], []>} : vector<2x32xbf16>, vector<32x128xbf16>, vector<2x128xf32> -> vector<2x128xf32>
    %207 = arith.addf %204, %206 : vector<2x128xf32>
    %208 = arith.negf %207 : vector<2x128xf32>
    %209 = math.exp %208 : vector<2x128xf32>
    %cst_39 = arith.constant 1.000000e+00 : f32
    %210 = vector.broadcast %cst_39 : f32 to vector<2x128xf32>
    %211 = arith.addf %210, %209 : vector<2x128xf32>
    %212 = arith.divf %210, %211 : vector<2x128xf32>
    %213 = math.tanh %207 : vector<2x128xf32>
    %214 = vector.extract_strided_slice %212 {offsets = [0, 32], sizes = [2, 32], strides = [1, 1]} : vector<2x128xf32> to vector<2x32xf32>
    %215 = arith.mulf %214, %200 : vector<2x32xf32>
    %216 = vector.extract_strided_slice %212 {offsets = [0, 0], sizes = [2, 32], strides = [1, 1]} : vector<2x128xf32> to vector<2x32xf32>
    %217 = vector.extract_strided_slice %213 {offsets = [0, 64], sizes = [2, 32], strides = [1, 1]} : vector<2x128xf32> to vector<2x32xf32>
    %218 = arith.mulf %216, %217 : vector<2x32xf32>
    %219 = arith.addf %215, %218 : vector<2x32xf32>
    %220 = vector.extract_strided_slice %212 {offsets = [0, 96], sizes = [2, 32], strides = [1, 1]} : vector<2x128xf32> to vector<2x32xf32>
    %221 = math.tanh %219 : vector<2x32xf32>
    %222 = arith.mulf %220, %221 : vector<2x32xf32>
    %223 = vector.extract_strided_slice %29 {offsets = [20, 0], sizes = [2, 128], strides = [1, 1]} : vector<32x128xf32> to vector<2x128xf32>
    %224 = arith.truncf %222 : vector<2x32xf32> to vector<2x32xbf16>
    %cst_40 = arith.constant dense<0.000000e+00> : vector<2x128xf32>
    %225 = tpu.matmul %224, %30, %cst_40 {dimension_numbers = #tpu.dot_dimension_numbers<[1], [0], [0], [1], [0, 0, 1, 1], [], []>} : vector<2x32xbf16>, vector<32x128xbf16>, vector<2x128xf32> -> vector<2x128xf32>
    %226 = arith.addf %223, %225 : vector<2x128xf32>
    %227 = arith.negf %226 : vector<2x128xf32>
    %228 = math.exp %227 : vector<2x128xf32>
    %cst_41 = arith.constant 1.000000e+00 : f32
    %229 = vector.broadcast %cst_41 : f32 to vector<2x128xf32>
    %230 = arith.addf %229, %228 : vector<2x128xf32>
    %231 = arith.divf %229, %230 : vector<2x128xf32>
    %232 = math.tanh %226 : vector<2x128xf32>
    %233 = vector.extract_strided_slice %231 {offsets = [0, 32], sizes = [2, 32], strides = [1, 1]} : vector<2x128xf32> to vector<2x32xf32>
    %234 = arith.mulf %233, %219 : vector<2x32xf32>
    %235 = vector.extract_strided_slice %231 {offsets = [0, 0], sizes = [2, 32], strides = [1, 1]} : vector<2x128xf32> to vector<2x32xf32>
    %236 = vector.extract_strided_slice %232 {offsets = [0, 64], sizes = [2, 32], strides = [1, 1]} : vector<2x128xf32> to vector<2x32xf32>
    %237 = arith.mulf %235, %236 : vector<2x32xf32>
    %238 = arith.addf %234, %237 : vector<2x32xf32>
    %239 = vector.extract_strided_slice %231 {offsets = [0, 96], sizes = [2, 32], strides = [1, 1]} : vector<2x128xf32> to vector<2x32xf32>
    %240 = math.tanh %238 : vector<2x32xf32>
    %241 = arith.mulf %239, %240 : vector<2x32xf32>
    %242 = vector.extract_strided_slice %29 {offsets = [22, 0], sizes = [2, 128], strides = [1, 1]} : vector<32x128xf32> to vector<2x128xf32>
    %243 = arith.truncf %241 : vector<2x32xf32> to vector<2x32xbf16>
    %cst_42 = arith.constant dense<0.000000e+00> : vector<2x128xf32>
    %244 = tpu.matmul %243, %30, %cst_42 {dimension_numbers = #tpu.dot_dimension_numbers<[1], [0], [0], [1], [0, 0, 1, 1], [], []>} : vector<2x32xbf16>, vector<32x128xbf16>, vector<2x128xf32> -> vector<2x128xf32>
    %245 = arith.addf %242, %244 : vector<2x128xf32>
    %246 = arith.negf %245 : vector<2x128xf32>
    %247 = math.exp %246 : vector<2x128xf32>
    %cst_43 = arith.constant 1.000000e+00 : f32
    %248 = vector.broadcast %cst_43 : f32 to vector<2x128xf32>
    %249 = arith.addf %248, %247 : vector<2x128xf32>
    %250 = arith.divf %248, %249 : vector<2x128xf32>
    %251 = math.tanh %245 : vector<2x128xf32>
    %252 = vector.extract_strided_slice %250 {offsets = [0, 32], sizes = [2, 32], strides = [1, 1]} : vector<2x128xf32> to vector<2x32xf32>
    %253 = arith.mulf %252, %238 : vector<2x32xf32>
    %254 = vector.extract_strided_slice %250 {offsets = [0, 0], sizes = [2, 32], strides = [1, 1]} : vector<2x128xf32> to vector<2x32xf32>
    %255 = vector.extract_strided_slice %251 {offsets = [0, 64], sizes = [2, 32], strides = [1, 1]} : vector<2x128xf32> to vector<2x32xf32>
    %256 = arith.mulf %254, %255 : vector<2x32xf32>
    %257 = arith.addf %253, %256 : vector<2x32xf32>
    %258 = vector.extract_strided_slice %250 {offsets = [0, 96], sizes = [2, 32], strides = [1, 1]} : vector<2x128xf32> to vector<2x32xf32>
    %259 = math.tanh %257 : vector<2x32xf32>
    %260 = arith.mulf %258, %259 : vector<2x32xf32>
    %261 = vector.extract_strided_slice %29 {offsets = [24, 0], sizes = [2, 128], strides = [1, 1]} : vector<32x128xf32> to vector<2x128xf32>
    %262 = arith.truncf %260 : vector<2x32xf32> to vector<2x32xbf16>
    %cst_44 = arith.constant dense<0.000000e+00> : vector<2x128xf32>
    %263 = tpu.matmul %262, %30, %cst_44 {dimension_numbers = #tpu.dot_dimension_numbers<[1], [0], [0], [1], [0, 0, 1, 1], [], []>} : vector<2x32xbf16>, vector<32x128xbf16>, vector<2x128xf32> -> vector<2x128xf32>
    %264 = arith.addf %261, %263 : vector<2x128xf32>
    %265 = arith.negf %264 : vector<2x128xf32>
    %266 = math.exp %265 : vector<2x128xf32>
    %cst_45 = arith.constant 1.000000e+00 : f32
    %267 = vector.broadcast %cst_45 : f32 to vector<2x128xf32>
    %268 = arith.addf %267, %266 : vector<2x128xf32>
    %269 = arith.divf %267, %268 : vector<2x128xf32>
    %270 = math.tanh %264 : vector<2x128xf32>
    %271 = vector.extract_strided_slice %269 {offsets = [0, 32], sizes = [2, 32], strides = [1, 1]} : vector<2x128xf32> to vector<2x32xf32>
    %272 = arith.mulf %271, %257 : vector<2x32xf32>
    %273 = vector.extract_strided_slice %269 {offsets = [0, 0], sizes = [2, 32], strides = [1, 1]} : vector<2x128xf32> to vector<2x32xf32>
    %274 = vector.extract_strided_slice %270 {offsets = [0, 64], sizes = [2, 32], strides = [1, 1]} : vector<2x128xf32> to vector<2x32xf32>
    %275 = arith.mulf %273, %274 : vector<2x32xf32>
    %276 = arith.addf %272, %275 : vector<2x32xf32>
    %277 = vector.extract_strided_slice %269 {offsets = [0, 96], sizes = [2, 32], strides = [1, 1]} : vector<2x128xf32> to vector<2x32xf32>
    %278 = math.tanh %276 : vector<2x32xf32>
    %279 = arith.mulf %277, %278 : vector<2x32xf32>
    %280 = vector.extract_strided_slice %29 {offsets = [26, 0], sizes = [2, 128], strides = [1, 1]} : vector<32x128xf32> to vector<2x128xf32>
    %281 = arith.truncf %279 : vector<2x32xf32> to vector<2x32xbf16>
    %cst_46 = arith.constant dense<0.000000e+00> : vector<2x128xf32>
    %282 = tpu.matmul %281, %30, %cst_46 {dimension_numbers = #tpu.dot_dimension_numbers<[1], [0], [0], [1], [0, 0, 1, 1], [], []>} : vector<2x32xbf16>, vector<32x128xbf16>, vector<2x128xf32> -> vector<2x128xf32>
    %283 = arith.addf %280, %282 : vector<2x128xf32>
    %284 = arith.negf %283 : vector<2x128xf32>
    %285 = math.exp %284 : vector<2x128xf32>
    %cst_47 = arith.constant 1.000000e+00 : f32
    %286 = vector.broadcast %cst_47 : f32 to vector<2x128xf32>
    %287 = arith.addf %286, %285 : vector<2x128xf32>
    %288 = arith.divf %286, %287 : vector<2x128xf32>
    %289 = math.tanh %283 : vector<2x128xf32>
    %290 = vector.extract_strided_slice %288 {offsets = [0, 32], sizes = [2, 32], strides = [1, 1]} : vector<2x128xf32> to vector<2x32xf32>
    %291 = arith.mulf %290, %276 : vector<2x32xf32>
    %292 = vector.extract_strided_slice %288 {offsets = [0, 0], sizes = [2, 32], strides = [1, 1]} : vector<2x128xf32> to vector<2x32xf32>
    %293 = vector.extract_strided_slice %289 {offsets = [0, 64], sizes = [2, 32], strides = [1, 1]} : vector<2x128xf32> to vector<2x32xf32>
    %294 = arith.mulf %292, %293 : vector<2x32xf32>
    %295 = arith.addf %291, %294 : vector<2x32xf32>
    %296 = vector.extract_strided_slice %288 {offsets = [0, 96], sizes = [2, 32], strides = [1, 1]} : vector<2x128xf32> to vector<2x32xf32>
    %297 = math.tanh %295 : vector<2x32xf32>
    %298 = arith.mulf %296, %297 : vector<2x32xf32>
    %299 = vector.extract_strided_slice %29 {offsets = [28, 0], sizes = [2, 128], strides = [1, 1]} : vector<32x128xf32> to vector<2x128xf32>
    %300 = arith.truncf %298 : vector<2x32xf32> to vector<2x32xbf16>
    %cst_48 = arith.constant dense<0.000000e+00> : vector<2x128xf32>
    %301 = tpu.matmul %300, %30, %cst_48 {dimension_numbers = #tpu.dot_dimension_numbers<[1], [0], [0], [1], [0, 0, 1, 1], [], []>} : vector<2x32xbf16>, vector<32x128xbf16>, vector<2x128xf32> -> vector<2x128xf32>
    %302 = arith.addf %299, %301 : vector<2x128xf32>
    %303 = arith.negf %302 : vector<2x128xf32>
    %304 = math.exp %303 : vector<2x128xf32>
    %cst_49 = arith.constant 1.000000e+00 : f32
    %305 = vector.broadcast %cst_49 : f32 to vector<2x128xf32>
    %306 = arith.addf %305, %304 : vector<2x128xf32>
    %307 = arith.divf %305, %306 : vector<2x128xf32>
    %308 = math.tanh %302 : vector<2x128xf32>
    %309 = vector.extract_strided_slice %307 {offsets = [0, 32], sizes = [2, 32], strides = [1, 1]} : vector<2x128xf32> to vector<2x32xf32>
    %310 = arith.mulf %309, %295 : vector<2x32xf32>
    %311 = vector.extract_strided_slice %307 {offsets = [0, 0], sizes = [2, 32], strides = [1, 1]} : vector<2x128xf32> to vector<2x32xf32>
    %312 = vector.extract_strided_slice %308 {offsets = [0, 64], sizes = [2, 32], strides = [1, 1]} : vector<2x128xf32> to vector<2x32xf32>
    %313 = arith.mulf %311, %312 : vector<2x32xf32>
    %314 = arith.addf %310, %313 : vector<2x32xf32>
    %315 = vector.extract_strided_slice %307 {offsets = [0, 96], sizes = [2, 32], strides = [1, 1]} : vector<2x128xf32> to vector<2x32xf32>
    %316 = math.tanh %314 : vector<2x32xf32>
    %317 = arith.mulf %315, %316 : vector<2x32xf32>
    %318 = vector.extract_strided_slice %29 {offsets = [30, 0], sizes = [2, 128], strides = [1, 1]} : vector<32x128xf32> to vector<2x128xf32>
    %319 = arith.truncf %317 : vector<2x32xf32> to vector<2x32xbf16>
    %cst_50 = arith.constant dense<0.000000e+00> : vector<2x128xf32>
    %320 = tpu.matmul %319, %30, %cst_50 {dimension_numbers = #tpu.dot_dimension_numbers<[1], [0], [0], [1], [0, 0, 1, 1], [], []>} : vector<2x32xbf16>, vector<32x128xbf16>, vector<2x128xf32> -> vector<2x128xf32>
    %321 = arith.addf %318, %320 : vector<2x128xf32>
    %322 = arith.negf %321 : vector<2x128xf32>
    %323 = math.exp %322 : vector<2x128xf32>
    %cst_51 = arith.constant 1.000000e+00 : f32
    %324 = vector.broadcast %cst_51 : f32 to vector<2x128xf32>
    %325 = arith.addf %324, %323 : vector<2x128xf32>
    %326 = arith.divf %324, %325 : vector<2x128xf32>
    %327 = math.tanh %321 : vector<2x128xf32>
    %328 = vector.extract_strided_slice %326 {offsets = [0, 32], sizes = [2, 32], strides = [1, 1]} : vector<2x128xf32> to vector<2x32xf32>
    %329 = arith.mulf %328, %314 : vector<2x32xf32>
    %330 = vector.extract_strided_slice %326 {offsets = [0, 0], sizes = [2, 32], strides = [1, 1]} : vector<2x128xf32> to vector<2x32xf32>
    %331 = vector.extract_strided_slice %327 {offsets = [0, 64], sizes = [2, 32], strides = [1, 1]} : vector<2x128xf32> to vector<2x32xf32>
    %332 = arith.mulf %330, %331 : vector<2x32xf32>
    %333 = arith.addf %329, %332 : vector<2x32xf32>
    %334 = vector.extract_strided_slice %326 {offsets = [0, 96], sizes = [2, 32], strides = [1, 1]} : vector<2x128xf32> to vector<2x32xf32>
    %335 = math.tanh %333 : vector<2x32xf32>
    %336 = arith.mulf %334, %335 : vector<2x32xf32>
    %337 = arith.truncf %336 : vector<2x32xf32> to vector<2x32xbf16>
    %c0_52 = arith.constant 0 : index
    %c0_53 = arith.constant 0 : index
    %338 = vector.load %arg6[%c0_52, %c0_53] : memref<32x5xbf16, #tpu.memory_space<vmem>>, vector<32x5xbf16>
    %cst_54 = arith.constant dense<0.000000e+00> : vector<2x5xf32>
    %339 = tpu.matmul %337, %338, %cst_54 {dimension_numbers = #tpu.dot_dimension_numbers<[1], [0], [0], [1], [0, 0, 1, 1], [], []>} : vector<2x32xbf16>, vector<32x5xbf16>, vector<2x5xf32> -> vector<2x5xf32>
    %340 = arith.addf %24, %339 : vector<2x5xf32>
    %c0_55 = arith.constant 0 : index
    %c0_56 = arith.constant 0 : index
    %341 = vector.load %arg9[%c0_55, %c0_56] : memref<2x5xf32, #tpu.memory_space<vmem>>, vector<2x5xf32>
    tpu.vector_store %arg9[%c0_55, %c0_56], %340 {strides = array<i32>} : memref<2x5xf32, #tpu.memory_space<vmem>>, vector<2x5xf32>,
    return
  }
}

</mosaic_0001>

<llo_original>
// kernel: eeg_cnn_lstm_forward.3
$region0: #{eeg_cnn_lstm_forward.3}
  #allocation0 [shape = 'u32[]', space=smem, size = 0x4, offset = 0x4, fixed_abs, tag = 'smem constant byte address 0x4 - core index']
  #allocation1 [shape = 'u32[144,128]{1,0:T(1,128)}', space=vmem, size = 0x12000, scoped, tag = 'internal scratch']
  %s0 = inlined_call_operand.vmem [shape: bf16[15,1024], index: 0, kind: input, shape index: {}]
  %s1 = inlined_call_operand.vmem [shape: bf16[16,15], index: 1, kind: input, shape index: {}]
  %s2 = inlined_call_operand.vmem [shape: f32[16,1], index: 2, kind: input, shape index: {}]
  %s3 = inlined_call_operand.vmem [shape: f32[16,512], index: 3, kind: output, shape index: {}]
  %s4 = sld [smem:[#allocation0]]
  $region22: #{eeg_cnn_lstm_forward.3} parent=0
    _
  %s6 = ssub.s32 1, %s4
  %s7 = scalar_select 0, %s6, %s4
  // Predicated region
  $region2: #{eeg_cnn_lstm_forward.3} parent=0 // pred_check
    _
  $region3: #{eeg_cnn_lstm_forward.3} parent=0 // pred_check_branch
    %9 = sbr.rel (0) target = $region5
  $region4: #{eeg_cnn_lstm_forward.3} parent=0 // pred_region
    _
  $region5: #{eeg_cnn_lstm_forward.3} parent=0 // pred_fallthru
    _
  // Predicated region
  $region6: #{eeg_cnn_lstm_forward.3} parent=0 // pred_check
    _
  $region7: #{eeg_cnn_lstm_forward.3} parent=0 // pred_check_branch
    %11 = sbr.rel (0) target = $region9
  $region8: #{eeg_cnn_lstm_forward.3} parent=0 // pred_region
    _
  $region9: #{eeg_cnn_lstm_forward.3} parent=0 // pred_fallthru
    _
  // Predicated region
  $region10: #{eeg_cnn_lstm_forward.3} parent=0 // pred_check
    _
  $region11: #{eeg_cnn_lstm_forward.3} parent=0 // pred_check_branch
    %13 = sbr.rel (0) target = $region13
  $region12: #{eeg_cnn_lstm_forward.3} parent=0 // pred_region
    _
  $region13: #{eeg_cnn_lstm_forward.3} parent=0 // pred_fallthru
    _
  %v15 = vld [vmem:[%s1] sm:$0xf]
  %v16 = vld [vmem:[%s1 + $0x4] sm:$0xf]
  %v17 = vld [vmem:[%s0] sm:$0xff]
  %v18 = vld [vmem:[%s0 + $0x8] sm:$0xff]
  %v19 = vld [vmem:[%s0 + $0x10] sm:$0xff]
  %v20 = vld [vmem:[%s0 + $0x18] sm:$0xff]
  %v21 = vld [vmem:[%s0 + $0x20] sm:$0xff]
  %v22 = vld [vmem:[%s0 + $0x28] sm:$0xff]
  %v23 = vld [vmem:[%s0 + $0x30] sm:$0xff]
  %v24 = vld [vmem:[%s0 + $0x38] sm:$0xff]
  %v25 = vld [vmem:[%s2] sm:$0xff]
  %v26 = vld [vmem:[%s2 + $0x8] sm:$0xff]
  %28 = vset.pattern.permute.xlu0 0
  %29 = vperm.xlu0 %28, %v25
  %v30 = vpop.permute.xlu0 %29
  %33 = vset.pattern.permute.xlu0 0
  %34 = vperm.xlu0 %33, %v26
  %v35 = vpop.permute.xlu0 %34
  %v39 = vunpack.c.l.b16 %v15
  %v40 = vunpack.c.l.b16 %v16
  %v41 = vpack.c.b16 %v40, %v39
  %v50 = vunpack.c.l.b16 %v17
  %v51 = vunpack.c.h.b16 %v17
  %v52 = vunpack.c.l.b16 %v18
  %v53 = vunpack.c.h.b16 %v18
  %v54 = vunpack.c.l.b16 %v19
  %v55 = vunpack.c.h.b16 %v19
  %v56 = vunpack.c.l.b16 %v20
  %v57 = vunpack.c.h.b16 %v20
  %v58 = vunpack.c.l.b16 %v21
  %v59 = vunpack.c.h.b16 %v21
  %v60 = vunpack.c.l.b16 %v22
  %v61 = vunpack.c.h.b16 %v22
  %v62 = vunpack.c.l.b16 %v23
  %v63 = vunpack.c.h.b16 %v23
  %v64 = vunpack.c.l.b16 %v24
  %v65 = vunpack.c.h.b16 %v24
  %v66 = vpack.c.b16 %v58, %v50
  %v67 = vpack.c.b16 %v59, %v51
  %v68 = vpack.c.b16 %v60, %v52
  %v69 = vpack.c.b16 %v61, %v53
  %v70 = vpack.c.b16 %v62, %v54
  %v71 = vpack.c.b16 %v63, %v55
  %v72 = vpack.c.b16 %v64, %v56
  %v73 = vpack.c.b16 %v65, %v57
  %vm74 = vcmask 121856
  %v76 = vsel %vm74, %v41, 0
  %vm78 = vcmask 1046528
  %vm79 = vcmask 1047552
  %v80 = vsel %vm78, 4294967295, 65535
  %v81 = vsel %vm79, %v80, 0
  %v83 = vand.u32 %v66, %v81
  %v86 = vand.u32 %v67, %v81
  %v89 = vand.u32 %v68, %v81
  %v92 = vand.u32 %v69, %v81
  %v95 = vand.u32 %v70, %v81
  %v98 = vand.u32 %v71, %v81
  %v101 = vand.u32 %v72, %v81
  %v104 = vand.u32 %v73, %v81
  %106 = vmatprep.subr.bf16.mxu0 %v86
  %107 = vmatpush1.bf16.msra.mxu0 %v83
  %108 = vmatprep.subr.bf16.mxu0 0
  %109 = vmatpush1.bf16.msra.mxu0 0
  %110 = vmatprep.subr.bf16.mxu0 0
  %111 = vmatpush1.bf16.msra.mxu0 0
  %112 = vmatprep.subr.bf16.mxu0 0
  %113 = vmatpush1.bf16.msra.mxu0 0
  %114 = vmatprep.subr.bf16.mxu0 0
  %115 = vmatpush1.bf16.msra.mxu0 0
  %116 = vmatprep.subr.bf16.mxu0 0
  %117 = vmatpush1.bf16.msra.mxu0 0
  %118 = vmatprep.subr.bf16.mxu0 0
  %119 = vmatpush1.bf16.msra.mxu0 0
  %120 = vmatprep.subr.bf16.mxu0 0
  %121 = vmatpush1.bf16.msra.mxu0 0
  %122 = vmatprep.subr.bf16.mxu0 0
  %123 = vmatpush1.bf16.msra.mxu0 0
  %124 = vmatprep.subr.bf16.mxu0 0
  %125 = vmatpush1.bf16.msra.mxu0 0
  %126 = vmatprep.subr.bf16.mxu0 0
  %127 = vmatpush1.bf16.msra.mxu0 0
  %128 = vmatprep.subr.bf16.mxu0 0
  %129 = vmatpush1.bf16.msra.mxu0 0
  %130 = vmatprep.subr.bf16.mxu0 0
  %131 = vmatpush1.bf16.msra.mxu0 0
  %132 = vmatprep.subr.bf16.mxu0 0
  %133 = vmatpush1.bf16.msra.mxu0 0
  %134 = vmatprep.subr.bf16.mxu0 0
  %135 = vmatpush1.bf16.msra.mxu0 0
  %136 = vmatprep.subr.bf16.mxu0 0
  %137 = vmatpush1.bf16.msra.mxu0 0
  %138 = vmatprep.mubr.bf16.mxu0 0
  %139 = vmatmul.mubr.bf16.gmra.mrb[0].mxu0 %v76
  %v140 = vpop.f32.mrb[0].mxu0
  %v141 = vadd.f32 %v30, %v140
  %v142 = vpop.f32.mrb[0].mxu0
  %v143 = vadd.f32 %v30, %v142
  %v144 = vpop.f32.mrb[0].mxu0
  %v145 = vadd.f32 %v35, %v144
  %v146 = vpop.f32.mrb[0].mxu0
  %v147 = vadd.f32 %v35, %v146
  %148 = vdwg.mxu0
  %149 = vmatprep.subr.bf16.mxu0 %v92
  %150 = vmatpush1.bf16.msra.mxu0 %v89
  %151 = vmatprep.subr.bf16.mxu0 0
  %152 = vmatpush1.bf16.msra.mxu0 0
  %153 = vmatprep.subr.bf16.mxu0 0
  %154 = vmatpush1.bf16.msra.mxu0 0
  %155 = vmatprep.subr.bf16.mxu0 0
  %156 = vmatpush1.bf16.msra.mxu0 0
  %157 = vmatprep.subr.bf16.mxu0 0
  %158 = vmatpush1.bf16.msra.mxu0 0
  %159 = vmatprep.subr.bf16.mxu0 0
  %160 = vmatpush1.bf16.msra.mxu0 0
  %161 = vmatprep.subr.bf16.mxu0 0
  %162 = vmatpush1.bf16.msra.mxu0 0
  %163 = vmatprep.subr.bf16.mxu0 0
  %164 = vmatpush1.bf16.msra.mxu0 0
  %165 = vmatprep.subr.bf16.mxu0 0
  %166 = vmatpush1.bf16.msra.mxu0 0
  %167 = vmatprep.subr.bf16.mxu0 0
  %168 = vmatpush1.bf16.msra.mxu0 0
  %169 = vmatprep.subr.bf16.mxu0 0
  %170 = vmatpush1.bf16.msra.mxu0 0
  %171 = vmatprep.subr.bf16.mxu0 0
  %172 = vmatpush1.bf16.msra.mxu0 0
  %173 = vmatprep.subr.bf16.mxu0 0
  %174 = vmatpush1.bf16.msra.mxu0 0
  %175 = vmatprep.subr.bf16.mxu0 0
  %176 = vmatpush1.bf16.msra.mxu0 0
  %177 = vmatprep.subr.bf16.mxu0 0
  %178 = vmatpush1.bf16.msra.mxu0 0
  %179 = vmatprep.subr.bf16.mxu0 0
  %180 = vmatpush1.bf16.msra.mxu0 0
  %181 = vmatprep.mubr.bf16.mxu0 0
  %182 = vmatmul.mubr.bf16.gmra.mrb[0].mxu0 %v76
  %v183 = vpop.f32.mrb[0].mxu0
  %v184 = vadd.f32 %v30, %v183
  %v185 = vpop.f32.mrb[0].mxu0
  %v186 = vadd.f32 %v30, %v185
  %v187 = vpop.f32.mrb[0].mxu0
  %v188 = vadd.f32 %v35, %v187
  %v189 = vpop.f32.mrb[0].mxu0
  %v190 = vadd.f32 %v35, %v189
  %191 = vdwg.mxu0
  %192 = vmatprep.subr.bf16.mxu0 %v98
  %193 = vmatpush1.bf16.msra.mxu0 %v95
  %194 = vmatprep.subr.bf16.mxu0 0
  %195 = vmatpush1.bf16.msra.mxu0 0
  %196 = vmatprep.subr.bf16.mxu0 0
  %197 = vmatpush1.bf16.msra.mxu0 0
  %198 = vmatprep.subr.bf16.mxu0 0
  %199 = vmatpush1.bf16.msra.mxu0 0
  %200 = vmatprep.subr.bf16.mxu0 0
  %201 = vmatpush1.bf16.msra.mxu0 0
  %202 = vmatprep.subr.bf16.mxu0 0
  %203 = vmatpush1.bf16.msra.mxu0 0
  %204 = vmatprep.subr.bf16.mxu0 0
  %205 = vmatpush1.bf16.msra.mxu0 0
  %206 = vmatprep.subr.bf16.mxu0 0
  %207 = vmatpush1.bf16.msra.mxu0 0
  %208 = vmatprep.subr.bf16.mxu0 0
  %209 = vmatpush1.bf16.msra.mxu0 0
  %210 = vmatprep.subr.bf16.mxu0 0
  %211 = vmatpush1.bf16.msra.mxu0 0
  %212 = vmatprep.subr.bf16.mxu0 0
  %213 = vmatpush1.bf16.msra.mxu0 0
  %214 = vmatprep.subr.bf16.mxu0 0
  %215 = vmatpush1.bf16.msra.mxu0 0
  %216 = vmatprep.subr.bf16.mxu0 0
  %217 = vmatpush1.bf16.msra.mxu0 0
  %218 = vmatprep.subr.bf16.mxu0 0
  %219 = vmatpush1.bf16.msra.mxu0 0
  %220 = vmatprep.subr.bf16.mxu0 0
  %221 = vmatpush1.bf16.msra.mxu0 0
  %222 = vmatprep.subr.bf16.mxu0 0
  %223 = vmatpush1.bf16.msra.mxu0 0
  %224 = vmatprep.mubr.bf16.mxu0 0
  %225 = vmatmul.mubr.bf16.gmra.mrb[0].mxu0 %v76
  %v226 = vpop.f32.mrb[0].mxu0
  %v227 = vadd.f32 %v30, %v226
  %v228 = vpop.f32.mrb[0].mxu0
  %v229 = vadd.f32 %v30, %v228
  %v230 = vpop.f32.mrb[0].mxu0
  %v231 = vadd.f32 %v35, %v230
  %v232 = vpop.f32.mrb[0].mxu0
  %v233 = vadd.f32 %v35, %v232
  %234 = vdwg.mxu0
  %235 = vmatprep.subr.bf16.mxu0 %v104
  %236 = vmatpush1.bf16.msra.mxu0 %v101
  %237 = vmatprep.subr.bf16.mxu0 0
  %238 = vmatpush1.bf16.msra.mxu0 0
  %239 = vmatprep.subr.bf16.mxu0 0
  %240 = vmatpush1.bf16.msra.mxu0 0
  %241 = vmatprep.subr.bf16.mxu0 0
  %242 = vmatpush1.bf16.msra.mxu0 0
  %243 = vmatprep.subr.bf16.mxu0 0
  %244 = vmatpush1.bf16.msra.mxu0 0
  %245 = vmatprep.subr.bf16.mxu0 0
  %246 = vmatpush1.bf16.msra.mxu0 0
  %247 = vmatprep.subr.bf16.mxu0 0
  %248 = vmatpush1.bf16.msra.mxu0 0
  %249 = vmatprep.subr.bf16.mxu0 0
  %250 = vmatpush1.bf16.msra.mxu0 0
  %251 = vmatprep.subr.bf16.mxu0 0
  %252 = vmatpush1.bf16.msra.mxu0 0
  %253 = vmatprep.subr.bf16.mxu0 0
  %254 = vmatpush1.bf16.msra.mxu0 0
  %255 = vmatprep.subr.bf16.mxu0 0
  %256 = vmatpush1.bf16.msra.mxu0 0
  %257 = vmatprep.subr.bf16.mxu0 0
  %258 = vmatpush1.bf16.msra.mxu0 0
  %259 = vmatprep.subr.bf16.mxu0 0
  %260 = vmatpush1.bf16.msra.mxu0 0
  %261 = vmatprep.subr.bf16.mxu0 0
  %262 = vmatpush1.bf16.msra.mxu0 0
  %263 = vmatprep.subr.bf16.mxu0 0
  %264 = vmatpush1.bf16.msra.mxu0 0
  %265 = vmatprep.subr.bf16.mxu0 0
  %266 = vmatpush1.bf16.msra.mxu0 0
  %267 = vmatprep.mubr.bf16.mxu0 0
  %268 = vmatmul.mubr.bf16.gmra.mrb[0].mxu0 %v76
  %v269 = vpop.f32.mrb[0].mxu0
  %v270 = vadd.f32 %v30, %v269
  %v271 = vpop.f32.mrb[0].mxu0
  %v272 = vadd.f32 %v30, %v271
  %v273 = vpop.f32.mrb[0].mxu0
  %v274 = vadd.f32 %v35, %v273
  %v275 = vpop.f32.mrb[0].mxu0
  %v276 = vadd.f32 %v35, %v275
  %277 = vdwg.mxu0
  %v278 = vmul.f32 %v141, 0.01
  %v279 = vmul.f32 %v143, 0.01
  %v280 = vmul.f32 %v184, 0.01
  %v281 = vmul.f32 %v186, 0.01
  %v282 = vmul.f32 %v227, 0.01
  %v283 = vmul.f32 %v229, 0.01
  %v284 = vmul.f32 %v270, 0.01
  %v285 = vmul.f32 %v272, 0.01
  %v286 = vmul.f32 %v145, 0.01
  %v287 = vmul.f32 %v147, 0.01
  %v288 = vmul.f32 %v188, 0.01
  %v289 = vmul.f32 %v190, 0.01
  %v290 = vmul.f32 %v231, 0.01
  %v291 = vmul.f32 %v233, 0.01
  %v292 = vmul.f32 %v274, 0.01
  %v293 = vmul.f32 %v276, 0.01
  %v294 = vmax.f32 %v141, %v278
  %v295 = vmax.f32 %v143, %v279
  %v296 = vmax.f32 %v184, %v280
  %v297 = vmax.f32 %v186, %v281
  %v298 = vmax.f32 %v227, %v282
  %v299 = vmax.f32 %v229, %v283
  %v300 = vmax.f32 %v270, %v284
  %v301 = vmax.f32 %v272, %v285
  %v302 = vmax.f32 %v145, %v286
  %v303 = vmax.f32 %v147, %v287
  %v304 = vmax.f32 %v188, %v288
  %v305 = vmax.f32 %v190, %v289
  %v306 = vmax.f32 %v231, %v290
  %v307 = vmax.f32 %v233, %v291
  %v308 = vmax.f32 %v274, %v292
  %v309 = vmax.f32 %v276, %v293
  %v310 = vmax.f32 %v294, %v298
  %v311 = vmax.f32 %v295, %v299
  %v312 = vmax.f32 %v296, %v300
  %v313 = vmax.f32 %v297, %v301
  %v314 = vmax.f32 %v302, %v306
  %v315 = vmax.f32 %v303, %v307
  %v316 = vmax.f32 %v304, %v308
  %v317 = vmax.f32 %v305, %v309
  %318 = vst [vmem:[%s3] sm:$0xff] %v310
  %319 = vst [vmem:[%s3 + $0x8] sm:$0xff] %v311
  %320 = vst [vmem:[%s3 + $0x10] sm:$0xff] %v312
  %321 = vst [vmem:[%s3 + $0x18] sm:$0xff] %v313
  %322 = vst [vmem:[%s3 + $0x20] sm:$0xff] %v314
  %323 = vst [vmem:[%s3 + $0x28] sm:$0xff] %v315
  %324 = vst [vmem:[%s3 + $0x30] sm:$0xff] %v316
  %325 = vst [vmem:[%s3 + $0x38] sm:$0xff] %v317
  // Predicated region
  $region14: #{eeg_cnn_lstm_forward.3} parent=0 // pred_check
    _
  $region15: #{eeg_cnn_lstm_forward.3} parent=0 // pred_check_branch
    %327 = sbr.rel (0) target = $region17
  $region16: #{eeg_cnn_lstm_forward.3} parent=0 // pred_region
    _
  $region17: #{eeg_cnn_lstm_forward.3} parent=0 // pred_fallthru
    _
  // Predicated region
  $region18: #{eeg_cnn_lstm_forward.3} parent=0 // pred_check
    _
  $region19: #{eeg_cnn_lstm_forward.3} parent=0 // pred_check_branch
    %329 = sbr.rel (0) target = $region21
  $region20: #{eeg_cnn_lstm_forward.3} parent=0 // pred_region
    _
  $region21: #{eeg_cnn_lstm_forward.3} parent=0 // pred_fallthru
    _

// kernel: eeg_cnn_lstm_forward.4
$region0: #{eeg_cnn_lstm_forward.4}
  #allocation0 [shape = 'u32[]', space=smem, size = 0x4, offset = 0x4, fixed_abs, tag = 'smem constant byte address 0x4 - core index']
  #allocation1 [shape = 'u32[144,128]{1,0:T(1,128)}', space=vmem, size = 0x12000, scoped, tag = 'internal scratch']
  %s0 = inlined_call_operand.vmem [shape: bf16[240,512], index: 0, kind: input, shape index: {}]
  %s1 = inlined_call_operand.vmem [shape: bf16[32,240], index: 1, kind: input, shape index: {}]
  %s2 = inlined_call_operand.vmem [shape: f32[32,1], index: 2, kind: input, shape index: {}]
  %s3 = inlined_call_operand.vmem [shape: f32[32,256], index: 3, kind: output, shape index: {}]
  %s4 = sld [smem:[#allocation0]]
  $region22: #{eeg_cnn_lstm_forward.4} parent=0
    _
  %s6 = ssub.s32 1, %s4
  %s7 = scalar_select 0, %s6, %s4
  // Predicated region
  $region2: #{eeg_cnn_lstm_forward.4} parent=0 // pred_check
    _
  $region3: #{eeg_cnn_lstm_forward.4} parent=0 // pred_check_branch
    %9 = sbr.rel (0) target = $region5
  $region4: #{eeg_cnn_lstm_forward.4} parent=0 // pred_region
    _
  $region5: #{eeg_cnn_lstm_forward.4} parent=0 // pred_fallthru
    _
  // Predicated region
  $region6: #{eeg_cnn_lstm_forward.4} parent=0 // pred_check
    _
  $region7: #{eeg_cnn_lstm_forward.4} parent=0 // pred_check_branch
    %11 = sbr.rel (0) target = $region9
  $region8: #{eeg_cnn_lstm_forward.4} parent=0 // pred_region
    _
  $region9: #{eeg_cnn_lstm_forward.4} parent=0 // pred_fallthru
    _
  // Predicated region
  $region10: #{eeg_cnn_lstm_forward.4} parent=0 // pred_check
    _
  $region11: #{eeg_cnn_lstm_forward.4} parent=0 // pred_check_branch
    %13 = sbr.rel (0) target = $region13
  $region12: #{eeg_cnn_lstm_forward.4} parent=0 // pred_region
    _
  $region13: #{eeg_cnn_lstm_forward.4} parent=0 // pred_fallthru
    _
  %v15 = vld [vmem:[%s1] sm:$0xff]
  %v16 = vld [vmem:[%s1 + $0x8] sm:$0xff]
  %v17 = vld [vmem:[%s1 + $0x10] sm:$0xff]
  %v18 = vld [vmem:[%s1 + $0x18] sm:$0xff]
  %v19 = vld [vmem:[%s0] sm:$0xff]
  %v20 = vld [vmem:[%s0 + $0x8] sm:$0xff]
  %v21 = vld [vmem:[%s0 + $0x10] sm:$0xff]
  %v22 = vld [vmem:[%s0 + $0x18] sm:$0xff]
  %v23 = vld [vmem:[%s0 + $0x20] sm:$0xff]
  %v24 = vld [vmem:[%s0 + $0x28] sm:$0xff]
  %v25 = vld [vmem:[%s0 + $0x30] sm:$0xff]
  %v26 = vld [vmem:[%s0 + $0x38] sm:$0xff]
  %v27 = vld [vmem:[%s0 + $0x40] sm:$0xff]
  %v28 = vld [vmem:[%s0 + $0x48] sm:$0xff]
  %v29 = vld [vmem:[%s0 + $0x50] sm:$0xff]
  %v30 = vld [vmem:[%s0 + $0x58] sm:$0xff]
  %v31 = vld [vmem:[%s0 + $0x60] sm:$0xff]
  %v32 = vld [vmem:[%s0 + $0x68] sm:$0xff]
  %v33 = vld [vmem:[%s0 + $0x70] sm:$0xff]
  %v34 = vld [vmem:[%s0 + $0x78] sm:$0xff]
  %v35 = vld [vmem:[%s0 + $0x80] sm:$0xff]
  %v36 = vld [vmem:[%s0 + $0x88] sm:$0xff]
  %v37 = vld [vmem:[%s0 + $0x90] sm:$0xff]
  %v38 = vld [vmem:[%s0 + $0x98] sm:$0xff]
  %v39 = vld [vmem:[%s0 + $0xa0] sm:$0xff]
  %v40 = vld [vmem:[%s0 + $0xa8] sm:$0xff]
  %v41 = vld [vmem:[%s0 + $0xb0] sm:$0xff]
  %v42 = vld [vmem:[%s0 + $0xb8] sm:$0xff]
  %v43 = vld [vmem:[%s0 + $0xc0] sm:$0xff]
  %v44 = vld [vmem:[%s0 + $0xc8] sm:$0xff]
  %v45 = vld [vmem:[%s0 + $0xd0] sm:$0xff]
  %v46 = vld [vmem:[%s0 + $0xd8] sm:$0xff]
  %v47 = vld [vmem:[%s0 + $0xe0] sm:$0xff]
  %v48 = vld [vmem:[%s0 + $0xe8] sm:$0xff]
  %v49 = vld [vmem:[%s0 + $0xf0] sm:$0xff]
  %v50 = vld [vmem:[%s0 + $0xf8] sm:$0xff]
  %v51 = vld [vmem:[%s0 + $0x100] sm:$0xff]
  %v52 = vld [vmem:[%s0 + $0x108] sm:$0xff]
  %v53 = vld [vmem:[%s0 + $0x110] sm:$0xff]
  %v54 = vld [vmem:[%s0 + $0x118] sm:$0xff]
  %v55 = vld [vmem:[%s0 + $0x120] sm:$0xff]
  %v56 = vld [vmem:[%s0 + $0x128] sm:$0xff]
  %v57 = vld [vmem:[%s0 + $0x130] sm:$0xff]
  %v58 = vld [vmem:[%s0 + $0x138] sm:$0xff]
  %v59 = vld [vmem:[%s0 + $0x140] sm:$0xff]
  %v60 = vld [vmem:[%s0 + $0x148] sm:$0xff]
  %v61 = vld [vmem:[%s0 + $0x150] sm:$0xff]
  %v62 = vld [vmem:[%s0 + $0x158] sm:$0xff]
  %v63 = vld [vmem:[%s0 + $0x160] sm:$0xff]
  %v64 = vld [vmem:[%s0 + $0x168] sm:$0xff]
  %v65 = vld [vmem:[%s0 + $0x170] sm:$0xff]
  %v66 = vld [vmem:[%s0 + $0x178] sm:$0xff]
  %v67 = vld [vmem:[%s0 + $0x180] sm:$0xff]
  %v68 = vld [vmem:[%s0 + $0x188] sm:$0xff]
  %v69 = vld [vmem:[%s0 + $0x190] sm:$0xff]
  %v70 = vld [vmem:[%s0 + $0x198] sm:$0xff]
  %v71 = vld [vmem:[%s0 + $0x1a0] sm:$0xff]
  %v72 = vld [vmem:[%s0 + $0x1a8] sm:$0xff]
  %v73 = vld [vmem:[%s0 + $0x1b0] sm:$0xff]
  %v74 = vld [vmem:[%s0 + $0x1b8] sm:$0xff]
  %v75 = vld [vmem:[%s0 + $0x1c0] sm:$0xff]
  %v76 = vld [vmem:[%s0 + $0x1c8] sm:$0xff]
  %v77 = vld [vmem:[%s0 + $0x1d0] sm:$0xff]
  %v78 = vld [vmem:[%s0 + $0x1d8] sm:$0xff]
  %v79 = vld [vmem:[%s2] sm:$0xff]
  %v80 = vld [vmem:[%s2 + $0x8] sm:$0xff]
  %v81 = vld [vmem:[%s2 + $0x10] sm:$0xff]
  %v82 = vld [vmem:[%s2 + $0x18] sm:$0xff]
  %84 = vset.pattern.permute.xlu0 0
  %85 = vperm.xlu0 %84, %v79
  %v86 = vpop.permute.xlu0 %85
  %89 = vset.pattern.permute.xlu0 0
  %90 = vperm.xlu0 %89, %v80
  %v91 = vpop.permute.xlu0 %90
  %94 = vset.pattern.permute.xlu0 0
  %95 = vperm.xlu0 %94, %v81
  %v96 = vpop.permute.xlu0 %95
  %99 = vset.pattern.permute.xlu0 0
  %100 = vperm.xlu0 %99, %v82
  %v101 = vpop.permute.xlu0 %100
  %v107 = vunpack.c.l.b16 %v15
  %v108 = vunpack.c.h.b16 %v15
  %v109 = vunpack.c.l.b16 %v16
  %v110 = vunpack.c.h.b16 %v16
  %v111 = vunpack.c.l.b16 %v17
  %v112 = vunpack.c.h.b16 %v17
  %v113 = vunpack.c.l.b16 %v18
  %v114 = vunpack.c.h.b16 %v18
  %v115 = vpack.c.b16 %v109, %v107
  %v116 = vpack.c.b16 %v110, %v108
  %v117 = vpack.c.b16 %v113, %v111
  %v118 = vpack.c.b16 %v114, %v112
  %v181 = vunpack.c.l.b16 %v19
  %v182 = vunpack.c.h.b16 %v19
  %v183 = vunpack.c.l.b16 %v20
  %v184 = vunpack.c.h.b16 %v20
  %v185 = vunpack.c.l.b16 %v21
  %v186 = vunpack.c.h.b16 %v21
  %v187 = vunpack.c.l.b16 %v22
  %v188 = vunpack.c.h.b16 %v22
  %v189 = vunpack.c.l.b16 %v23
  %v190 = vunpack.c.h.b16 %v23
  %v191 = vunpack.c.l.b16 %v24
  %v192 = vunpack.c.h.b16 %v24
  %v193 = vunpack.c.l.b16 %v25
  %v194 = vunpack.c.h.b16 %v25
  %v195 = vunpack.c.l.b16 %v26
  %v196 = vunpack.c.h.b16 %v26
  %v197 = vunpack.c.l.b16 %v27
  %v198 = vunpack.c.h.b16 %v27
  %v199 = vunpack.c.l.b16 %v28
  %v200 = vunpack.c.h.b16 %v28
  %v201 = vunpack.c.l.b16 %v29
  %v202 = vunpack.c.h.b16 %v29
  %v203 = vunpack.c.l.b16 %v30
  %v204 = vunpack.c.h.b16 %v30
  %v205 = vunpack.c.l.b16 %v31
  %v206 = vunpack.c.h.b16 %v31
  %v207 = vunpack.c.l.b16 %v32
  %v208 = vunpack.c.h.b16 %v32
  %v209 = vunpack.c.l.b16 %v33
  %v210 = vunpack.c.h.b16 %v33
  %v211 = vunpack.c.l.b16 %v34
  %v212 = vunpack.c.h.b16 %v34
  %v213 = vunpack.c.l.b16 %v35
  %v214 = vunpack.c.h.b16 %v35
  %v215 = vunpack.c.l.b16 %v36
  %v216 = vunpack.c.h.b16 %v36
  %v217 = vunpack.c.l.b16 %v37
  %v218 = vunpack.c.h.b16 %v37
  %v219 = vunpack.c.l.b16 %v38
  %v220 = vunpack.c.h.b16 %v38
  %v221 = vunpack.c.l.b16 %v39
  %v222 = vunpack.c.h.b16 %v39
  %v223 = vunpack.c.l.b16 %v40
  %v224 = vunpack.c.h.b16 %v40
  %v225 = vunpack.c.l.b16 %v41
  %v226 = vunpack.c.h.b16 %v41
  %v227 = vunpack.c.l.b16 %v42
  %v228 = vunpack.c.h.b16 %v42
  %v229 = vunpack.c.l.b16 %v43
  %v230 = vunpack.c.h.b16 %v43
  %v231 = vunpack.c.l.b16 %v44
  %v232 = vunpack.c.h.b16 %v44
  %v233 = vunpack.c.l.b16 %v45
  %v234 = vunpack.c.h.b16 %v45
  %v235 = vunpack.c.l.b16 %v46
  %v236 = vunpack.c.h.b16 %v46
  %v237 = vunpack.c.l.b16 %v47
  %v238 = vunpack.c.h.b16 %v47
  %v239 = vunpack.c.l.b16 %v48
  %v240 = vunpack.c.h.b16 %v48
  %v241 = vunpack.c.l.b16 %v49
  %v242 = vunpack.c.h.b16 %v49
  %v243 = vunpack.c.l.b16 %v50
  %v244 = vunpack.c.h.b16 %v50
  %v245 = vunpack.c.l.b16 %v51
  %v246 = vunpack.c.h.b16 %v51
  %v247 = vunpack.c.l.b16 %v52
  %v248 = vunpack.c.h.b16 %v52
  %v249 = vunpack.c.l.b16 %v53
  %v250 = vunpack.c.h.b16 %v53
  %v251 = vunpack.c.l.b16 %v54
  %v252 = vunpack.c.h.b16 %v54
  %v253 = vunpack.c.l.b16 %v55
  %v254 = vunpack.c.h.b16 %v55
  %v255 = vunpack.c.l.b16 %v56
  %v256 = vunpack.c.h.b16 %v56
  %v257 = vunpack.c.l.b16 %v57
  %v258 = vunpack.c.h.b16 %v57
  %v259 = vunpack.c.l.b16 %v58
  %v260 = vunpack.c.h.b16 %v58
  %v261 = vunpack.c.l.b16 %v59
  %v262 = vunpack.c.h.b16 %v59
  %v263 = vunpack.c.l.b16 %v60
  %v264 = vunpack.c.h.b16 %v60
  %v265 = vunpack.c.l.b16 %v61
  %v266 = vunpack.c.h.b16 %v61
  %v267 = vunpack.c.l.b16 %v62
  %v268 = vunpack.c.h.b16 %v62
  %v269 = vunpack.c.l.b16 %v63
  %v270 = vunpack.c.h.b16 %v63
  %v271 = vunpack.c.l.b16 %v64
  %v272 = vunpack.c.h.b16 %v64
  %v273 = vunpack.c.l.b16 %v65
  %v274 = vunpack.c.h.b16 %v65
  %v275 = vunpack.c.l.b16 %v66
  %v276 = vunpack.c.h.b16 %v66
  %v277 = vunpack.c.l.b16 %v67
  %v278 = vunpack.c.h.b16 %v67
  %v279 = vunpack.c.l.b16 %v68
  %v280 = vunpack.c.h.b16 %v68
  %v281 = vunpack.c.l.b16 %v69
  %v282 = vunpack.c.h.b16 %v69
  %v283 = vunpack.c.l.b16 %v70
  %v284 = vunpack.c.h.b16 %v70
  %v285 = vunpack.c.l.b16 %v71
  %v286 = vunpack.c.h.b16 %v71
  %v287 = vunpack.c.l.b16 %v72
  %v288 = vunpack.c.h.b16 %v72
  %v289 = vunpack.c.l.b16 %v73
  %v290 = vunpack.c.h.b16 %v73
  %v291 = vunpack.c.l.b16 %v74
  %v292 = vunpack.c.h.b16 %v74
  %v293 = vunpack.c.l.b16 %v75
  %v294 = vunpack.c.h.b16 %v75
  %v295 = vunpack.c.l.b16 %v76
  %v296 = vunpack.c.h.b16 %v76
  %v297 = vunpack.c.l.b16 %v77
  %v298 = vunpack.c.h.b16 %v77
  %v299 = vunpack.c.l.b16 %v78
  %v300 = vunpack.c.h.b16 %v78
  %v301 = vpack.c.b16 %v185, %v181
  %v302 = vpack.c.b16 %v186, %v182
  %v303 = vpack.c.b16 %v187, %v183
  %v304 = vpack.c.b16 %v188, %v184
  %v305 = vpack.c.b16 %v193, %v189
  %v306 = vpack.c.b16 %v194, %v190
  %v307 = vpack.c.b16 %v195, %v191
  %v308 = vpack.c.b16 %v196, %v192
  %v309 = vpack.c.b16 %v201, %v197
  %v310 = vpack.c.b16 %v202, %v198
  %v311 = vpack.c.b16 %v203, %v199
  %v312 = vpack.c.b16 %v204, %v200
  %v313 = vpack.c.b16 %v209, %v205
  %v314 = vpack.c.b16 %v210, %v206
  %v315 = vpack.c.b16 %v211, %v207
  %v316 = vpack.c.b16 %v212, %v208
  %v317 = vpack.c.b16 %v217, %v213
  %v318 = vpack.c.b16 %v218, %v214
  %v319 = vpack.c.b16 %v219, %v215
  %v320 = vpack.c.b16 %v220, %v216
  %v321 = vpack.c.b16 %v225, %v221
  %v322 = vpack.c.b16 %v226, %v222
  %v323 = vpack.c.b16 %v227, %v223
  %v324 = vpack.c.b16 %v228, %v224
  %v325 = vpack.c.b16 %v233, %v229
  %v326 = vpack.c.b16 %v234, %v230
  %v327 = vpack.c.b16 %v235, %v231
  %v328 = vpack.c.b16 %v236, %v232
  %v329 = vpack.c.b16 %v241, %v237
  %v330 = vpack.c.b16 %v242, %v238
  %v331 = vpack.c.b16 %v243, %v239
  %v332 = vpack.c.b16 %v244, %v240
  %v333 = vpack.c.b16 %v249, %v245
  %v334 = vpack.c.b16 %v250, %v246
  %v335 = vpack.c.b16 %v251, %v247
  %v336 = vpack.c.b16 %v252, %v248
  %v337 = vpack.c.b16 %v257, %v253
  %v338 = vpack.c.b16 %v258, %v254
  %v339 = vpack.c.b16 %v259, %v255
  %v340 = vpack.c.b16 %v260, %v256
  %v341 = vpack.c.b16 %v265, %v261
  %v342 = vpack.c.b16 %v266, %v262
  %v343 = vpack.c.b16 %v267, %v263
  %v344 = vpack.c.b16 %v268, %v264
  %v345 = vpack.c.b16 %v273, %v269
  %v346 = vpack.c.b16 %v274, %v270
  %v347 = vpack.c.b16 %v275, %v271
  %v348 = vpack.c.b16 %v276, %v272
  %v349 = vpack.c.b16 %v281, %v277
  %v350 = vpack.c.b16 %v282, %v278
  %v351 = vpack.c.b16 %v283, %v279
  %v352 = vpack.c.b16 %v284, %v280
  %v353 = vpack.c.b16 %v289, %v285
  %v354 = vpack.c.b16 %v290, %v286
  %v355 = vpack.c.b16 %v291, %v287
  %v356 = vpack.c.b16 %v292, %v288
  %v357 = vpack.c.b16 %v297, %v293
  %v358 = vpack.c.b16 %v298, %v294
  %v359 = vpack.c.b16 %v299, %v295
  %v360 = vpack.c.b16 %v300, %v296
  %vm421 = vcmask 916480
  %v423 = vsel %vm421, %v116, 0
  %v426 = vsel %vm421, %v118, 0
  %428 = vmatprep.subr.bf16.mxu0 %v302
  %429 = vmatpush1.bf16.msra.mxu0 %v301
  %430 = vmatprep.subr.bf16.mxu0 %v306
  %431 = vmatpush1.bf16.msra.mxu0 %v305
  %432 = vmatprep.subr.bf16.mxu0 %v310
  %433 = vmatpush1.bf16.msra.mxu0 %v309
  %434 = vmatprep.subr.bf16.mxu0 %v314
  %435 = vmatpush1.bf16.msra.mxu0 %v313
  %436 = vmatprep.subr.bf16.mxu0 %v318
  %437 = vmatpush1.bf16.msra.mxu0 %v317
  %438 = vmatprep.subr.bf16.mxu0 %v322
  %439 = vmatpush1.bf16.msra.mxu0 %v321
  %440 = vmatprep.subr.bf16.mxu0 %v326
  %441 = vmatpush1.bf16.msra.mxu0 %v325
  %442 = vmatprep.subr.bf16.mxu0 %v330
  %443 = vmatpush1.bf16.msra.mxu0 %v329
  %444 = vmatprep.subr.bf16.mxu0 %v334
  %445 = vmatpush1.bf16.msra.mxu0 %v333
  %446 = vmatprep.subr.bf16.mxu0 %v338
  %447 = vmatpush1.bf16.msra.mxu0 %v337
  %448 = vmatprep.subr.bf16.mxu0 %v342
  %449 = vmatpush1.bf16.msra.mxu0 %v341
  %450 = vmatprep.subr.bf16.mxu0 %v346
  %451 = vmatpush1.bf16.msra.mxu0 %v345
  %452 = vmatprep.subr.bf16.mxu0 %v350
  %453 = vmatpush1.bf16.msra.mxu0 %v349
  %454 = vmatprep.subr.bf16.mxu0 %v354
  %455 = vmatpush1.bf16.msra.mxu0 %v353
  %456 = vmatprep.subr.bf16.mxu0 %v358
  %457 = vmatpush1.bf16.msra.mxu0 %v357
  %458 = vmatprep.subr.bf16.mxu0 0
  %459 = vmatpush1.bf16.msra.mxu0 0
  %460 = vmatprep.mubr.bf16.mxu0 %v423
  %461 = vmatmul.mubr.bf16.gmra.mrb[0].mxu0 %v115
  %v462 = vpop.f32.mrb[0].mxu0
  %v463 = vadd.f32 %v86, %v462
  %v464 = vpop.f32.mrb[0].mxu0
  %v465 = vadd.f32 %v86, %v464
  %v466 = vpop.f32.mrb[0].mxu0
  %v467 = vadd.f32 %v91, %v466
  %v468 = vpop.f32.mrb[0].mxu0
  %v469 = vadd.f32 %v91, %v468
  %470 = vmatprep.mubr.bf16.mxu0 %v426
  %471 = vmatmul.mubr.bf16.gmra.mrb[0].mxu0 %v117
  %v472 = vpop.f32.mrb[0].mxu0
  %v473 = vadd.f32 %v96, %v472
  %v474 = vpop.f32.mrb[0].mxu0
  %v475 = vadd.f32 %v96, %v474
  %v476 = vpop.f32.mrb[0].mxu0
  %v477 = vadd.f32 %v101, %v476
  %v478 = vpop.f32.mrb[0].mxu0
  %v479 = vadd.f32 %v101, %v478
  %480 = vdwg.mxu0
  %481 = vmatprep.subr.bf16.mxu0 %v304
  %482 = vmatpush1.bf16.msra.mxu0 %v303
  %483 = vmatprep.subr.bf16.mxu0 %v308
  %484 = vmatpush1.bf16.msra.mxu0 %v307
  %485 = vmatprep.subr.bf16.mxu0 %v312
  %486 = vmatpush1.bf16.msra.mxu0 %v311
  %487 = vmatprep.subr.bf16.mxu0 %v316
  %488 = vmatpush1.bf16.msra.mxu0 %v315
  %489 = vmatprep.subr.bf16.mxu0 %v320
  %490 = vmatpush1.bf16.msra.mxu0 %v319
  %491 = vmatprep.subr.bf16.mxu0 %v324
  %492 = vmatpush1.bf16.msra.mxu0 %v323
  %493 = vmatprep.subr.bf16.mxu0 %v328
  %494 = vmatpush1.bf16.msra.mxu0 %v327
  %495 = vmatprep.subr.bf16.mxu0 %v332
  %496 = vmatpush1.bf16.msra.mxu0 %v331
  %497 = vmatprep.subr.bf16.mxu0 %v336
  %498 = vmatpush1.bf16.msra.mxu0 %v335
  %499 = vmatprep.subr.bf16.mxu0 %v340
  %500 = vmatpush1.bf16.msra.mxu0 %v339
  %501 = vmatprep.subr.bf16.mxu0 %v344
  %502 = vmatpush1.bf16.msra.mxu0 %v343
  %503 = vmatprep.subr.bf16.mxu0 %v348
  %504 = vmatpush1.bf16.msra.mxu0 %v347
  %505 = vmatprep.subr.bf16.mxu0 %v352
  %506 = vmatpush1.bf16.msra.mxu0 %v351
  %507 = vmatprep.subr.bf16.mxu0 %v356
  %508 = vmatpush1.bf16.msra.mxu0 %v355
  %509 = vmatprep.subr.bf16.mxu0 %v360
  %510 = vmatpush1.bf16.msra.mxu0 %v359
  %511 = vmatprep.subr.bf16.mxu0 0
  %512 = vmatpush1.bf16.msra.mxu0 0
  %513 = vmatprep.mubr.bf16.mxu0 %v423
  %514 = vmatmul.mubr.bf16.gmra.mrb[0].mxu0 %v115
  %v515 = vpop.f32.mrb[0].mxu0
  %v516 = vadd.f32 %v86, %v515
  %v517 = vpop.f32.mrb[0].mxu0
  %v518 = vadd.f32 %v86, %v517
  %v519 = vpop.f32.mrb[0].mxu0
  %v520 = vadd.f32 %v91, %v519
  %v521 = vpop.f32.mrb[0].mxu0
  %v522 = vadd.f32 %v91, %v521
  %523 = vmatprep.mubr.bf16.mxu0 %v426
  %524 = vmatmul.mubr.bf16.gmra.mrb[0].mxu0 %v117
  %v525 = vpop.f32.mrb[0].mxu0
  %v526 = vadd.f32 %v96, %v525
  %v527 = vpop.f32.mrb[0].mxu0
  %v528 = vadd.f32 %v96, %v527
  %v529 = vpop.f32.mrb[0].mxu0
  %v530 = vadd.f32 %v101, %v529
  %v531 = vpop.f32.mrb[0].mxu0
  %v532 = vadd.f32 %v101, %v531
  %533 = vdwg.mxu0
  %v534 = vmul.f32 %v463, 0.01
  %v535 = vmul.f32 %v465, 0.01
  %v536 = vmul.f32 %v516, 0.01
  %v537 = vmul.f32 %v518, 0.01
  %v538 = vmul.f32 %v467, 0.01
  %v539 = vmul.f32 %v469, 0.01
  %v540 = vmul.f32 %v520, 0.01
  %v541 = vmul.f32 %v522, 0.01
  %v542 = vmul.f32 %v473, 0.01
  %v543 = vmul.f32 %v475, 0.01
  %v544 = vmul.f32 %v526, 0.01
  %v545 = vmul.f32 %v528, 0.01
  %v546 = vmul.f32 %v477, 0.01
  %v547 = vmul.f32 %v479, 0.01
  %v548 = vmul.f32 %v530, 0.01
  %v549 = vmul.f32 %v532, 0.01
  %v550 = vmax.f32 %v463, %v534
  %v551 = vmax.f32 %v465, %v535
  %v552 = vmax.f32 %v516, %v536
  %v553 = vmax.f32 %v518, %v537
  %v554 = vmax.f32 %v467, %v538
  %v555 = vmax.f32 %v469, %v539
  %v556 = vmax.f32 %v520, %v540
  %v557 = vmax.f32 %v522, %v541
  %v558 = vmax.f32 %v473, %v542
  %v559 = vmax.f32 %v475, %v543
  %v560 = vmax.f32 %v526, %v544
  %v561 = vmax.f32 %v528, %v545
  %v562 = vmax.f32 %v477, %v546
  %v563 = vmax.f32 %v479, %v547
  %v564 = vmax.f32 %v530, %v548
  %v565 = vmax.f32 %v532, %v549
  %v566 = vmax.f32 %v550, %v552
  %v567 = vmax.f32 %v551, %v553
  %v568 = vmax.f32 %v554, %v556
  %v569 = vmax.f32 %v555, %v557
  %v570 = vmax.f32 %v558, %v560
  %v571 = vmax.f32 %v559, %v561
  %v572 = vmax.f32 %v562, %v564
  %v573 = vmax.f32 %v563, %v565
  %574 = vst [vmem:[%s3] sm:$0xff] %v566
  %575 = vst [vmem:[%s3 + $0x8] sm:$0xff] %v567
  %576 = vst [vmem:[%s3 + $0x10] sm:$0xff] %v568
  %577 = vst [vmem:[%s3 + $0x18] sm:$0xff] %v569
  %578 = vst [vmem:[%s3 + $0x20] sm:$0xff] %v570
  %579 = vst [vmem:[%s3 + $0x28] sm:$0xff] %v571
  %580 = vst [vmem:[%s3 + $0x30] sm:$0xff] %v572
  %581 = vst [vmem:[%s3 + $0x38] sm:$0xff] %v573
  // Predicated region
  $region14: #{eeg_cnn_lstm_forward.4} parent=0 // pred_check
    _
  $region15: #{eeg_cnn_lstm_forward.4} parent=0 // pred_check_branch
    %583 = sbr.rel (0) target = $region17
  $region16: #{eeg_cnn_lstm_forward.4} parent=0 // pred_region
    _
  $region17: #{eeg_cnn_lstm_forward.4} parent=0 // pred_fallthru
    _
  // Predicated region
  $region18: #{eeg_cnn_lstm_forward.4} parent=0 // pred_check
    _
  $region19: #{eeg_cnn_lstm_forward.4} parent=0 // pred_check_branch
    %585 = sbr.rel (0) target = $region21
  $region20: #{eeg_cnn_lstm_forward.4} parent=0 // pred_region
    _
  $region21: #{eeg_cnn_lstm_forward.4} parent=0 // pred_fallthru
    _

// kernel: eeg_cnn_lstm_forward.5
$region0: #{eeg_cnn_lstm_forward.5}
  #allocation0 [shape = 'u32[]', space=smem, size = 0x4, offset = 0x4, fixed_abs, tag = 'smem constant byte address 0x4 - core index']
  #allocation1 [shape = 'u32[144,128]{1,0:T(1,128)}', space=vmem, size = 0x12000, scoped, tag = 'internal scratch']
  %s0 = inlined_call_operand.vmem [shape: bf16[32,256], index: 0, kind: input, shape index: {}]
  %s1 = inlined_call_operand.vmem [shape: bf16[256,128], index: 1, kind: input, shape index: {}]
  %s2 = inlined_call_operand.vmem [shape: bf16[32,128], index: 2, kind: input, shape index: {}]
  %s3 = inlined_call_operand.vmem [shape: f32[1,128], index: 3, kind: input, shape index: {}]
  %s4 = inlined_call_operand.vmem [shape: bf16[256,128], index: 4, kind: input, shape index: {}]
  %s5 = inlined_call_operand.vmem [shape: f32[1,128], index: 5, kind: input, shape index: {}]
  %s6 = inlined_call_operand.vmem [shape: bf16[32,5], index: 6, kind: input, shape index: {}]
  %s7 = inlined_call_operand.vmem [shape: bf16[32,5], index: 7, kind: input, shape index: {}]
  %s8 = inlined_call_operand.vmem [shape: f32[1,5], index: 8, kind: input, shape index: {}]
  %s9 = inlined_call_operand.hbm [shape: f32[2,5], index: 9, kind: output, shape index: {}]
  %s10 = sld [smem:[#allocation0]]
  $region46: #{eeg_cnn_lstm_forward.5} parent=0
    _
  %s12 = ssub.s32 1, %s10
  %s13 = scalar_select 0, %s12, %s10
  $region1: #{eeg_cnn_lstm_forward.5} parent=0
    #allocation2 [shape = 'u8[1024]{0}', space=vmem, size = 0x400, scoped, tag = 'output window, operand 0, single buffered']
    #allocation3 [shape = 's32[1]{0}', space=sflag, size = 0x4, scoped, tag = 'scoped memory for eeg_cnn_lstm_forward.5']
    %14 = vsyncpa [#allocation3], 0
    // Predicated region
    $region2: #{eeg_cnn_lstm_forward.5} parent=1 // pred_check
      _
    $region3: #{eeg_cnn_lstm_forward.5} parent=1 // pred_check_branch
      %16 = sbr.rel (0) target = $region5
    $region4: #{eeg_cnn_lstm_forward.5} parent=1 // pred_region
      _
    $region5: #{eeg_cnn_lstm_forward.5} parent=1 // pred_fallthru
      _
    // Predicated region
    $region6: #{eeg_cnn_lstm_forward.5} parent=1 // pred_check
      _
    $region7: #{eeg_cnn_lstm_forward.5} parent=1 // pred_check_branch
      %18 = sbr.rel (0) target = $region9
    $region8: #{eeg_cnn_lstm_forward.5} parent=1 // pred_region
      _
    $region9: #{eeg_cnn_lstm_forward.5} parent=1 // pred_fallthru
      _
    // Predicated region
    $region10: #{eeg_cnn_lstm_forward.5} parent=1 // pred_check
      _
    $region11: #{eeg_cnn_lstm_forward.5} parent=1 // pred_check_branch
      %20 = sbr.rel (0) target = $region13
    $region12: #{eeg_cnn_lstm_forward.5} parent=1 // pred_region
      _
    $region13: #{eeg_cnn_lstm_forward.5} parent=1 // pred_fallthru
      _
    // Predicated region
    $region14: #{eeg_cnn_lstm_forward.5} parent=1 // pred_check
      _
    $region15: #{eeg_cnn_lstm_forward.5} parent=1 // pred_check_branch
      %22 = sbr.rel (0) target = $region17
    $region16: #{eeg_cnn_lstm_forward.5} parent=1 // pred_region
      _
    $region17: #{eeg_cnn_lstm_forward.5} parent=1 // pred_fallthru
      _
    // Predicated region
    $region18: #{eeg_cnn_lstm_forward.5} parent=1 // pred_check
      _
    $region19: #{eeg_cnn_lstm_forward.5} parent=1 // pred_check_branch
      %24 = sbr.rel (0) target = $region21
    $region20: #{eeg_cnn_lstm_forward.5} parent=1 // pred_region
      _
    $region21: #{eeg_cnn_lstm_forward.5} parent=1 // pred_fallthru
      _
    // Predicated region
    $region22: #{eeg_cnn_lstm_forward.5} parent=1 // pred_check
      _
    $region23: #{eeg_cnn_lstm_forward.5} parent=1 // pred_check_branch
      %26 = sbr.rel (0) target = $region25
    $region24: #{eeg_cnn_lstm_forward.5} parent=1 // pred_region
      _
    $region25: #{eeg_cnn_lstm_forward.5} parent=1 // pred_fallthru
      _
    // Predicated region
    $region26: #{eeg_cnn_lstm_forward.5} parent=1 // pred_check
      _
    $region27: #{eeg_cnn_lstm_forward.5} parent=1 // pred_check_branch
      %28 = sbr.rel (0) target = $region29
    $region28: #{eeg_cnn_lstm_forward.5} parent=1 // pred_region
      _
    $region29: #{eeg_cnn_lstm_forward.5} parent=1 // pred_fallthru
      _
    // Predicated region
    $region30: #{eeg_cnn_lstm_forward.5} parent=1 // pred_check
      _
    $region31: #{eeg_cnn_lstm_forward.5} parent=1 // pred_check_branch
      %30 = sbr.rel (0) target = $region33
    $region32: #{eeg_cnn_lstm_forward.5} parent=1 // pred_region
      _
    $region33: #{eeg_cnn_lstm_forward.5} parent=1 // pred_fallthru
      _
    // Predicated region
    $region34: #{eeg_cnn_lstm_forward.5} parent=1 // pred_check
      _
    $region35: #{eeg_cnn_lstm_forward.5} parent=1 // pred_check_branch
      %32 = sbr.rel (0) target = $region37
    $region36: #{eeg_cnn_lstm_forward.5} parent=1 // pred_region
      _
    $region37: #{eeg_cnn_lstm_forward.5} parent=1 // pred_fallthru
      _
    %v34 = vld [vmem:[%s0] sm:$0xff]
    %v35 = vld [vmem:[%s0 + $0x8] sm:$0xff]
    %v36 = vld [vmem:[%s0 + $0x10] sm:$0xff]
    %v37 = vld [vmem:[%s0 + $0x18] sm:$0xff]
    %v38 = vld [vmem:[%s4] sm:$0xf]
    %v39 = vld [vmem:[%s4 + $0x4] sm:$0xf]
    %v40 = vld [vmem:[%s4 + $0x8] sm:$0xf]
    %v41 = vld [vmem:[%s4 + $0xc] sm:$0xf]
    %v42 = vld [vmem:[%s4 + $0x10] sm:$0xf]
    %v43 = vld [vmem:[%s4 + $0x14] sm:$0xf]
    %v44 = vld [vmem:[%s4 + $0x18] sm:$0xf]
    %v45 = vld [vmem:[%s4 + $0x1c] sm:$0xf]
    %v46 = vld [vmem:[%s4 + $0x20] sm:$0xf]
    %v47 = vld [vmem:[%s4 + $0x24] sm:$0xf]
    %v48 = vld [vmem:[%s4 + $0x28] sm:$0xf]
    %v49 = vld [vmem:[%s4 + $0x2c] sm:$0xf]
    %v50 = vld [vmem:[%s4 + $0x30] sm:$0xf]
    %v51 = vld [vmem:[%s4 + $0x34] sm:$0xf]
    %v52 = vld [vmem:[%s4 + $0x38] sm:$0xf]
    %v53 = vld [vmem:[%s4 + $0x3c] sm:$0xf]
    %v54 = vld [vmem:[%s4 + $0x40] sm:$0xf]
    %v55 = vld [vmem:[%s4 + $0x44] sm:$0xf]
    %v56 = vld [vmem:[%s4 + $0x48] sm:$0xf]
    %v57 = vld [vmem:[%s4 + $0x4c] sm:$0xf]
    %v58 = vld [vmem:[%s4 + $0x50] sm:$0xf]
    %v59 = vld [vmem:[%s4 + $0x54] sm:$0xf]
    %v60 = vld [vmem:[%s4 + $0x58] sm:$0xf]
    %v61 = vld [vmem:[%s4 + $0x5c] sm:$0xf]
    %v62 = vld [vmem:[%s4 + $0x60] sm:$0xf]
    %v63 = vld [vmem:[%s4 + $0x64] sm:$0xf]
    %v64 = vld [vmem:[%s4 + $0x68] sm:$0xf]
    %v65 = vld [vmem:[%s4 + $0x6c] sm:$0xf]
    %v66 = vld [vmem:[%s4 + $0x70] sm:$0xf]
    %v67 = vld [vmem:[%s4 + $0x74] sm:$0xf]
    %v68 = vld [vmem:[%s4 + $0x78] sm:$0xf]
    %v69 = vld [vmem:[%s4 + $0x7c] sm:$0xf]
    %v70 = vld [vmem:[%s5] sm:$0x1]
    %v72 = vlaneseq
    %v73 = vshrl.u32 %v72, 7
    %v74 = vsub.s32 0, %v73
    %v75 = vrot.slane %v70, %v74
    %v78 = vunpack.c.l.b16 %v37
    %v79 = vunpack.c.h.b16 %v37
    %v80 = vpack.c.b16 %v78, %v78
    %v81 = vpack.c.b16 %v79, %v79
    %v82 = vrot.slane %v80, 3
    %v83 = vrot.slane %v81, 3
    %v118 = vunpack.c.l.b16 %v38
    %v119 = vunpack.c.l.b16 %v39
    %v120 = vunpack.c.l.b16 %v40
    %v121 = vunpack.c.l.b16 %v41
    %v122 = vunpack.c.l.b16 %v42
    %v123 = vunpack.c.l.b16 %v43
    %v124 = vunpack.c.l.b16 %v44
    %v125 = vunpack.c.l.b16 %v45
    %v126 = vunpack.c.l.b16 %v46
    %v127 = vunpack.c.l.b16 %v47
    %v128 = vunpack.c.l.b16 %v48
    %v129 = vunpack.c.l.b16 %v49
    %v130 = vunpack.c.l.b16 %v50
    %v131 = vunpack.c.l.b16 %v51
    %v132 = vunpack.c.l.b16 %v52
    %v133 = vunpack.c.l.b16 %v53
    %v134 = vunpack.c.l.b16 %v54
    %v135 = vunpack.c.l.b16 %v55
    %v136 = vunpack.c.l.b16 %v56
    %v137 = vunpack.c.l.b16 %v57
    %v138 = vunpack.c.l.b16 %v58
    %v139 = vunpack.c.l.b16 %v59
    %v140 = vunpack.c.l.b16 %v60
    %v141 = vunpack.c.l.b16 %v61
    %v142 = vunpack.c.l.b16 %v62
    %v143 = vunpack.c.l.b16 %v63
    %v144 = vunpack.c.l.b16 %v64
    %v145 = vunpack.c.l.b16 %v65
    %v146 = vunpack.c.l.b16 %v66
    %v147 = vunpack.c.l.b16 %v67
    %v148 = vunpack.c.l.b16 %v68
    %v149 = vunpack.c.l.b16 %v69
    %v150 = vpack.c.b16 %v119, %v118
    %v151 = vpack.c.b16 %v121, %v120
    %v152 = vpack.c.b16 %v123, %v122
    %v153 = vpack.c.b16 %v125, %v124
    %v154 = vpack.c.b16 %v127, %v126
    %v155 = vpack.c.b16 %v129, %v128
    %v156 = vpack.c.b16 %v131, %v130
    %v157 = vpack.c.b16 %v133, %v132
    %v158 = vpack.c.b16 %v135, %v134
    %v159 = vpack.c.b16 %v137, %v136
    %v160 = vpack.c.b16 %v139, %v138
    %v161 = vpack.c.b16 %v141, %v140
    %v162 = vpack.c.b16 %v143, %v142
    %v163 = vpack.c.b16 %v145, %v144
    %v164 = vpack.c.b16 %v147, %v146
    %v165 = vpack.c.b16 %v149, %v148
    %182 = vmatprep.subr.bf16.mxu0 0
    %183 = vmatpush1.bf16.msra.mxu0 %v150
    %184 = vmatprep.subr.bf16.mxu0 0
    %185 = vmatpush1.bf16.msra.mxu0 %v151
    %186 = vmatprep.subr.bf16.mxu0 0
    %187 = vmatpush1.bf16.msra.mxu0 %v152
    %188 = vmatprep.subr.bf16.mxu0 0
    %189 = vmatpush1.bf16.msra.mxu0 %v153
    %190 = vmatprep.subr.bf16.mxu0 0
    %191 = vmatpush1.bf16.msra.mxu0 %v154
    %192 = vmatprep.subr.bf16.mxu0 0
    %193 = vmatpush1.bf16.msra.mxu0 %v155
    %194 = vmatprep.subr.bf16.mxu0 0
    %195 = vmatpush1.bf16.msra.mxu0 %v156
    %196 = vmatprep.subr.bf16.mxu0 0
    %197 = vmatpush1.bf16.msra.mxu0 %v157
    %198 = vmatprep.subr.bf16.mxu0 0
    %199 = vmatpush1.bf16.msra.mxu0 %v158
    %200 = vmatprep.subr.bf16.mxu0 0
    %201 = vmatpush1.bf16.msra.mxu0 %v159
    %202 = vmatprep.subr.bf16.mxu0 0
    %203 = vmatpush1.bf16.msra.mxu0 %v160
    %204 = vmatprep.subr.bf16.mxu0 0
    %205 = vmatpush1.bf16.msra.mxu0 %v161
    %206 = vmatprep.subr.bf16.mxu0 0
    %207 = vmatpush1.bf16.msra.mxu0 %v162
    %208 = vmatprep.subr.bf16.mxu0 0
    %209 = vmatpush1.bf16.msra.mxu0 %v163
    %210 = vmatprep.subr.bf16.mxu0 0
    %211 = vmatpush1.bf16.msra.mxu0 %v164
    %212 = vmatprep.subr.bf16.mxu0 0
    %213 = vmatpush1.bf16.msra.mxu0 %v165
    %214 = vmatprep.mubr.bf16.mxu0 %v83
    %215 = vmatmul.mubr.bf16.gmra.mrb[0].mxu0 %v82
    %v216 = vpop.f32.mrb[0].mxu0
    %v217 = vadd.f32 %v75, %v216
    %v218 = vpop.f32.mrb[0].mxu0
    %v219 = vpop.f32.mrb[0].mxu0
    %v220 = vpop.f32.mrb[0].mxu0
    %221 = vdwg.mxu0
    %v222 = vxor.u32 %v217, 2147483648
    %v223 = vmul.f32 %v222, 1.442695
    %v224 = vpow.pop %v223
    %v225 = vadd.f32 %v224, 1.0
    %v226 = vrcp.pop %v225
    %v227 = vmul.f32 1.0, %v226
    %v228 = vtanh.pop %v217
    %230 = vrot.lane.b32.xlu0 %v228, 64
    %v231 = vpop.permute.xlu0 %230
    %v233 = vmul.f32 %v227, %v231
    %v234 = vtanh.pop %v233
    %236 = vrot.lane.b32.xlu0 %v234, 96
    %v237 = vpop.permute.xlu0 %236
    %v239 = vmul.f32 %v227, %v237
    %v240 = vpack.c.bf16 %v239, %v239
    %v241 = vld [vmem:[%s7] sm:$0xf]
    %v242 = vld [vmem:[%s7 + $0x4] sm:$0xf]
    %v243 = vld [vmem:[%s7 + $0x8] sm:$0xf]
    %v244 = vld [vmem:[%s7 + $0xc] sm:$0xf]
    %v245 = vld [vmem:[%s8] sm:$0x1]
    %v247 = vlaneseq
    %v248 = vshrl.u32 %v247, 7
    %v249 = vsub.s32 0, %v248
    %v250 = vrot.slane %v245, %v249
    %253 = vrot.lane.b32.xlu0 %v240, 32
    %v254 = vpop.permute.xlu0 %253
    %v259 = vunpack.c.l.b16 %v241
    %v260 = vunpack.c.l.b16 %v242
    %v261 = vunpack.c.l.b16 %v243
    %v262 = vunpack.c.l.b16 %v244
    %v263 = vpack.c.b16 %v260, %v259
    %v264 = vpack.c.b16 %v262, %v261
    %vm267 = vcmask 261120
    %v269 = vsel %vm267, %v254, 0
    %271 = vmatprep.subr.bf16.mxu0 0
    %272 = vmatpush1.bf16.msra.mxu0 %v263
    %273 = vmatprep.subr.bf16.mxu0 0
    %274 = vmatpush1.bf16.msra.mxu0 %v264
    %275 = vmatprep.subr.bf16.mxu0 0
    %276 = vmatpush1.bf16.msra.mxu0 0
    %277 = vmatprep.subr.bf16.mxu0 0
    %278 = vmatpush1.bf16.msra.mxu0 0
    %279 = vmatprep.subr.bf16.mxu0 0
    %280 = vmatpush1.bf16.msra.mxu0 0
    %281 = vmatprep.subr.bf16.mxu0 0
    %282 = vmatpush1.bf16.msra.mxu0 0
    %283 = vmatprep.subr.bf16.mxu0 0
    %284 = vmatpush1.bf16.msra.mxu0 0
    %285 = vmatprep.subr.bf16.mxu0 0
    %286 = vmatpush1.bf16.msra.mxu0 0
    %287 = vmatprep.subr.bf16.mxu0 0
    %288 = vmatpush1.bf16.msra.mxu0 0
    %289 = vmatprep.subr.bf16.mxu0 0
    %290 = vmatpush1.bf16.msra.mxu0 0
    %291 = vmatprep.subr.bf16.mxu0 0
    %292 = vmatpush1.bf16.msra.mxu0 0
    %293 = vmatprep.subr.bf16.mxu0 0
    %294 = vmatpush1.bf16.msra.mxu0 0
    %295 = vmatprep.subr.bf16.mxu0 0
    %296 = vmatpush1.bf16.msra.mxu0 0
    %297 = vmatprep.subr.bf16.mxu0 0
    %298 = vmatpush1.bf16.msra.mxu0 0
    %299 = vmatprep.subr.bf16.mxu0 0
    %300 = vmatpush1.bf16.msra.mxu0 0
    %301 = vmatprep.subr.bf16.mxu0 0
    %302 = vmatpush1.bf16.msra.mxu0 0
    %303 = vmatprep.mubr.bf16.mxu0 0
    %304 = vmatmul.mubr.bf16.gmra.mrb[0].mxu0 %v269
    %v305 = vpop.f32.mrb[0].mxu0
    %v306 = vadd.f32 %v250, %v305
    %v307 = vpop.f32.mrb[0].mxu0
    %v308 = vpop.f32.mrb[0].mxu0
    %v309 = vpop.f32.mrb[0].mxu0
    %310 = vdwg.mxu0
    %v311 = vld [vmem:[%s1] sm:$0xf]
    %v312 = vld [vmem:[%s1 + $0x4] sm:$0xf]
    %v313 = vld [vmem:[%s1 + $0x8] sm:$0xf]
    %v314 = vld [vmem:[%s1 + $0xc] sm:$0xf]
    %v315 = vld [vmem:[%s1 + $0x10] sm:$0xf]
    %v316 = vld [vmem:[%s1 + $0x14] sm:$0xf]
    %v317 = vld [vmem:[%s1 + $0x18] sm:$0xf]
    %v318 = vld [vmem:[%s1 + $0x1c] sm:$0xf]
    %v319 = vld [vmem:[%s1 + $0x20] sm:$0xf]
    %v320 = vld [vmem:[%s1 + $0x24] sm:$0xf]
    %v321 = vld [vmem:[%s1 + $0x28] sm:$0xf]
    %v322 = vld [vmem:[%s1 + $0x2c] sm:$0xf]
    %v323 = vld [vmem:[%s1 + $0x30] sm:$0xf]
    %v324 = vld [vmem:[%s1 + $0x34] sm:$0xf]
    %v325 = vld [vmem:[%s1 + $0x38] sm:$0xf]
    %v326 = vld [vmem:[%s1 + $0x3c] sm:$0xf]
    %v327 = vld [vmem:[%s1 + $0x40] sm:$0xf]
    %v328 = vld [vmem:[%s1 + $0x44] sm:$0xf]
    %v329 = vld [vmem:[%s1 + $0x48] sm:$0xf]
    %v330 = vld [vmem:[%s1 + $0x4c] sm:$0xf]
    %v331 = vld [vmem:[%s1 + $0x50] sm:$0xf]
    %v332 = vld [vmem:[%s1 + $0x54] sm:$0xf]
    %v333 = vld [vmem:[%s1 + $0x58] sm:$0xf]
    %v334 = vld [vmem:[%s1 + $0x5c] sm:$0xf]
    %v335 = vld [vmem:[%s1 + $0x60] sm:$0xf]
    %v336 = vld [vmem:[%s1 + $0x64] sm:$0xf]
    %v337 = vld [vmem:[%s1 + $0x68] sm:$0xf]
    %v338 = vld [vmem:[%s1 + $0x6c] sm:$0xf]
    %v339 = vld [vmem:[%s1 + $0x70] sm:$0xf]
    %v340 = vld [vmem:[%s1 + $0x74] sm:$0xf]
    %v341 = vld [vmem:[%s1 + $0x78] sm:$0xf]
    %v342 = vld [vmem:[%s1 + $0x7c] sm:$0xf]
    %v343 = vld [vmem:[%s3] sm:$0x1]
    %v345 = vlaneseq
    %v346 = vshrl.u32 %v345, 7
    %v347 = vsub.s32 0, %v346
    %v348 = vrot.slane %v343, %v347
    %v353 = vunpack.c.l.b16 %v34
    %v354 = vunpack.c.h.b16 %v34
    %v355 = vunpack.c.l.b16 %v35
    %v356 = vunpack.c.h.b16 %v35
    %v357 = vunpack.c.l.b16 %v36
    %v358 = vunpack.c.h.b16 %v36
    %v359 = vpack.c.b16 %v355, %v353
    %v360 = vpack.c.b16 %v356, %v354
    %v361 = vpack.c.b16 %v78, %v357
    %v362 = vpack.c.b16 %v79, %v358
    %v399 = vunpack.c.l.b16 %v311
    %v400 = vunpack.c.l.b16 %v312
    %v401 = vunpack.c.l.b16 %v313
    %v402 = vunpack.c.l.b16 %v314
    %v403 = vunpack.c.l.b16 %v315
    %v404 = vunpack.c.l.b16 %v316
    %v405 = vunpack.c.l.b16 %v317
    %v406 = vunpack.c.l.b16 %v318
    %v407 = vunpack.c.l.b16 %v319
    %v408 = vunpack.c.l.b16 %v320
    %v409 = vunpack.c.l.b16 %v321
    %v410 = vunpack.c.l.b16 %v322
    %v411 = vunpack.c.l.b16 %v323
    %v412 = vunpack.c.l.b16 %v324
    %v413 = vunpack.c.l.b16 %v325
    %v414 = vunpack.c.l.b16 %v326
    %v415 = vunpack.c.l.b16 %v327
    %v416 = vunpack.c.l.b16 %v328
    %v417 = vunpack.c.l.b16 %v329
    %v418 = vunpack.c.l.b16 %v330
    %v419 = vunpack.c.l.b16 %v331
    %v420 = vunpack.c.l.b16 %v332
    %v421 = vunpack.c.l.b16 %v333
    %v422 = vunpack.c.l.b16 %v334
    %v423 = vunpack.c.l.b16 %v335
    %v424 = vunpack.c.l.b16 %v336
    %v425 = vunpack.c.l.b16 %v337
    %v426 = vunpack.c.l.b16 %v338
    %v427 = vunpack.c.l.b16 %v339
    %v428 = vunpack.c.l.b16 %v340
    %v429 = vunpack.c.l.b16 %v341
    %v430 = vunpack.c.l.b16 %v342
    %v431 = vpack.c.b16 %v400, %v399
    %v432 = vpack.c.b16 %v402, %v401
    %v433 = vpack.c.b16 %v404, %v403
    %v434 = vpack.c.b16 %v406, %v405
    %v435 = vpack.c.b16 %v408, %v407
    %v436 = vpack.c.b16 %v410, %v409
    %v437 = vpack.c.b16 %v412, %v411
    %v438 = vpack.c.b16 %v414, %v413
    %v439 = vpack.c.b16 %v416, %v415
    %v440 = vpack.c.b16 %v418, %v417
    %v441 = vpack.c.b16 %v420, %v419
    %v442 = vpack.c.b16 %v422, %v421
    %v443 = vpack.c.b16 %v424, %v423
    %v444 = vpack.c.b16 %v426, %v425
    %v445 = vpack.c.b16 %v428, %v427
    %v446 = vpack.c.b16 %v430, %v429
    %463 = vmatprep.subr.bf16.mxu0 0
    %464 = vmatpush1.bf16.msra.mxu0 %v431
    %465 = vmatprep.subr.bf16.mxu0 0
    %466 = vmatpush1.bf16.msra.mxu0 %v432
    %467 = vmatprep.subr.bf16.mxu0 0
    %468 = vmatpush1.bf16.msra.mxu0 %v433
    %469 = vmatprep.subr.bf16.mxu0 0
    %470 = vmatpush1.bf16.msra.mxu0 %v434
    %471 = vmatprep.subr.bf16.mxu0 0
    %472 = vmatpush1.bf16.msra.mxu0 %v435
    %473 = vmatprep.subr.bf16.mxu0 0
    %474 = vmatpush1.bf16.msra.mxu0 %v436
    %475 = vmatprep.subr.bf16.mxu0 0
    %476 = vmatpush1.bf16.msra.mxu0 %v437
    %477 = vmatprep.subr.bf16.mxu0 0
    %478 = vmatpush1.bf16.msra.mxu0 %v438
    %479 = vmatprep.subr.bf16.mxu0 0
    %480 = vmatpush1.bf16.msra.mxu0 %v439
    %481 = vmatprep.subr.bf16.mxu0 0
    %482 = vmatpush1.bf16.msra.mxu0 %v440
    %483 = vmatprep.subr.bf16.mxu0 0
    %484 = vmatpush1.bf16.msra.mxu0 %v441
    %485 = vmatprep.subr.bf16.mxu0 0
    %486 = vmatpush1.bf16.msra.mxu0 %v442
    %487 = vmatprep.subr.bf16.mxu0 0
    %488 = vmatpush1.bf16.msra.mxu0 %v443
    %489 = vmatprep.subr.bf16.mxu0 0
    %490 = vmatpush1.bf16.msra.mxu0 %v444
    %491 = vmatprep.subr.bf16.mxu0 0
    %492 = vmatpush1.bf16.msra.mxu0 %v445
    %493 = vmatprep.subr.bf16.mxu0 0
    %494 = vmatpush1.bf16.msra.mxu0 %v446
    %495 = vmatprep.mubr.bf16.mxu0 %v360
    %496 = vmatmul.mubr.bf16.gmra.mrb[0].mxu0 %v359
    %v497 = vpop.f32.mrb[0].mxu0
    %v498 = vadd.f32 %v348, %v497
    %v499 = vpop.f32.mrb[0].mxu0
    %v500 = vpop.f32.mrb[0].mxu0
    %v501 = vadd.f32 %v348, %v500
    %v502 = vpop.f32.mrb[0].mxu0
    %503 = vmatprep.mubr.bf16.mxu0 %v362
    %504 = vmatmul.mubr.bf16.gmra.mrb[0].mxu0 %v361
    %v505 = vpop.f32.mrb[0].mxu0
    %v506 = vadd.f32 %v348, %v505
    %v507 = vpop.f32.mrb[0].mxu0
    %v508 = vpop.f32.mrb[0].mxu0
    %v509 = vadd.f32 %v348, %v508
    %v510 = vpop.f32.mrb[0].mxu0
    %511 = vdwg.mxu0
    %v512 = vld [vmem:[%s2] sm:$0xf]
    %v513 = vld [vmem:[%s2 + $0x4] sm:$0xf]
    %v514 = vld [vmem:[%s2 + $0x8] sm:$0xf]
    %v515 = vld [vmem:[%s2 + $0xc] sm:$0xf]
    %v520 = vunpack.c.l.b16 %v512
    %v521 = vunpack.c.l.b16 %v513
    %v522 = vunpack.c.l.b16 %v514
    %v523 = vunpack.c.l.b16 %v515
    %v524 = vpack.c.b16 %v521, %v520
    %v525 = vpack.c.b16 %v523, %v522
    %v529 = vsel %vm267, 0, 0
    %531 = vmatprep.subr.bf16.mxu0 0
    %532 = vmatpush1.bf16.msra.mxu0 %v524
    %533 = vmatprep.subr.bf16.mxu0 0
    %534 = vmatpush1.bf16.msra.mxu0 %v525
    %535 = vmatprep.subr.bf16.mxu0 0
    %536 = vmatpush1.bf16.msra.mxu0 0
    %537 = vmatprep.subr.bf16.mxu0 0
    %538 = vmatpush1.bf16.msra.mxu0 0
    %539 = vmatprep.subr.bf16.mxu0 0
    %540 = vmatpush1.bf16.msra.mxu0 0
    %541 = vmatprep.subr.bf16.mxu0 0
    %542 = vmatpush1.bf16.msra.mxu0 0
    %543 = vmatprep.subr.bf16.mxu0 0
    %544 = vmatpush1.bf16.msra.mxu0 0
    %545 = vmatprep.subr.bf16.mxu0 0
    %546 = vmatpush1.bf16.msra.mxu0 0
    %547 = vmatprep.subr.bf16.mxu0 0
    %548 = vmatpush1.bf16.msra.mxu0 0
    %549 = vmatprep.subr.bf16.mxu0 0
    %550 = vmatpush1.bf16.msra.mxu0 0
    %551 = vmatprep.subr.bf16.mxu0 0
    %552 = vmatpush1.bf16.msra.mxu0 0
    %553 = vmatprep.subr.bf16.mxu0 0
    %554 = vmatpush1.bf16.msra.mxu0 0
    %555 = vmatprep.subr.bf16.mxu0 0
    %556 = vmatpush1.bf16.msra.mxu0 0
    %557 = vmatprep.subr.bf16.mxu0 0
    %558 = vmatpush1.bf16.msra.mxu0 0
    %559 = vmatprep.subr.bf16.mxu0 0
    %560 = vmatpush1.bf16.msra.mxu0 0
    %561 = vmatprep.subr.bf16.mxu0 0
    %562 = vmatpush1.bf16.msra.mxu0 0
    %563 = vmatprep.mubr.bf16.mxu0 0
    %564 = vmatmul.mubr.bf16.gmra.mrb[0].mxu0 %v529
    %v565 = vpop.f32.mrb[0].mxu0
    %v566 = vadd.f32 0.0, %v565
    %v567 = vpop.f32.mrb[0].mxu0
    %v568 = vpop.f32.mrb[0].mxu0
    %v569 = vpop.f32.mrb[0].mxu0
    %570 = vdwg.mxu0
    %v571 = vadd.f32 %v498, %v566
    %v572 = vxor.u32 %v571, 2147483648
    %v573 = vmul.f32 %v572, 1.442695
    %v574 = vpow.pop %v573
    %v575 = vadd.f32 %v574, 1.0
    %v576 = vrcp.pop %v575
    %v577 = vmul.f32 1.0, %v576
    %v578 = vtanh.pop %v571
    %v579 = vmul.f32 %v577, 0.0
    %581 = vrot.lane.b32.xlu0 %v578, 64
    %v582 = vpop.permute.xlu0 %581
    %v584 = vmul.f32 %v577, %v582
    %586 = vrot.lane.b32.xlu0 %v584, 32
    %v587 = vpop.permute.xlu0 %586
    %v589 = vadd.f32 %v579, %v587
    %v590 = vtanh.pop %v589
    %592 = vrot.lane.b32.xlu0 %v590, 64
    %v593 = vpop.permute.xlu0 %592
    %v595 = vmul.f32 %v577, %v593
    %v596 = vpack.c.bf16 %v595, %v595
    %598 = vrot.lane.b32.xlu0 %v596, 32
    %v599 = vpop.permute.xlu0 %598
    %v601 = vsel %vm267, %v599, 0
    %603 = vmatprep.subr.bf16.mxu0 0
    %604 = vmatpush1.bf16.msra.mxu0 %v524
    %605 = vmatprep.subr.bf16.mxu0 0
    %606 = vmatpush1.bf16.msra.mxu0 %v525
    %607 = vmatprep.subr.bf16.mxu0 0
    %608 = vmatpush1.bf16.msra.mxu0 0
    %609 = vmatprep.subr.bf16.mxu0 0
    %610 = vmatpush1.bf16.msra.mxu0 0
    %611 = vmatprep.subr.bf16.mxu0 0
    %612 = vmatpush1.bf16.msra.mxu0 0
    %613 = vmatprep.subr.bf16.mxu0 0
    %614 = vmatpush1.bf16.msra.mxu0 0
    %615 = vmatprep.subr.bf16.mxu0 0
    %616 = vmatpush1.bf16.msra.mxu0 0
    %617 = vmatprep.subr.bf16.mxu0 0
    %618 = vmatpush1.bf16.msra.mxu0 0
    %619 = vmatprep.subr.bf16.mxu0 0
    %620 = vmatpush1.bf16.msra.mxu0 0
    %621 = vmatprep.subr.bf16.mxu0 0
    %622 = vmatpush1.bf16.msra.mxu0 0
    %623 = vmatprep.subr.bf16.mxu0 0
    %624 = vmatpush1.bf16.msra.mxu0 0
    %625 = vmatprep.subr.bf16.mxu0 0
    %626 = vmatpush1.bf16.msra.mxu0 0
    %627 = vmatprep.subr.bf16.mxu0 0
    %628 = vmatpush1.bf16.msra.mxu0 0
    %629 = vmatprep.subr.bf16.mxu0 0
    %630 = vmatpush1.bf16.msra.mxu0 0
    %631 = vmatprep.subr.bf16.mxu0 0
    %632 = vmatpush1.bf16.msra.mxu0 0
    %633 = vmatprep.subr.bf16.mxu0 0
    %634 = vmatpush1.bf16.msra.mxu0 0
    %635 = vmatprep.mubr.bf16.mxu0 0
    %636 = vmatmul.mubr.bf16.gmra.mrb[0].mxu0 %v601
    %v637 = vpop.f32.mrb[0].mxu0
    %v638 = vadd.f32 0.0, %v637
    %v639 = vpop.f32.mrb[0].mxu0
    %v640 = vpop.f32.mrb[0].mxu0
    %v641 = vpop.f32.mrb[0].mxu0
    %642 = vdwg.mxu0
    %v644 = vrot.slane %v638, 6
    %v646 = vadd.f32 %v498, %v644
    %v647 = vxor.u32 %v646, 2147483648
    %v648 = vmul.f32 %v647, 1.442695
    %v649 = vpow.pop %v648
    %v650 = vadd.f32 %v649, 1.0
    %v651 = vrcp.pop %v650
    %v652 = vmul.f32 1.0, %v651
    %v653 = vtanh.pop %v646
    %v655 = vrot.slane %v589, 6
    %v657 = vmul.f32 %v652, %v655
    %659 = vrot.lane.b32.xlu0 %v653, 64
    %v660 = vpop.permute.xlu0 %659
    %v662 = vmul.f32 %v652, %v660
    %664 = vrot.lane.b32.xlu0 %v662, 32
    %v665 = vpop.permute.xlu0 %664
    %v667 = vadd.f32 %v657, %v665
    %v668 = vtanh.pop %v667
    %670 = vrot.lane.b32.xlu0 %v668, 64
    %v671 = vpop.permute.xlu0 %670
    %v673 = vmul.f32 %v652, %v671
    %v674 = vpack.c.bf16 %v673, %v673
    %v676 = vrot.slane %v674, 1
    %677 = vrot.lane.b32.xlu0 %v676, 32
    %v678 = vpop.permute.xlu0 %677
    %v680 = vsel %vm267, %v678, 0
    %682 = vmatprep.subr.bf16.mxu0 0
    %683 = vmatpush1.bf16.msra.mxu0 %v524
    %684 = vmatprep.subr.bf16.mxu0 0
    %685 = vmatpush1.bf16.msra.mxu0 %v525
    %686 = vmatprep.subr.bf16.mxu0 0
    %687 = vmatpush1.bf16.msra.mxu0 0
    %688 = vmatprep.subr.bf16.mxu0 0
    %689 = vmatpush1.bf16.msra.mxu0 0
    %690 = vmatprep.subr.bf16.mxu0 0
    %691 = vmatpush1.bf16.msra.mxu0 0
    %692 = vmatprep.subr.bf16.mxu0 0
    %693 = vmatpush1.bf16.msra.mxu0 0
    %694 = vmatprep.subr.bf16.mxu0 0
    %695 = vmatpush1.bf16.msra.mxu0 0
    %696 = vmatprep.subr.bf16.mxu0 0
    %697 = vmatpush1.bf16.msra.mxu0 0
    %698 = vmatprep.subr.bf16.mxu0 0
    %699 = vmatpush1.bf16.msra.mxu0 0
    %700 = vmatprep.subr.bf16.mxu0 0
    %701 = vmatpush1.bf16.msra.mxu0 0
    %702 = vmatprep.subr.bf16.mxu0 0
    %703 = vmatpush1.bf16.msra.mxu0 0
    %704 = vmatprep.subr.bf16.mxu0 0
    %705 = vmatpush1.bf16.msra.mxu0 0
    %706 = vmatprep.subr.bf16.mxu0 0
    %707 = vmatpush1.bf16.msra.mxu0 0
    %708 = vmatprep.subr.bf16.mxu0 0
    %709 = vmatpush1.bf16.msra.mxu0 0
    %710 = vmatprep.subr.bf16.mxu0 0
    %711 = vmatpush1.bf16.msra.mxu0 0
    %712 = vmatprep.subr.bf16.mxu0 0
    %713 = vmatpush1.bf16.msra.mxu0 0
    %714 = vmatprep.mubr.bf16.mxu0 0
    %715 = vmatmul.mubr.bf16.gmra.mrb[0].mxu0 %v680
    %v716 = vpop.f32.mrb[0].mxu0
    %v717 = vadd.f32 0.0, %v716
    %v718 = vpop.f32.mrb[0].mxu0
    %v719 = vpop.f32.mrb[0].mxu0
    %v720 = vpop.f32.mrb[0].mxu0
    %721 = vdwg.mxu0
    %v723 = vrot.slane %v717, 4
    %v725 = vadd.f32 %v498, %v723
    %v726 = vxor.u32 %v725, 2147483648
    %v727 = vmul.f32 %v726, 1.442695
    %v728 = vpow.pop %v727
    %v729 = vadd.f32 %v728, 1.0
    %v730 = vrcp.pop %v729
    %v731 = vmul.f32 1.0, %v730
    %v732 = vtanh.pop %v725
    %v734 = vrot.slane %v667, 6
    %v736 = vmul.f32 %v731, %v734
    %738 = vrot.lane.b32.xlu0 %v732, 64
    %v739 = vpop.permute.xlu0 %738
    %v741 = vmul.f32 %v731, %v739
    %743 = vrot.lane.b32.xlu0 %v741, 32
    %v744 = vpop.permute.xlu0 %743
    %v746 = vadd.f32 %v736, %v744
    %v747 = vtanh.pop %v746
    %749 = vrot.lane.b32.xlu0 %v747, 64
    %v750 = vpop.permute.xlu0 %749
    %v752 = vmul.f32 %v731, %v750
    %v753 = vpack.c.bf16 %v752, %v752
    %v755 = vrot.slane %v753, 2
    %756 = vrot.lane.b32.xlu0 %v755, 32
    %v757 = vpop.permute.xlu0 %756
    %v759 = vsel %vm267, %v757, 0
    %761 = vmatprep.subr.bf16.mxu0 0
    %762 = vmatpush1.bf16.msra.mxu0 %v524
    %763 = vmatprep.subr.bf16.mxu0 0
    %764 = vmatpush1.bf16.msra.mxu0 %v525
    %765 = vmatprep.subr.bf16.mxu0 0
    %766 = vmatpush1.bf16.msra.mxu0 0
    %767 = vmatprep.subr.bf16.mxu0 0
    %768 = vmatpush1.bf16.msra.mxu0 0
    %769 = vmatprep.subr.bf16.mxu0 0
    %770 = vmatpush1.bf16.msra.mxu0 0
    %771 = vmatprep.subr.bf16.mxu0 0
    %772 = vmatpush1.bf16.msra.mxu0 0
    %773 = vmatprep.subr.bf16.mxu0 0
    %774 = vmatpush1.bf16.msra.mxu0 0
    %775 = vmatprep.subr.bf16.mxu0 0
    %776 = vmatpush1.bf16.msra.mxu0 0
    %777 = vmatprep.subr.bf16.mxu0 0
    %778 = vmatpush1.bf16.msra.mxu0 0
    %779 = vmatprep.subr.bf16.mxu0 0
    %780 = vmatpush1.bf16.msra.mxu0 0
    %781 = vmatprep.subr.bf16.mxu0 0
    %782 = vmatpush1.bf16.msra.mxu0 0
    %783 = vmatprep.subr.bf16.mxu0 0
    %784 = vmatpush1.bf16.msra.mxu0 0
    %785 = vmatprep.subr.bf16.mxu0 0
    %786 = vmatpush1.bf16.msra.mxu0 0
    %787 = vmatprep.subr.bf16.mxu0 0
    %788 = vmatpush1.bf16.msra.mxu0 0
    %789 = vmatprep.subr.bf16.mxu0 0
    %790 = vmatpush1.bf16.msra.mxu0 0
    %791 = vmatprep.subr.bf16.mxu0 0
    %792 = vmatpush1.bf16.msra.mxu0 0
    %793 = vmatprep.mubr.bf16.mxu0 0
    %794 = vmatmul.mubr.bf16.gmra.mrb[0].mxu0 %v759
    %v795 = vpop.f32.mrb[0].mxu0
    %v796 = vadd.f32 0.0, %v795
    %v797 = vpop.f32.mrb[0].mxu0
    %v798 = vpop.f32.mrb[0].mxu0
    %v799 = vpop.f32.mrb[0].mxu0
    %800 = vdwg.mxu0
    %v802 = vrot.slane %v796, 2
    %v804 = vadd.f32 %v498, %v802
    %v805 = vxor.u32 %v804, 2147483648
    %v806 = vmul.f32 %v805, 1.442695
    %v807 = vpow.pop %v806
    %v808 = vadd.f32 %v807, 1.0
    %v809 = vrcp.pop %v808
    %v810 = vmul.f32 1.0, %v809
    %v811 = vtanh.pop %v804
    %v813 = vrot.slane %v746, 6
    %v815 = vmul.f32 %v810, %v813
    %817 = vrot.lane.b32.xlu0 %v811, 64
    %v818 = vpop.permute.xlu0 %817
    %v820 = vmul.f32 %v810, %v818
    %822 = vrot.lane.b32.xlu0 %v820, 32
    %v823 = vpop.permute.xlu0 %822
    %v825 = vadd.f32 %v815, %v823
    %v826 = vtanh.pop %v825
    %828 = vrot.lane.b32.xlu0 %v826, 64
    %v829 = vpop.permute.xlu0 %828
    %v831 = vmul.f32 %v810, %v829
    %v832 = vpack.c.bf16 %v831, %v831
    %v834 = vrot.slane %v832, 3
    %835 = vrot.lane.b32.xlu0 %v834, 32
    %v836 = vpop.permute.xlu0 %835
    %v838 = vsel %vm267, %v836, 0
    %840 = vmatprep.subr.bf16.mxu0 0
    %841 = vmatpush1.bf16.msra.mxu0 %v524
    %842 = vmatprep.subr.bf16.mxu0 0
    %843 = vmatpush1.bf16.msra.mxu0 %v525
    %844 = vmatprep.subr.bf16.mxu0 0
    %845 = vmatpush1.bf16.msra.mxu0 0
    %846 = vmatprep.subr.bf16.mxu0 0
    %847 = vmatpush1.bf16.msra.mxu0 0
    %848 = vmatprep.subr.bf16.mxu0 0
    %849 = vmatpush1.bf16.msra.mxu0 0
    %850 = vmatprep.subr.bf16.mxu0 0
    %851 = vmatpush1.bf16.msra.mxu0 0
    %852 = vmatprep.subr.bf16.mxu0 0
    %853 = vmatpush1.bf16.msra.mxu0 0
    %854 = vmatprep.subr.bf16.mxu0 0
    %855 = vmatpush1.bf16.msra.mxu0 0
    %856 = vmatprep.subr.bf16.mxu0 0
    %857 = vmatpush1.bf16.msra.mxu0 0
    %858 = vmatprep.subr.bf16.mxu0 0
    %859 = vmatpush1.bf16.msra.mxu0 0
    %860 = vmatprep.subr.bf16.mxu0 0
    %861 = vmatpush1.bf16.msra.mxu0 0
    %862 = vmatprep.subr.bf16.mxu0 0
    %863 = vmatpush1.bf16.msra.mxu0 0
    %864 = vmatprep.subr.bf16.mxu0 0
    %865 = vmatpush1.bf16.msra.mxu0 0
    %866 = vmatprep.subr.bf16.mxu0 0
    %867 = vmatpush1.bf16.msra.mxu0 0
    %868 = vmatprep.subr.bf16.mxu0 0
    %869 = vmatpush1.bf16.msra.mxu0 0
    %870 = vmatprep.subr.bf16.mxu0 0
    %871 = vmatpush1.bf16.msra.mxu0 0
    %872 = vmatprep.mubr.bf16.mxu0 0
    %873 = vmatmul.mubr.bf16.gmra.mrb[0].mxu0 %v838
    %v874 = vpop.f32.mrb[0].mxu0
    %v875 = vadd.f32 0.0, %v874
    %v876 = vpop.f32.mrb[0].mxu0
    %v877 = vpop.f32.mrb[0].mxu0
    %v878 = vpop.f32.mrb[0].mxu0
    %879 = vdwg.mxu0
    %v880 = vadd.f32 %v501, %v875
    %v881 = vxor.u32 %v880, 2147483648
    %v882 = vmul.f32 %v881, 1.442695
    %v883 = vpow.pop %v882
    %v884 = vadd.f32 %v883, 1.0
    %v885 = vrcp.pop %v884
    %v886 = vmul.f32 1.0, %v885
    %v887 = vtanh.pop %v880
    %v889 = vrot.slane %v825, 6
    %v891 = vmul.f32 %v886, %v889
    %893 = vrot.lane.b32.xlu0 %v887, 64
    %v894 = vpop.permute.xlu0 %893
    %v896 = vmul.f32 %v886, %v894
    %898 = vrot.lane.b32.xlu0 %v896, 32
    %v899 = vpop.permute.xlu0 %898
    %v901 = vadd.f32 %v891, %v899
    %v902 = vtanh.pop %v901
    %904 = vrot.lane.b32.xlu0 %v902, 64
    %v905 = vpop.permute.xlu0 %904
    %v907 = vmul.f32 %v886, %v905
    %v908 = vpack.c.bf16 %v907, %v907
    %910 = vrot.lane.b32.xlu0 %v908, 32
    %v911 = vpop.permute.xlu0 %910
    %v913 = vsel %vm267, %v911, 0
    %915 = vmatprep.subr.bf16.mxu0 0
    %916 = vmatpush1.bf16.msra.mxu0 %v524
    %917 = vmatprep.subr.bf16.mxu0 0
    %918 = vmatpush1.bf16.msra.mxu0 %v525
    %919 = vmatprep.subr.bf16.mxu0 0
    %920 = vmatpush1.bf16.msra.mxu0 0
    %921 = vmatprep.subr.bf16.mxu0 0
    %922 = vmatpush1.bf16.msra.mxu0 0
    %923 = vmatprep.subr.bf16.mxu0 0
    %924 = vmatpush1.bf16.msra.mxu0 0
    %925 = vmatprep.subr.bf16.mxu0 0
    %926 = vmatpush1.bf16.msra.mxu0 0
    %927 = vmatprep.subr.bf16.mxu0 0
    %928 = vmatpush1.bf16.msra.mxu0 0
    %929 = vmatprep.subr.bf16.mxu0 0
    %930 = vmatpush1.bf16.msra.mxu0 0
    %931 = vmatprep.subr.bf16.mxu0 0
    %932 = vmatpush1.bf16.msra.mxu0 0
    %933 = vmatprep.subr.bf16.mxu0 0
    %934 = vmatpush1.bf16.msra.mxu0 0
    %935 = vmatprep.subr.bf16.mxu0 0
    %936 = vmatpush1.bf16.msra.mxu0 0
    %937 = vmatprep.subr.bf16.mxu0 0
    %938 = vmatpush1.bf16.msra.mxu0 0
    %939 = vmatprep.subr.bf16.mxu0 0
    %940 = vmatpush1.bf16.msra.mxu0 0
    %941 = vmatprep.subr.bf16.mxu0 0
    %942 = vmatpush1.bf16.msra.mxu0 0
    %943 = vmatprep.subr.bf16.mxu0 0
    %944 = vmatpush1.bf16.msra.mxu0 0
    %945 = vmatprep.subr.bf16.mxu0 0
    %946 = vmatpush1.bf16.msra.mxu0 0
    %947 = vmatprep.mubr.bf16.mxu0 0
    %948 = vmatmul.mubr.bf16.gmra.mrb[0].mxu0 %v913
    %v949 = vpop.f32.mrb[0].mxu0
    %v950 = vadd.f32 0.0, %v949
    %v951 = vpop.f32.mrb[0].mxu0
    %v952 = vpop.f32.mrb[0].mxu0
    %v953 = vpop.f32.mrb[0].mxu0
    %954 = vdwg.mxu0
    %v956 = vrot.slane %v950, 6
    %v958 = vadd.f32 %v501, %v956
    %v959 = vxor.u32 %v958, 2147483648
    %v960 = vmul.f32 %v959, 1.442695
    %v961 = vpow.pop %v960
    %v962 = vadd.f32 %v961, 1.0
    %v963 = vrcp.pop %v962
    %v964 = vmul.f32 1.0, %v963
    %v965 = vtanh.pop %v958
    %v967 = vrot.slane %v901, 6
    %v969 = vmul.f32 %v964, %v967
    %971 = vrot.lane.b32.xlu0 %v965, 64
    %v972 = vpop.permute.xlu0 %971
    %v974 = vmul.f32 %v964, %v972
    %976 = vrot.lane.b32.xlu0 %v974, 32
    %v977 = vpop.permute.xlu0 %976
    %v979 = vadd.f32 %v969, %v977
    %v980 = vtanh.pop %v979
    %982 = vrot.lane.b32.xlu0 %v980, 64
    %v983 = vpop.permute.xlu0 %982
    %v985 = vmul.f32 %v964, %v983
    %v986 = vpack.c.bf16 %v985, %v985
    %v988 = vrot.slane %v986, 1
    %989 = vrot.lane.b32.xlu0 %v988, 32
    %v990 = vpop.permute.xlu0 %989
    %v992 = vsel %vm267, %v990, 0
    %994 = vmatprep.subr.bf16.mxu0 0
    %995 = vmatpush1.bf16.msra.mxu0 %v524
    %996 = vmatprep.subr.bf16.mxu0 0
    %997 = vmatpush1.bf16.msra.mxu0 %v525
    %998 = vmatprep.subr.bf16.mxu0 0
    %999 = vmatpush1.bf16.msra.mxu0 0
    %1000 = vmatprep.subr.bf16.mxu0 0
    %1001 = vmatpush1.bf16.msra.mxu0 0
    %1002 = vmatprep.subr.bf16.mxu0 0
    %1003 = vmatpush1.bf16.msra.mxu0 0
    %1004 = vmatprep.subr.bf16.mxu0 0
    %1005 = vmatpush1.bf16.msra.mxu0 0
    %1006 = vmatprep.subr.bf16.mxu0 0
    %1007 = vmatpush1.bf16.msra.mxu0 0
    %1008 = vmatprep.subr.bf16.mxu0 0
    %1009 = vmatpush1.bf16.msra.mxu0 0
    %1010 = vmatprep.subr.bf16.mxu0 0
    %1011 = vmatpush1.bf16.msra.mxu0 0
    %1012 = vmatprep.subr.bf16.mxu0 0
    %1013 = vmatpush1.bf16.msra.mxu0 0
    %1014 = vmatprep.subr.bf16.mxu0 0
    %1015 = vmatpush1.bf16.msra.mxu0 0
    %1016 = vmatprep.subr.bf16.mxu0 0
    %1017 = vmatpush1.bf16.msra.mxu0 0
    %1018 = vmatprep.subr.bf16.mxu0 0
    %1019 = vmatpush1.bf16.msra.mxu0 0
    %1020 = vmatprep.subr.bf16.mxu0 0
    %1021 = vmatpush1.bf16.msra.mxu0 0
    %1022 = vmatprep.subr.bf16.mxu0 0
    %1023 = vmatpush1.bf16.msra.mxu0 0
    %1024 = vmatprep.subr.bf16.mxu0 0
    %1025 = vmatpush1.bf16.msra.mxu0 0
    %1026 = vmatprep.mubr.bf16.mxu0 0
    %1027 = vmatmul.mubr.bf16.gmra.mrb[0].mxu0 %v992
    %v1028 = vpop.f32.mrb[0].mxu0
    %v1029 = vadd.f32 0.0, %v1028
    %v1030 = vpop.f32.mrb[0].mxu0
    %v1031 = vpop.f32.mrb[0].mxu0
    %v1032 = vpop.f32.mrb[0].mxu0
    %1033 = vdwg.mxu0
    %v1035 = vrot.slane %v1029, 4
    %v1037 = vadd.f32 %v501, %v1035
    %v1038 = vxor.u32 %v1037, 2147483648
    %v1039 = vmul.f32 %v1038, 1.442695
    %v1040 = vpow.pop %v1039
    %v1041 = vadd.f32 %v1040, 1.0
    %v1042 = vrcp.pop %v1041
    %v1043 = vmul.f32 1.0, %v1042
    %v1044 = vtanh.pop %v1037
    %v1046 = vrot.slane %v979, 6
    %v1048 = vmul.f32 %v1043, %v1046
    %1050 = vrot.lane.b32.xlu0 %v1044, 64
    %v1051 = vpop.permute.xlu0 %1050
    %v1053 = vmul.f32 %v1043, %v1051
    %1055 = vrot.lane.b32.xlu0 %v1053, 32
    %v1056 = vpop.permute.xlu0 %1055
    %v1058 = vadd.f32 %v1048, %v1056
    %v1059 = vtanh.pop %v1058
    %1061 = vrot.lane.b32.xlu0 %v1059, 64
    %v1062 = vpop.permute.xlu0 %1061
    %v1064 = vmul.f32 %v1043, %v1062
    %v1065 = vpack.c.bf16 %v1064, %v1064
    %v1067 = vrot.slane %v1065, 2
    %1068 = vrot.lane.b32.xlu0 %v1067, 32
    %v1069 = vpop.permute.xlu0 %1068
    %v1071 = vsel %vm267, %v1069, 0
    %1073 = vmatprep.subr.bf16.mxu0 0
    %1074 = vmatpush1.bf16.msra.mxu0 %v524
    %1075 = vmatprep.subr.bf16.mxu0 0
    %1076 = vmatpush1.bf16.msra.mxu0 %v525
    %1077 = vmatprep.subr.bf16.mxu0 0
    %1078 = vmatpush1.bf16.msra.mxu0 0
    %1079 = vmatprep.subr.bf16.mxu0 0
    %1080 = vmatpush1.bf16.msra.mxu0 0
    %1081 = vmatprep.subr.bf16.mxu0 0
    %1082 = vmatpush1.bf16.msra.mxu0 0
    %1083 = vmatprep.subr.bf16.mxu0 0
    %1084 = vmatpush1.bf16.msra.mxu0 0
    %1085 = vmatprep.subr.bf16.mxu0 0
    %1086 = vmatpush1.bf16.msra.mxu0 0
    %1087 = vmatprep.subr.bf16.mxu0 0
    %1088 = vmatpush1.bf16.msra.mxu0 0
    %1089 = vmatprep.subr.bf16.mxu0 0
    %1090 = vmatpush1.bf16.msra.mxu0 0
    %1091 = vmatprep.subr.bf16.mxu0 0
    %1092 = vmatpush1.bf16.msra.mxu0 0
    %1093 = vmatprep.subr.bf16.mxu0 0
    %1094 = vmatpush1.bf16.msra.mxu0 0
    %1095 = vmatprep.subr.bf16.mxu0 0
    %1096 = vmatpush1.bf16.msra.mxu0 0
    %1097 = vmatprep.subr.bf16.mxu0 0
    %1098 = vmatpush1.bf16.msra.mxu0 0
    %1099 = vmatprep.subr.bf16.mxu0 0
    %1100 = vmatpush1.bf16.msra.mxu0 0
    %1101 = vmatprep.subr.bf16.mxu0 0
    %1102 = vmatpush1.bf16.msra.mxu0 0
    %1103 = vmatprep.subr.bf16.mxu0 0
    %1104 = vmatpush1.bf16.msra.mxu0 0
    %1105 = vmatprep.mubr.bf16.mxu0 0
    %1106 = vmatmul.mubr.bf16.gmra.mrb[0].mxu0 %v1071
    %v1107 = vpop.f32.mrb[0].mxu0
    %v1108 = vadd.f32 0.0, %v1107
    %v1109 = vpop.f32.mrb[0].mxu0
    %v1110 = vpop.f32.mrb[0].mxu0
    %v1111 = vpop.f32.mrb[0].mxu0
    %1112 = vdwg.mxu0
    %v1114 = vrot.slane %v1108, 2
    %v1116 = vadd.f32 %v501, %v1114
    %v1117 = vxor.u32 %v1116, 2147483648
    %v1118 = vmul.f32 %v1117, 1.442695
    %v1119 = vpow.pop %v1118
    %v1120 = vadd.f32 %v1119, 1.0
    %v1121 = vrcp.pop %v1120
    %v1122 = vmul.f32 1.0, %v1121
    %v1123 = vtanh.pop %v1116
    %v1125 = vrot.slane %v1058, 6
    %v1127 = vmul.f32 %v1122, %v1125
    %1129 = vrot.lane.b32.xlu0 %v1123, 64
    %v1130 = vpop.permute.xlu0 %1129
    %v1132 = vmul.f32 %v1122, %v1130
    %1134 = vrot.lane.b32.xlu0 %v1132, 32
    %v1135 = vpop.permute.xlu0 %1134
    %v1137 = vadd.f32 %v1127, %v1135
    %v1138 = vtanh.pop %v1137
    %1140 = vrot.lane.b32.xlu0 %v1138, 64
    %v1141 = vpop.permute.xlu0 %1140
    %v1143 = vmul.f32 %v1122, %v1141
    %v1144 = vpack.c.bf16 %v1143, %v1143
    %v1146 = vrot.slane %v1144, 3
    %1147 = vrot.lane.b32.xlu0 %v1146, 32
    %v1148 = vpop.permute.xlu0 %1147
    %v1150 = vsel %vm267, %v1148, 0
    %1152 = vmatprep.subr.bf16.mxu0 0
    %1153 = vmatpush1.bf16.msra.mxu0 %v524
    %1154 = vmatprep.subr.bf16.mxu0 0
    %1155 = vmatpush1.bf16.msra.mxu0 %v525
    %1156 = vmatprep.subr.bf16.mxu0 0
    %1157 = vmatpush1.bf16.msra.mxu0 0
    %1158 = vmatprep.subr.bf16.mxu0 0
    %1159 = vmatpush1.bf16.msra.mxu0 0
    %1160 = vmatprep.subr.bf16.mxu0 0
    %1161 = vmatpush1.bf16.msra.mxu0 0
    %1162 = vmatprep.subr.bf16.mxu0 0
    %1163 = vmatpush1.bf16.msra.mxu0 0
    %1164 = vmatprep.subr.bf16.mxu0 0
    %1165 = vmatpush1.bf16.msra.mxu0 0
    %1166 = vmatprep.subr.bf16.mxu0 0
    %1167 = vmatpush1.bf16.msra.mxu0 0
    %1168 = vmatprep.subr.bf16.mxu0 0
    %1169 = vmatpush1.bf16.msra.mxu0 0
    %1170 = vmatprep.subr.bf16.mxu0 0
    %1171 = vmatpush1.bf16.msra.mxu0 0
    %1172 = vmatprep.subr.bf16.mxu0 0
    %1173 = vmatpush1.bf16.msra.mxu0 0
    %1174 = vmatprep.subr.bf16.mxu0 0
    %1175 = vmatpush1.bf16.msra.mxu0 0
    %1176 = vmatprep.subr.bf16.mxu0 0
    %1177 = vmatpush1.bf16.msra.mxu0 0
    %1178 = vmatprep.subr.bf16.mxu0 0
    %1179 = vmatpush1.bf16.msra.mxu0 0
    %1180 = vmatprep.subr.bf16.mxu0 0
    %1181 = vmatpush1.bf16.msra.mxu0 0
    %1182 = vmatprep.subr.bf16.mxu0 0
    %1183 = vmatpush1.bf16.msra.mxu0 0
    %1184 = vmatprep.mubr.bf16.mxu0 0
    %1185 = vmatmul.mubr.bf16.gmra.mrb[0].mxu0 %v1150
    %v1186 = vpop.f32.mrb[0].mxu0
    %v1187 = vadd.f32 0.0, %v1186
    %v1188 = vpop.f32.mrb[0].mxu0
    %v1189 = vpop.f32.mrb[0].mxu0
    %v1190 = vpop.f32.mrb[0].mxu0
    %1191 = vdwg.mxu0
    %v1192 = vadd.f32 %v506, %v1187
    %v1193 = vxor.u32 %v1192, 2147483648
    %v1194 = vmul.f32 %v1193, 1.442695
    %v1195 = vpow.pop %v1194
    %v1196 = vadd.f32 %v1195, 1.0
    %v1197 = vrcp.pop %v1196
    %v1198 = vmul.f32 1.0, %v1197
    %v1199 = vtanh.pop %v1192
    %v1201 = vrot.slane %v1137, 6
    %v1203 = vmul.f32 %v1198, %v1201
    %1205 = vrot.lane.b32.xlu0 %v1199, 64
    %v1206 = vpop.permute.xlu0 %1205
    %v1208 = vmul.f32 %v1198, %v1206
    %1210 = vrot.lane.b32.xlu0 %v1208, 32
    %v1211 = vpop.permute.xlu0 %1210
    %v1213 = vadd.f32 %v1203, %v1211
    %v1214 = vtanh.pop %v1213
    %1216 = vrot.lane.b32.xlu0 %v1214, 64
    %v1217 = vpop.permute.xlu0 %1216
    %v1219 = vmul.f32 %v1198, %v1217
    %v1220 = vpack.c.bf16 %v1219, %v1219
    %1222 = vrot.lane.b32.xlu0 %v1220, 32
    %v1223 = vpop.permute.xlu0 %1222
    %v1225 = vsel %vm267, %v1223, 0
    %1227 = vmatprep.subr.bf16.mxu0 0
    %1228 = vmatpush1.bf16.msra.mxu0 %v524
    %1229 = vmatprep.subr.bf16.mxu0 0
    %1230 = vmatpush1.bf16.msra.mxu0 %v525
    %1231 = vmatprep.subr.bf16.mxu0 0
    %1232 = vmatpush1.bf16.msra.mxu0 0
    %1233 = vmatprep.subr.bf16.mxu0 0
    %1234 = vmatpush1.bf16.msra.mxu0 0
    %1235 = vmatprep.subr.bf16.mxu0 0
    %1236 = vmatpush1.bf16.msra.mxu0 0
    %1237 = vmatprep.subr.bf16.mxu0 0
    %1238 = vmatpush1.bf16.msra.mxu0 0
    %1239 = vmatprep.subr.bf16.mxu0 0
    %1240 = vmatpush1.bf16.msra.mxu0 0
    %1241 = vmatprep.subr.bf16.mxu0 0
    %1242 = vmatpush1.bf16.msra.mxu0 0
    %1243 = vmatprep.subr.bf16.mxu0 0
    %1244 = vmatpush1.bf16.msra.mxu0 0
    %1245 = vmatprep.subr.bf16.mxu0 0
    %1246 = vmatpush1.bf16.msra.mxu0 0
    %1247 = vmatprep.subr.bf16.mxu0 0
    %1248 = vmatpush1.bf16.msra.mxu0 0
    %1249 = vmatprep.subr.bf16.mxu0 0
    %1250 = vmatpush1.bf16.msra.mxu0 0
    %1251 = vmatprep.subr.bf16.mxu0 0
    %1252 = vmatpush1.bf16.msra.mxu0 0
    %1253 = vmatprep.subr.bf16.mxu0 0
    %1254 = vmatpush1.bf16.msra.mxu0 0
    %1255 = vmatprep.subr.bf16.mxu0 0
    %1256 = vmatpush1.bf16.msra.mxu0 0
    %1257 = vmatprep.subr.bf16.mxu0 0
    %1258 = vmatpush1.bf16.msra.mxu0 0
    %1259 = vmatprep.mubr.bf16.mxu0 0
    %1260 = vmatmul.mubr.bf16.gmra.mrb[0].mxu0 %v1225
    %v1261 = vpop.f32.mrb[0].mxu0
    %v1262 = vadd.f32 0.0, %v1261
    %v1263 = vpop.f32.mrb[0].mxu0
    %v1264 = vpop.f32.mrb[0].mxu0
    %v1265 = vpop.f32.mrb[0].mxu0
    %1266 = vdwg.mxu0
    %v1268 = vrot.slane %v1262, 6
    %v1270 = vadd.f32 %v506, %v1268
    %v1271 = vxor.u32 %v1270, 2147483648
    %v1272 = vmul.f32 %v1271, 1.442695
    %v1273 = vpow.pop %v1272
    %v1274 = vadd.f32 %v1273, 1.0
    %v1275 = vrcp.pop %v1274
    %v1276 = vmul.f32 1.0, %v1275
    %v1277 = vtanh.pop %v1270
    %v1279 = vrot.slane %v1213, 6
    %v1281 = vmul.f32 %v1276, %v1279
    %1283 = vrot.lane.b32.xlu0 %v1277, 64
    %v1284 = vpop.permute.xlu0 %1283
    %v1286 = vmul.f32 %v1276, %v1284
    %1288 = vrot.lane.b32.xlu0 %v1286, 32
    %v1289 = vpop.permute.xlu0 %1288
    %v1291 = vadd.f32 %v1281, %v1289
    %v1292 = vtanh.pop %v1291
    %1294 = vrot.lane.b32.xlu0 %v1292, 64
    %v1295 = vpop.permute.xlu0 %1294
    %v1297 = vmul.f32 %v1276, %v1295
    %v1298 = vpack.c.bf16 %v1297, %v1297
    %v1300 = vrot.slane %v1298, 1
    %1301 = vrot.lane.b32.xlu0 %v1300, 32
    %v1302 = vpop.permute.xlu0 %1301
    %v1304 = vsel %vm267, %v1302, 0
    %1306 = vmatprep.subr.bf16.mxu0 0
    %1307 = vmatpush1.bf16.msra.mxu0 %v524
    %1308 = vmatprep.subr.bf16.mxu0 0
    %1309 = vmatpush1.bf16.msra.mxu0 %v525
    %1310 = vmatprep.subr.bf16.mxu0 0
    %1311 = vmatpush1.bf16.msra.mxu0 0
    %1312 = vmatprep.subr.bf16.mxu0 0
    %1313 = vmatpush1.bf16.msra.mxu0 0
    %1314 = vmatprep.subr.bf16.mxu0 0
    %1315 = vmatpush1.bf16.msra.mxu0 0
    %1316 = vmatprep.subr.bf16.mxu0 0
    %1317 = vmatpush1.bf16.msra.mxu0 0
    %1318 = vmatprep.subr.bf16.mxu0 0
    %1319 = vmatpush1.bf16.msra.mxu0 0
    %1320 = vmatprep.subr.bf16.mxu0 0
    %1321 = vmatpush1.bf16.msra.mxu0 0
    %1322 = vmatprep.subr.bf16.mxu0 0
    %1323 = vmatpush1.bf16.msra.mxu0 0
    %1324 = vmatprep.subr.bf16.mxu0 0
    %1325 = vmatpush1.bf16.msra.mxu0 0
    %1326 = vmatprep.subr.bf16.mxu0 0
    %1327 = vmatpush1.bf16.msra.mxu0 0
    %1328 = vmatprep.subr.bf16.mxu0 0
    %1329 = vmatpush1.bf16.msra.mxu0 0
    %1330 = vmatprep.subr.bf16.mxu0 0
    %1331 = vmatpush1.bf16.msra.mxu0 0
    %1332 = vmatprep.subr.bf16.mxu0 0
    %1333 = vmatpush1.bf16.msra.mxu0 0
    %1334 = vmatprep.subr.bf16.mxu0 0
    %1335 = vmatpush1.bf16.msra.mxu0 0
    %1336 = vmatprep.subr.bf16.mxu0 0
    %1337 = vmatpush1.bf16.msra.mxu0 0
    %1338 = vmatprep.mubr.bf16.mxu0 0
    %1339 = vmatmul.mubr.bf16.gmra.mrb[0].mxu0 %v1304
    %v1340 = vpop.f32.mrb[0].mxu0
    %v1341 = vadd.f32 0.0, %v1340
    %v1342 = vpop.f32.mrb[0].mxu0
    %v1343 = vpop.f32.mrb[0].mxu0
    %v1344 = vpop.f32.mrb[0].mxu0
    %1345 = vdwg.mxu0
    %v1347 = vrot.slane %v1341, 4
    %v1349 = vadd.f32 %v506, %v1347
    %v1350 = vxor.u32 %v1349, 2147483648
    %v1351 = vmul.f32 %v1350, 1.442695
    %v1352 = vpow.pop %v1351
    %v1353 = vadd.f32 %v1352, 1.0
    %v1354 = vrcp.pop %v1353
    %v1355 = vmul.f32 1.0, %v1354
    %v1356 = vtanh.pop %v1349
    %v1358 = vrot.slane %v1291, 6
    %v1360 = vmul.f32 %v1355, %v1358
    %1362 = vrot.lane.b32.xlu0 %v1356, 64
    %v1363 = vpop.permute.xlu0 %1362
    %v1365 = vmul.f32 %v1355, %v1363
    %1367 = vrot.lane.b32.xlu0 %v1365, 32
    %v1368 = vpop.permute.xlu0 %1367
    %v1370 = vadd.f32 %v1360, %v1368
    %v1371 = vtanh.pop %v1370
    %1373 = vrot.lane.b32.xlu0 %v1371, 64
    %v1374 = vpop.permute.xlu0 %1373
    %v1376 = vmul.f32 %v1355, %v1374
    %v1377 = vpack.c.bf16 %v1376, %v1376
    %v1379 = vrot.slane %v1377, 2
    %1380 = vrot.lane.b32.xlu0 %v1379, 32
    %v1381 = vpop.permute.xlu0 %1380
    %v1383 = vsel %vm267, %v1381, 0
    %1385 = vmatprep.subr.bf16.mxu0 0
    %1386 = vmatpush1.bf16.msra.mxu0 %v524
    %1387 = vmatprep.subr.bf16.mxu0 0
    %1388 = vmatpush1.bf16.msra.mxu0 %v525
    %1389 = vmatprep.subr.bf16.mxu0 0
    %1390 = vmatpush1.bf16.msra.mxu0 0
    %1391 = vmatprep.subr.bf16.mxu0 0
    %1392 = vmatpush1.bf16.msra.mxu0 0
    %1393 = vmatprep.subr.bf16.mxu0 0
    %1394 = vmatpush1.bf16.msra.mxu0 0
    %1395 = vmatprep.subr.bf16.mxu0 0
    %1396 = vmatpush1.bf16.msra.mxu0 0
    %1397 = vmatprep.subr.bf16.mxu0 0
    %1398 = vmatpush1.bf16.msra.mxu0 0
    %1399 = vmatprep.subr.bf16.mxu0 0
    %1400 = vmatpush1.bf16.msra.mxu0 0
    %1401 = vmatprep.subr.bf16.mxu0 0
    %1402 = vmatpush1.bf16.msra.mxu0 0
    %1403 = vmatprep.subr.bf16.mxu0 0
    %1404 = vmatpush1.bf16.msra.mxu0 0
    %1405 = vmatprep.subr.bf16.mxu0 0
    %1406 = vmatpush1.bf16.msra.mxu0 0
    %1407 = vmatprep.subr.bf16.mxu0 0
    %1408 = vmatpush1.bf16.msra.mxu0 0
    %1409 = vmatprep.subr.bf16.mxu0 0
    %1410 = vmatpush1.bf16.msra.mxu0 0
    %1411 = vmatprep.subr.bf16.mxu0 0
    %1412 = vmatpush1.bf16.msra.mxu0 0
    %1413 = vmatprep.subr.bf16.mxu0 0
    %1414 = vmatpush1.bf16.msra.mxu0 0
    %1415 = vmatprep.subr.bf16.mxu0 0
    %1416 = vmatpush1.bf16.msra.mxu0 0
    %1417 = vmatprep.mubr.bf16.mxu0 0
    %1418 = vmatmul.mubr.bf16.gmra.mrb[0].mxu0 %v1383
    %v1419 = vpop.f32.mrb[0].mxu0
    %v1420 = vadd.f32 0.0, %v1419
    %v1421 = vpop.f32.mrb[0].mxu0
    %v1422 = vpop.f32.mrb[0].mxu0
    %v1423 = vpop.f32.mrb[0].mxu0
    %1424 = vdwg.mxu0
    %v1426 = vrot.slane %v1420, 2
    %v1428 = vadd.f32 %v506, %v1426
    %v1429 = vxor.u32 %v1428, 2147483648
    %v1430 = vmul.f32 %v1429, 1.442695
    %v1431 = vpow.pop %v1430
    %v1432 = vadd.f32 %v1431, 1.0
    %v1433 = vrcp.pop %v1432
    %v1434 = vmul.f32 1.0, %v1433
    %v1435 = vtanh.pop %v1428
    %v1437 = vrot.slane %v1370, 6
    %v1439 = vmul.f32 %v1434, %v1437
    %1441 = vrot.lane.b32.xlu0 %v1435, 64
    %v1442 = vpop.permute.xlu0 %1441
    %v1444 = vmul.f32 %v1434, %v1442
    %1446 = vrot.lane.b32.xlu0 %v1444, 32
    %v1447 = vpop.permute.xlu0 %1446
    %v1449 = vadd.f32 %v1439, %v1447
    %v1450 = vtanh.pop %v1449
    %1452 = vrot.lane.b32.xlu0 %v1450, 64
    %v1453 = vpop.permute.xlu0 %1452
    %v1455 = vmul.f32 %v1434, %v1453
    %v1456 = vpack.c.bf16 %v1455, %v1455
    %v1458 = vrot.slane %v1456, 3
    %1459 = vrot.lane.b32.xlu0 %v1458, 32
    %v1460 = vpop.permute.xlu0 %1459
    %v1462 = vsel %vm267, %v1460, 0
    %1464 = vmatprep.subr.bf16.mxu0 0
    %1465 = vmatpush1.bf16.msra.mxu0 %v524
    %1466 = vmatprep.subr.bf16.mxu0 0
    %1467 = vmatpush1.bf16.msra.mxu0 %v525
    %1468 = vmatprep.subr.bf16.mxu0 0
    %1469 = vmatpush1.bf16.msra.mxu0 0
    %1470 = vmatprep.subr.bf16.mxu0 0
    %1471 = vmatpush1.bf16.msra.mxu0 0
    %1472 = vmatprep.subr.bf16.mxu0 0
    %1473 = vmatpush1.bf16.msra.mxu0 0
    %1474 = vmatprep.subr.bf16.mxu0 0
    %1475 = vmatpush1.bf16.msra.mxu0 0
    %1476 = vmatprep.subr.bf16.mxu0 0
    %1477 = vmatpush1.bf16.msra.mxu0 0
    %1478 = vmatprep.subr.bf16.mxu0 0
    %1479 = vmatpush1.bf16.msra.mxu0 0
    %1480 = vmatprep.subr.bf16.mxu0 0
    %1481 = vmatpush1.bf16.msra.mxu0 0
    %1482 = vmatprep.subr.bf16.mxu0 0
    %1483 = vmatpush1.bf16.msra.mxu0 0
    %1484 = vmatprep.subr.bf16.mxu0 0
    %1485 = vmatpush1.bf16.msra.mxu0 0
    %1486 = vmatprep.subr.bf16.mxu0 0
    %1487 = vmatpush1.bf16.msra.mxu0 0
    %1488 = vmatprep.subr.bf16.mxu0 0
    %1489 = vmatpush1.bf16.msra.mxu0 0
    %1490 = vmatprep.subr.bf16.mxu0 0
    %1491 = vmatpush1.bf16.msra.mxu0 0
    %1492 = vmatprep.subr.bf16.mxu0 0
    %1493 = vmatpush1.bf16.msra.mxu0 0
    %1494 = vmatprep.subr.bf16.mxu0 0
    %1495 = vmatpush1.bf16.msra.mxu0 0
    %1496 = vmatprep.mubr.bf16.mxu0 0
    %1497 = vmatmul.mubr.bf16.gmra.mrb[0].mxu0 %v1462
    %v1498 = vpop.f32.mrb[0].mxu0
    %v1499 = vadd.f32 0.0, %v1498
    %v1500 = vpop.f32.mrb[0].mxu0
    %v1501 = vpop.f32.mrb[0].mxu0
    %v1502 = vpop.f32.mrb[0].mxu0
    %1503 = vdwg.mxu0
    %v1504 = vadd.f32 %v509, %v1499
    %v1505 = vxor.u32 %v1504, 2147483648
    %v1506 = vmul.f32 %v1505, 1.442695
    %v1507 = vpow.pop %v1506
    %v1508 = vadd.f32 %v1507, 1.0
    %v1509 = vrcp.pop %v1508
    %v1510 = vmul.f32 1.0, %v1509
    %v1511 = vtanh.pop %v1504
    %v1513 = vrot.slane %v1449, 6
    %v1515 = vmul.f32 %v1510, %v1513
    %1517 = vrot.lane.b32.xlu0 %v1511, 64
    %v1518 = vpop.permute.xlu0 %1517
    %v1520 = vmul.f32 %v1510, %v1518
    %1522 = vrot.lane.b32.xlu0 %v1520, 32
    %v1523 = vpop.permute.xlu0 %1522
    %v1525 = vadd.f32 %v1515, %v1523
    %v1526 = vtanh.pop %v1525
    %1528 = vrot.lane.b32.xlu0 %v1526, 64
    %v1529 = vpop.permute.xlu0 %1528
    %v1531 = vmul.f32 %v1510, %v1529
    %v1532 = vpack.c.bf16 %v1531, %v1531
    %1534 = vrot.lane.b32.xlu0 %v1532, 32
    %v1535 = vpop.permute.xlu0 %1534
    %v1537 = vsel %vm267, %v1535, 0
    %1539 = vmatprep.subr.bf16.mxu0 0
    %1540 = vmatpush1.bf16.msra.mxu0 %v524
    %1541 = vmatprep.subr.bf16.mxu0 0
    %1542 = vmatpush1.bf16.msra.mxu0 %v525
    %1543 = vmatprep.subr.bf16.mxu0 0
    %1544 = vmatpush1.bf16.msra.mxu0 0
    %1545 = vmatprep.subr.bf16.mxu0 0
    %1546 = vmatpush1.bf16.msra.mxu0 0
    %1547 = vmatprep.subr.bf16.mxu0 0
    %1548 = vmatpush1.bf16.msra.mxu0 0
    %1549 = vmatprep.subr.bf16.mxu0 0
    %1550 = vmatpush1.bf16.msra.mxu0 0
    %1551 = vmatprep.subr.bf16.mxu0 0
    %1552 = vmatpush1.bf16.msra.mxu0 0
    %1553 = vmatprep.subr.bf16.mxu0 0
    %1554 = vmatpush1.bf16.msra.mxu0 0
    %1555 = vmatprep.subr.bf16.mxu0 0
    %1556 = vmatpush1.bf16.msra.mxu0 0
    %1557 = vmatprep.subr.bf16.mxu0 0
    %1558 = vmatpush1.bf16.msra.mxu0 0
    %1559 = vmatprep.subr.bf16.mxu0 0
    %1560 = vmatpush1.bf16.msra.mxu0 0
    %1561 = vmatprep.subr.bf16.mxu0 0
    %1562 = vmatpush1.bf16.msra.mxu0 0
    %1563 = vmatprep.subr.bf16.mxu0 0
    %1564 = vmatpush1.bf16.msra.mxu0 0
    %1565 = vmatprep.subr.bf16.mxu0 0
    %1566 = vmatpush1.bf16.msra.mxu0 0
    %1567 = vmatprep.subr.bf16.mxu0 0
    %1568 = vmatpush1.bf16.msra.mxu0 0
    %1569 = vmatprep.subr.bf16.mxu0 0
    %1570 = vmatpush1.bf16.msra.mxu0 0
    %1571 = vmatprep.mubr.bf16.mxu0 0
    %1572 = vmatmul.mubr.bf16.gmra.mrb[0].mxu0 %v1537
    %v1573 = vpop.f32.mrb[0].mxu0
    %v1574 = vadd.f32 0.0, %v1573
    %v1575 = vpop.f32.mrb[0].mxu0
    %v1576 = vpop.f32.mrb[0].mxu0
    %v1577 = vpop.f32.mrb[0].mxu0
    %1578 = vdwg.mxu0
    %v1580 = vrot.slane %v1574, 6
    %v1582 = vadd.f32 %v509, %v1580
    %v1583 = vxor.u32 %v1582, 2147483648
    %v1584 = vmul.f32 %v1583, 1.442695
    %v1585 = vpow.pop %v1584
    %v1586 = vadd.f32 %v1585, 1.0
    %v1587 = vrcp.pop %v1586
    %v1588 = vmul.f32 1.0, %v1587
    %v1589 = vtanh.pop %v1582
    %v1591 = vrot.slane %v1525, 6
    %v1593 = vmul.f32 %v1588, %v1591
    %1595 = vrot.lane.b32.xlu0 %v1589, 64
    %v1596 = vpop.permute.xlu0 %1595
    %v1598 = vmul.f32 %v1588, %v1596
    %1600 = vrot.lane.b32.xlu0 %v1598, 32
    %v1601 = vpop.permute.xlu0 %1600
    %v1603 = vadd.f32 %v1593, %v1601
    %v1604 = vtanh.pop %v1603
    %1606 = vrot.lane.b32.xlu0 %v1604, 64
    %v1607 = vpop.permute.xlu0 %1606
    %v1609 = vmul.f32 %v1588, %v1607
    %v1610 = vpack.c.bf16 %v1609, %v1609
    %v1612 = vrot.slane %v1610, 1
    %1613 = vrot.lane.b32.xlu0 %v1612, 32
    %v1614 = vpop.permute.xlu0 %1613
    %v1616 = vsel %vm267, %v1614, 0
    %1618 = vmatprep.subr.bf16.mxu0 0
    %1619 = vmatpush1.bf16.msra.mxu0 %v524
    %1620 = vmatprep.subr.bf16.mxu0 0
    %1621 = vmatpush1.bf16.msra.mxu0 %v525
    %1622 = vmatprep.subr.bf16.mxu0 0
    %1623 = vmatpush1.bf16.msra.mxu0 0
    %1624 = vmatprep.subr.bf16.mxu0 0
    %1625 = vmatpush1.bf16.msra.mxu0 0
    %1626 = vmatprep.subr.bf16.mxu0 0
    %1627 = vmatpush1.bf16.msra.mxu0 0
    %1628 = vmatprep.subr.bf16.mxu0 0
    %1629 = vmatpush1.bf16.msra.mxu0 0
    %1630 = vmatprep.subr.bf16.mxu0 0
    %1631 = vmatpush1.bf16.msra.mxu0 0
    %1632 = vmatprep.subr.bf16.mxu0 0
    %1633 = vmatpush1.bf16.msra.mxu0 0
    %1634 = vmatprep.subr.bf16.mxu0 0
    %1635 = vmatpush1.bf16.msra.mxu0 0
    %1636 = vmatprep.subr.bf16.mxu0 0
    %1637 = vmatpush1.bf16.msra.mxu0 0
    %1638 = vmatprep.subr.bf16.mxu0 0
    %1639 = vmatpush1.bf16.msra.mxu0 0
    %1640 = vmatprep.subr.bf16.mxu0 0
    %1641 = vmatpush1.bf16.msra.mxu0 0
    %1642 = vmatprep.subr.bf16.mxu0 0
    %1643 = vmatpush1.bf16.msra.mxu0 0
    %1644 = vmatprep.subr.bf16.mxu0 0
    %1645 = vmatpush1.bf16.msra.mxu0 0
    %1646 = vmatprep.subr.bf16.mxu0 0
    %1647 = vmatpush1.bf16.msra.mxu0 0
    %1648 = vmatprep.subr.bf16.mxu0 0
    %1649 = vmatpush1.bf16.msra.mxu0 0
    %1650 = vmatprep.mubr.bf16.mxu0 0
    %1651 = vmatmul.mubr.bf16.gmra.mrb[0].mxu0 %v1616
    %v1652 = vpop.f32.mrb[0].mxu0
    %v1653 = vadd.f32 0.0, %v1652
    %v1654 = vpop.f32.mrb[0].mxu0
    %v1655 = vpop.f32.mrb[0].mxu0
    %v1656 = vpop.f32.mrb[0].mxu0
    %1657 = vdwg.mxu0
    %v1659 = vrot.slane %v1653, 4
    %v1661 = vadd.f32 %v509, %v1659
    %v1662 = vxor.u32 %v1661, 2147483648
    %v1663 = vmul.f32 %v1662, 1.442695
    %v1664 = vpow.pop %v1663
    %v1665 = vadd.f32 %v1664, 1.0
    %v1666 = vrcp.pop %v1665
    %v1667 = vmul.f32 1.0, %v1666
    %v1668 = vtanh.pop %v1661
    %v1670 = vrot.slane %v1603, 6
    %v1672 = vmul.f32 %v1667, %v1670
    %1674 = vrot.lane.b32.xlu0 %v1668, 64
    %v1675 = vpop.permute.xlu0 %1674
    %v1677 = vmul.f32 %v1667, %v1675
    %1679 = vrot.lane.b32.xlu0 %v1677, 32
    %v1680 = vpop.permute.xlu0 %1679
    %v1682 = vadd.f32 %v1672, %v1680
    %v1683 = vtanh.pop %v1682
    %1685 = vrot.lane.b32.xlu0 %v1683, 64
    %v1686 = vpop.permute.xlu0 %1685
    %v1688 = vmul.f32 %v1667, %v1686
    %v1689 = vpack.c.bf16 %v1688, %v1688
    %v1691 = vrot.slane %v1689, 2
    %1692 = vrot.lane.b32.xlu0 %v1691, 32
    %v1693 = vpop.permute.xlu0 %1692
    %v1695 = vsel %vm267, %v1693, 0
    %1697 = vmatprep.subr.bf16.mxu0 0
    %1698 = vmatpush1.bf16.msra.mxu0 %v524
    %1699 = vmatprep.subr.bf16.mxu0 0
    %1700 = vmatpush1.bf16.msra.mxu0 %v525
    %1701 = vmatprep.subr.bf16.mxu0 0
    %1702 = vmatpush1.bf16.msra.mxu0 0
    %1703 = vmatprep.subr.bf16.mxu0 0
    %1704 = vmatpush1.bf16.msra.mxu0 0
    %1705 = vmatprep.subr.bf16.mxu0 0
    %1706 = vmatpush1.bf16.msra.mxu0 0
    %1707 = vmatprep.subr.bf16.mxu0 0
    %1708 = vmatpush1.bf16.msra.mxu0 0
    %1709 = vmatprep.subr.bf16.mxu0 0
    %1710 = vmatpush1.bf16.msra.mxu0 0
    %1711 = vmatprep.subr.bf16.mxu0 0
    %1712 = vmatpush1.bf16.msra.mxu0 0
    %1713 = vmatprep.subr.bf16.mxu0 0
    %1714 = vmatpush1.bf16.msra.mxu0 0
    %1715 = vmatprep.subr.bf16.mxu0 0
    %1716 = vmatpush1.bf16.msra.mxu0 0
    %1717 = vmatprep.subr.bf16.mxu0 0
    %1718 = vmatpush1.bf16.msra.mxu0 0
    %1719 = vmatprep.subr.bf16.mxu0 0
    %1720 = vmatpush1.bf16.msra.mxu0 0
    %1721 = vmatprep.subr.bf16.mxu0 0
    %1722 = vmatpush1.bf16.msra.mxu0 0
    %1723 = vmatprep.subr.bf16.mxu0 0
    %1724 = vmatpush1.bf16.msra.mxu0 0
    %1725 = vmatprep.subr.bf16.mxu0 0
    %1726 = vmatpush1.bf16.msra.mxu0 0
    %1727 = vmatprep.subr.bf16.mxu0 0
    %1728 = vmatpush1.bf16.msra.mxu0 0
    %1729 = vmatprep.mubr.bf16.mxu0 0
    %1730 = vmatmul.mubr.bf16.gmra.mrb[0].mxu0 %v1695
    %v1731 = vpop.f32.mrb[0].mxu0
    %v1732 = vadd.f32 0.0, %v1731
    %v1733 = vpop.f32.mrb[0].mxu0
    %v1734 = vpop.f32.mrb[0].mxu0
    %v1735 = vpop.f32.mrb[0].mxu0
    %1736 = vdwg.mxu0
    %v1738 = vrot.slane %v1732, 2
    %v1740 = vadd.f32 %v509, %v1738
    %v1741 = vxor.u32 %v1740, 2147483648
    %v1742 = vmul.f32 %v1741, 1.442695
    %v1743 = vpow.pop %v1742
    %v1744 = vadd.f32 %v1743, 1.0
    %v1745 = vrcp.pop %v1744
    %v1746 = vmul.f32 1.0, %v1745
    %v1747 = vtanh.pop %v1740
    %v1749 = vrot.slane %v1682, 6
    %v1751 = vmul.f32 %v1746, %v1749
    %1753 = vrot.lane.b32.xlu0 %v1747, 64
    %v1754 = vpop.permute.xlu0 %1753
    %v1756 = vmul.f32 %v1746, %v1754
    %1758 = vrot.lane.b32.xlu0 %v1756, 32
    %v1759 = vpop.permute.xlu0 %1758
    %v1761 = vadd.f32 %v1751, %v1759
    %v1762 = vtanh.pop %v1761
    %1764 = vrot.lane.b32.xlu0 %v1762, 64
    %v1765 = vpop.permute.xlu0 %1764
    %v1767 = vmul.f32 %v1746, %v1765
    %v1768 = vpack.c.bf16 %v1767, %v1767
    %v1769 = vld [vmem:[%s6] sm:$0xf]
    %v1770 = vld [vmem:[%s6 + $0x4] sm:$0xf]
    %v1771 = vld [vmem:[%s6 + $0x8] sm:$0xf]
    %v1772 = vld [vmem:[%s6 + $0xc] sm:$0xf]
    %v1774 = vrot.slane %v1768, 3
    %1775 = vrot.lane.b32.xlu0 %v1774, 32
    %v1776 = vpop.permute.xlu0 %1775
    %v1781 = vunpack.c.l.b16 %v1769
    %v1782 = vunpack.c.l.b16 %v1770
    %v1783 = vunpack.c.l.b16 %v1771
    %v1784 = vunpack.c.l.b16 %v1772
    %v1785 = vpack.c.b16 %v1782, %v1781
    %v1786 = vpack.c.b16 %v1784, %v1783
    %v1790 = vsel %vm267, %v1776, 0
    %1792 = vmatprep.subr.bf16.mxu0 0
    %1793 = vmatpush1.bf16.msra.mxu0 %v1785
    %1794 = vmatprep.subr.bf16.mxu0 0
    %1795 = vmatpush1.bf16.msra.mxu0 %v1786
    %1796 = vmatprep.subr.bf16.mxu0 0
    %1797 = vmatpush1.bf16.msra.mxu0 0
    %1798 = vmatprep.subr.bf16.mxu0 0
    %1799 = vmatpush1.bf16.msra.mxu0 0
    %1800 = vmatprep.subr.bf16.mxu0 0
    %1801 = vmatpush1.bf16.msra.mxu0 0
    %1802 = vmatprep.subr.bf16.mxu0 0
    %1803 = vmatpush1.bf16.msra.mxu0 0
    %1804 = vmatprep.subr.bf16.mxu0 0
    %1805 = vmatpush1.bf16.msra.mxu0 0
    %1806 = vmatprep.subr.bf16.mxu0 0
    %1807 = vmatpush1.bf16.msra.mxu0 0
    %1808 = vmatprep.subr.bf16.mxu0 0
    %1809 = vmatpush1.bf16.msra.mxu0 0
    %1810 = vmatprep.subr.bf16.mxu0 0
    %1811 = vmatpush1.bf16.msra.mxu0 0
    %1812 = vmatprep.subr.bf16.mxu0 0
    %1813 = vmatpush1.bf16.msra.mxu0 0
    %1814 = vmatprep.subr.bf16.mxu0 0
    %1815 = vmatpush1.bf16.msra.mxu0 0
    %1816 = vmatprep.subr.bf16.mxu0 0
    %1817 = vmatpush1.bf16.msra.mxu0 0
    %1818 = vmatprep.subr.bf16.mxu0 0
    %1819 = vmatpush1.bf16.msra.mxu0 0
    %1820 = vmatprep.subr.bf16.mxu0 0
    %1821 = vmatpush1.bf16.msra.mxu0 0
    %1822 = vmatprep.subr.bf16.mxu0 0
    %1823 = vmatpush1.bf16.msra.mxu0 0
    %1824 = vmatprep.mubr.bf16.mxu0 0
    %1825 = vmatmul.mubr.bf16.gmra.mrb[0].mxu0 %v1790
    %v1826 = vpop.f32.mrb[0].mxu0
    %v1827 = vadd.f32 0.0, %v1826
    %v1828 = vpop.f32.mrb[0].mxu0
    %v1829 = vpop.f32.mrb[0].mxu0
    %v1830 = vpop.f32.mrb[0].mxu0
    %1831 = vdwg.mxu0
    %v1832 = vadd.f32 %v306, %v1827
    %vm1833 = vcmask 33792
    %1834 = vst.msk [vmem:[#allocation2] sm:$0x3] %vm1833, %v1832
    // Predicated region
    $region38: #{eeg_cnn_lstm_forward.5} parent=1 // pred_check
      _
    $region39: #{eeg_cnn_lstm_forward.5} parent=1 // pred_check_branch
      %1836 = sbr.rel (0) target = $region41
    $region40: #{eeg_cnn_lstm_forward.5} parent=1 // pred_region
      %s1838 = ssub.s32 32, 32
      %1839 = vsyncadd [#allocation3], %s1838
      %s1841 = sshll.u32 [#allocation2], 4
      %s1842 = int_to_ptr.vmem [resolvable:$true] %s1841
      %1844 = dma.vmem_to_hbm [thread:$0]  %s1842, 32, %s9, [#allocation3]
    $region41: #{eeg_cnn_lstm_forward.5} parent=1 // pred_fallthru
      _
    // Predicated region
    $region42: #{eeg_cnn_lstm_forward.5} parent=1 // pred_check
      _
    $region43: #{eeg_cnn_lstm_forward.5} parent=1 // pred_check_branch
      %1846 = sbr.rel (0) target = $region45
    $region44: #{eeg_cnn_lstm_forward.5} parent=1 // pred_region
      %1847 = dma.done [#allocation3], 32
    $region45: #{eeg_cnn_lstm_forward.5} parent=1 // pred_fallthru
      _
    %1848 = vsyncpa [#allocation3], 1

</llo_original>
